<compile_context>
chip_gen: v7x
topology: tpu7x:2x2x1
jax: 0.10.0
libtpu: 0.0.40
codegen_flags: <defaults>
</compile_context>

<pallas_src>
import functools

import jax
import jax.numpy as jnp
from jax.experimental import pallas as pl
from jax.experimental.pallas import tpu as pltpu


def _bn_kernel(x_ref, w_ref, b_ref, o_ref, *, eps, inv_count):
    # x_ref: (N, c_tile, HW) f32 ; w_ref/b_ref: (1, c_tile, 1) f32
    # Stats pass: per-channel sum and sum of squares (lane reduce, then batch).
    x = x_ref[...]
    s = jnp.sum(jnp.sum(x, axis=2, keepdims=True), axis=0, keepdims=True)
    ss = jnp.sum(jnp.sum(x * x, axis=2, keepdims=True), axis=0, keepdims=True)

    mean = s * inv_count                                      # (1, c_tile, 1)
    var = jnp.maximum(ss * inv_count - mean * mean, 0.0)      # biased variance
    inv_std = jax.lax.rsqrt(var + eps)                        # EUP, off VALU path

    # Fold affine: o = x * scale + shift
    scale = w_ref[...] * inv_std
    shift = b_ref[...] - mean * scale

    # Normalize pass: re-read x from VMEM instead of keeping the whole slab
    # live in vregs across both passes.
    o_ref[...] = x_ref[...] * scale + shift


def _pick_c_tile(N, C, HW, dtype_bytes=4, vmem_budget=8 << 20):
    """Largest channel tile (divisor of C, multiple of 8) whose double-buffered
    input + output slabs stay under the VMEM budget."""
    def bytes_needed(ct):
        return 4 * N * ct * HW * dtype_bytes  # 2x in + 2x out (double buffer)

    if C % 8 != 0 or bytes_needed(C) <= vmem_budget:
        return C
    best = 8
    for ct in range(8, C, 8):
        if C % ct == 0 and bytes_needed(ct) <= vmem_budget:
            best = ct
    return best


def batchnorm2d_pallas(x_nchw, weight, bias, eps=1e-5):
    """x_nchw: (N, C, H, W) f32; weight/bias: (C,) f32."""
    N, C, H, W = x_nchw.shape
    HW = H * W

    # Zero-copy reshapes only (no transposes): keep channels on sublanes,
    # spatial on lanes.
    x3d = x_nchw.reshape(N, C, HW)
    w3d = weight.reshape(1, C, 1)
    b3d = bias.reshape(1, C, 1)

    c_tile = _pick_c_tile(N, C, HW)
    grid = (C // c_tile,)

    out3d = pl.pallas_call(
        functools.partial(_bn_kernel, eps=float(eps), inv_count=1.0 / (N * HW)),
        out_shape=jax.ShapeDtypeStruct((N, C, HW), x_nchw.dtype),
        grid=grid,
        in_specs=[
            pl.BlockSpec((N, c_tile, HW), lambda i: (0, i, 0)),
            pl.BlockSpec((1, c_tile, 1), lambda i: (0, i, 0)),
            pl.BlockSpec((1, c_tile, 1), lambda i: (0, i, 0)),
        ],
        out_specs=pl.BlockSpec((N, c_tile, HW), lambda i: (0, i, 0)),
        compiler_params=pltpu.CompilerParams(
            dimension_semantics=("parallel",)),
    )(x3d, w3d, b3d)

    return out3d.reshape(N, C, H, W)


if __name__ == "__main__":
    key = jax.random.PRNGKey(0)
    kx, kw, kb = jax.random.split(key, 3)

    # Shapes implied by the module: BatchNorm2d(896) on [1, 896, 7, 7]
    N, C, H, W = 1, 896, 7, 7
    x = jax.random.normal(kx, (N, C, H, W), dtype=jnp.float32)

    # Synthetic affine parameters (PyTorch default is ones/zeros; use small
    # random values so the affine path is exercised).
    weight = 1.0 + 0.1 * jax.random.normal(kw, (C,), dtype=jnp.float32)
    bias = 0.1 * jax.random.normal(kb, (C,), dtype=jnp.float32)

    out = batchnorm2d_pallas(x, weight, bias, eps=1e-5)
    out = jax.block_until_ready(out)

    # Pure-JAX reference of training-mode BatchNorm2d (biased variance).
    mean = jnp.mean(x, axis=(0, 2, 3), keepdims=True)
    var = jnp.mean((x - mean) ** 2, axis=(0, 2, 3), keepdims=True)
    ref = (x - mean) / jnp.sqrt(var + 1e-5) * weight[None, :, None, None] \
        + bias[None, :, None, None]

    assert out.shape == (N, C, H, W)
    assert jnp.allclose(out, ref, atol=1e-4, rtol=1e-4)

    print("KERNEL_OK")
</pallas_src>

<mosaic_0001>
module attributes {stable_mosaic.version = 11 : i64} {
  func.func @_bn_kernel(%arg0: i32, %arg1: memref<1x896x49xf32, #tpu.memory_space<vmem>>, %arg2: memref<1x896x1xf32, #tpu.memory_space<vmem>>, %arg3: memref<1x896x1xf32, #tpu.memory_space<vmem>>, %arg4: memref<1x896x49xf32, #tpu.memory_space<vmem>>) attributes {dimension_semantics = [#tpu.dimension_semantics<parallel>], iteration_bounds = array<i64: 1>, scalar_prefetch = 0 : i64, scratch_operands = 0 : i64, tpu.core_type = #tpu.core_type<tc>, window_params = [{transform_indices = @transform_0, window_bounds = array<i64: 1, 896, 49>}, {transform_indices = @transform_1, window_bounds = array<i64: 1, 896, 1>}, {transform_indices = @transform_2, window_bounds = array<i64: 1, 896, 1>}, {transform_indices = @transform_3, window_bounds = array<i64: 1, 896, 49>}]} {
    %c0 = arith.constant 0 : index
    %c0_0 = arith.constant 0 : index
    %c0_1 = arith.constant 0 : index
    %0 = vector.load %arg1[%c0, %c0_0, %c0_1] : memref<1x896x49xf32, #tpu.memory_space<vmem>>, vector<1x896x49xf32>
    %cst = arith.constant dense<0.000000e+00> : vector<1x896xf32>
    %1 = vector.multi_reduction <add>, %0, %cst [2] : vector<1x896x49xf32> to vector<1x896xf32>
    %2 = vector.shape_cast %1 : vector<1x896xf32> to vector<1x896x1xf32>
    %cst_2 = arith.constant dense<0.000000e+00> : vector<896x1xf32>
    %3 = vector.multi_reduction <add>, %2, %cst_2 [0] : vector<1x896x1xf32> to vector<896x1xf32>
    %4 = vector.shape_cast %3 : vector<896x1xf32> to vector<1x896x1xf32>
    %5 = arith.mulf %0, %0 : vector<1x896x49xf32>
    %cst_3 = arith.constant dense<0.000000e+00> : vector<1x896xf32>
    %6 = vector.multi_reduction <add>, %5, %cst_3 [2] : vector<1x896x49xf32> to vector<1x896xf32>
    %7 = vector.shape_cast %6 : vector<1x896xf32> to vector<1x896x1xf32>
    %cst_4 = arith.constant dense<0.000000e+00> : vector<896x1xf32>
    %8 = vector.multi_reduction <add>, %7, %cst_4 [0] : vector<1x896x1xf32> to vector<896x1xf32>
    %9 = vector.shape_cast %8 : vector<896x1xf32> to vector<1x896x1xf32>
    %cst_5 = arith.constant 0.0204081628 : f32
    %10 = vector.broadcast %cst_5 : f32 to vector<1x896x1xf32>
    %11 = arith.mulf %4, %10 : vector<1x896x1xf32>
    %cst_6 = arith.constant 0.0204081628 : f32
    %12 = vector.broadcast %cst_6 : f32 to vector<1x896x1xf32>
    %13 = arith.mulf %9, %12 : vector<1x896x1xf32>
    %14 = arith.mulf %11, %11 : vector<1x896x1xf32>
    %15 = arith.subf %13, %14 : vector<1x896x1xf32>
    %cst_7 = arith.constant 0.000000e+00 : f32
    %16 = vector.broadcast %cst_7 : f32 to vector<1x896x1xf32>
    %17 = arith.maximumf %15, %16 : vector<1x896x1xf32>
    %cst_8 = arith.constant 9.99999974E-6 : f32
    %18 = vector.broadcast %cst_8 : f32 to vector<1x896x1xf32>
    %19 = arith.addf %17, %18 : vector<1x896x1xf32>
    %20 = math.rsqrt %19 : vector<1x896x1xf32>
    %c0_9 = arith.constant 0 : index
    %c0_10 = arith.constant 0 : index
    %c0_11 = arith.constant 0 : index
    %21 = vector.load %arg2[%c0_9, %c0_10, %c0_11] : memref<1x896x1xf32, #tpu.memory_space<vmem>>, vector<1x896x1xf32>
    %22 = arith.mulf %21, %20 : vector<1x896x1xf32>
    %c0_12 = arith.constant 0 : index
    %c0_13 = arith.constant 0 : index
    %c0_14 = arith.constant 0 : index
    %23 = vector.load %arg3[%c0_12, %c0_13, %c0_14] : memref<1x896x1xf32, #tpu.memory_space<vmem>>, vector<1x896x1xf32>
    %24 = arith.mulf %11, %22 : vector<1x896x1xf32>
    %25 = arith.subf %23, %24 : vector<1x896x1xf32>
    %c0_15 = arith.constant 0 : index
    %c0_16 = arith.constant 0 : index
    %c0_17 = arith.constant 0 : index
    %26 = vector.load %arg1[%c0_15, %c0_16, %c0_17] : memref<1x896x49xf32, #tpu.memory_space<vmem>>, vector<1x896x49xf32>
    %27 = vector.broadcast %22 : vector<1x896x1xf32> to vector<1x896x49xf32>
    %28 = arith.mulf %26, %27 : vector<1x896x49xf32>
    %29 = vector.broadcast %25 : vector<1x896x1xf32> to vector<1x896x49xf32>
    %30 = arith.addf %28, %29 : vector<1x896x49xf32>
    %c0_18 = arith.constant 0 : index
    %c0_19 = arith.constant 0 : index
    %c0_20 = arith.constant 0 : index
    %31 = vector.load %arg4[%c0_18, %c0_19, %c0_20] : memref<1x896x49xf32, #tpu.memory_space<vmem>>, vector<1x896x49xf32>
    tpu.vector_store %arg4[%c0_18, %c0_19, %c0_20], %30 {strides = array<i32>} : memref<1x896x49xf32, #tpu.memory_space<vmem>>, vector<1x896x49xf32>,
    return
  }
  func.func @transform_0(%arg0: i32) -> (i32, i32, i32) {
    %c0_i32 = arith.constant 0 : i32
    %c0_i32_0 = arith.constant 0 : i32
    %c0_i32_1 = arith.constant 0 : i32
    return %c0_i32, %arg0, %c0_i32_0 : i32, i32, i32
  }
  func.func @transform_1(%arg0: i32) -> (i32, i32, i32) {
    %c0_i32 = arith.constant 0 : i32
    %c0_i32_0 = arith.constant 0 : i32
    %c0_i32_1 = arith.constant 0 : i32
    return %c0_i32, %arg0, %c0_i32_0 : i32, i32, i32
  }
  func.func @transform_2(%arg0: i32) -> (i32, i32, i32) {
    %c0_i32 = arith.constant 0 : i32
    %c0_i32_0 = arith.constant 0 : i32
    %c0_i32_1 = arith.constant 0 : i32
    return %c0_i32, %arg0, %c0_i32_0 : i32, i32, i32
  }
  func.func @transform_3(%arg0: i32) -> (i32, i32, i32) {
    %c0_i32 = arith.constant 0 : i32
    %c0_i32_0 = arith.constant 0 : i32
    %c0_i32_1 = arith.constant 0 : i32
    return %c0_i32, %arg0, %c0_i32_0 : i32, i32, i32
  }
}

</mosaic_0001>

<llo_original>
// kernel: tpu_custom_call.1
$region0: #{tpu_custom_call.1}
  #allocation0 [shape = 'u32[]', space=smem, size = 0x4, offset = 0x4, fixed_abs, tag = 'smem constant byte address 0x4 - core index']
  #allocation1 [shape = 'u32[144,128]{1,0:T(1,128)}', space=vmem, size = 0x12000, scoped, tag = 'internal scratch']
  %s0 = inlined_call_operand.vmem [shape: f32[1,896,49], index: 0, kind: input, shape index: {}]
  %s1 = inlined_call_operand.vmem [shape: f32[1,896,1], index: 1, kind: input, shape index: {}]
  %s2 = inlined_call_operand.vmem [shape: f32[1,896,1], index: 2, kind: input, shape index: {}]
  %s3 = inlined_call_operand.vmem [shape: f32[1,896,49], index: 3, kind: output, shape index: {}]
  %s4 = sld [smem:[#allocation0]]
  $region22: #{tpu_custom_call.1} parent=0
    _
  %s6 = ssub.s32 1, %s4
  %s7 = scalar_select 0, %s6, %s4
  // Predicated region
  $region2: #{tpu_custom_call.1} parent=0 // pred_check
    _
  $region3: #{tpu_custom_call.1} parent=0 // pred_check_branch
    %9 = sbr.rel (0) target = $region5
  $region4: #{tpu_custom_call.1} parent=0 // pred_region
    _
  $region5: #{tpu_custom_call.1} parent=0 // pred_fallthru
    _
  // Predicated region
  $region6: #{tpu_custom_call.1} parent=0 // pred_check
    _
  $region7: #{tpu_custom_call.1} parent=0 // pred_check_branch
    %11 = sbr.rel (0) target = $region9
  $region8: #{tpu_custom_call.1} parent=0 // pred_region
    _
  $region9: #{tpu_custom_call.1} parent=0 // pred_fallthru
    _
  // Predicated region
  $region10: #{tpu_custom_call.1} parent=0 // pred_check
    _
  $region11: #{tpu_custom_call.1} parent=0 // pred_check_branch
    %13 = sbr.rel (0) target = $region13
  $region12: #{tpu_custom_call.1} parent=0 // pred_region
    _
  $region13: #{tpu_custom_call.1} parent=0 // pred_fallthru
    _
  %v14 = vld [vmem:[%s0] sm:$0xff]
  %v15 = vld [vmem:[%s0 + $0x8] sm:$0xff]
  %v16 = vld [vmem:[%s0 + $0x10] sm:$0xff]
  %v17 = vld [vmem:[%s0 + $0x18] sm:$0xff]
  %v18 = vld [vmem:[%s0 + $0x20] sm:$0xff]
  %v19 = vld [vmem:[%s0 + $0x28] sm:$0xff]
  %v20 = vld [vmem:[%s0 + $0x30] sm:$0xff]
  %v21 = vld [vmem:[%s0 + $0x38] sm:$0xff]
  %v22 = vld [vmem:[%s0 + $0x40] sm:$0xff]
  %v23 = vld [vmem:[%s0 + $0x48] sm:$0xff]
  %v24 = vld [vmem:[%s0 + $0x50] sm:$0xff]
  %v25 = vld [vmem:[%s0 + $0x58] sm:$0xff]
  %v26 = vld [vmem:[%s0 + $0x60] sm:$0xff]
  %v27 = vld [vmem:[%s0 + $0x68] sm:$0xff]
  %v28 = vld [vmem:[%s0 + $0x70] sm:$0xff]
  %v29 = vld [vmem:[%s0 + $0x78] sm:$0xff]
  %v30 = vld [vmem:[%s0 + $0x80] sm:$0xff]
  %v31 = vld [vmem:[%s0 + $0x88] sm:$0xff]
  %v32 = vld [vmem:[%s0 + $0x90] sm:$0xff]
  %v33 = vld [vmem:[%s0 + $0x98] sm:$0xff]
  %v34 = vld [vmem:[%s0 + $0xa0] sm:$0xff]
  %v35 = vld [vmem:[%s0 + $0xa8] sm:$0xff]
  %v36 = vld [vmem:[%s0 + $0xb0] sm:$0xff]
  %v37 = vld [vmem:[%s0 + $0xb8] sm:$0xff]
  %v38 = vld [vmem:[%s0 + $0xc0] sm:$0xff]
  %v39 = vld [vmem:[%s0 + $0xc8] sm:$0xff]
  %v40 = vld [vmem:[%s0 + $0xd0] sm:$0xff]
  %v41 = vld [vmem:[%s0 + $0xd8] sm:$0xff]
  %v42 = vld [vmem:[%s0 + $0xe0] sm:$0xff]
  %v43 = vld [vmem:[%s0 + $0xe8] sm:$0xff]
  %v44 = vld [vmem:[%s0 + $0xf0] sm:$0xff]
  %v45 = vld [vmem:[%s0 + $0xf8] sm:$0xff]
  %v46 = vld [vmem:[%s0 + $0x100] sm:$0xff]
  %v47 = vld [vmem:[%s0 + $0x108] sm:$0xff]
  %v48 = vld [vmem:[%s0 + $0x110] sm:$0xff]
  %v49 = vld [vmem:[%s0 + $0x118] sm:$0xff]
  %v50 = vld [vmem:[%s0 + $0x120] sm:$0xff]
  %v51 = vld [vmem:[%s0 + $0x128] sm:$0xff]
  %v52 = vld [vmem:[%s0 + $0x130] sm:$0xff]
  %v53 = vld [vmem:[%s0 + $0x138] sm:$0xff]
  %v54 = vld [vmem:[%s0 + $0x140] sm:$0xff]
  %v55 = vld [vmem:[%s0 + $0x148] sm:$0xff]
  %v56 = vld [vmem:[%s0 + $0x150] sm:$0xff]
  %v57 = vld [vmem:[%s0 + $0x158] sm:$0xff]
  %v58 = vld [vmem:[%s0 + $0x160] sm:$0xff]
  %v59 = vld [vmem:[%s0 + $0x168] sm:$0xff]
  %v60 = vld [vmem:[%s0 + $0x170] sm:$0xff]
  %v61 = vld [vmem:[%s0 + $0x178] sm:$0xff]
  %v62 = vld [vmem:[%s0 + $0x180] sm:$0xff]
  %v63 = vld [vmem:[%s0 + $0x188] sm:$0xff]
  %v64 = vld [vmem:[%s0 + $0x190] sm:$0xff]
  %v65 = vld [vmem:[%s0 + $0x198] sm:$0xff]
  %v66 = vld [vmem:[%s0 + $0x1a0] sm:$0xff]
  %v67 = vld [vmem:[%s0 + $0x1a8] sm:$0xff]
  %v68 = vld [vmem:[%s0 + $0x1b0] sm:$0xff]
  %v69 = vld [vmem:[%s0 + $0x1b8] sm:$0xff]
  %v70 = vld [vmem:[%s0 + $0x1c0] sm:$0xff]
  %v71 = vld [vmem:[%s0 + $0x1c8] sm:$0xff]
  %v72 = vld [vmem:[%s0 + $0x1d0] sm:$0xff]
  %v73 = vld [vmem:[%s0 + $0x1d8] sm:$0xff]
  %v74 = vld [vmem:[%s0 + $0x1e0] sm:$0xff]
  %v75 = vld [vmem:[%s0 + $0x1e8] sm:$0xff]
  %v76 = vld [vmem:[%s0 + $0x1f0] sm:$0xff]
  %v77 = vld [vmem:[%s0 + $0x1f8] sm:$0xff]
  %v78 = vld [vmem:[%s0 + $0x200] sm:$0xff]
  %v79 = vld [vmem:[%s0 + $0x208] sm:$0xff]
  %v80 = vld [vmem:[%s0 + $0x210] sm:$0xff]
  %v81 = vld [vmem:[%s0 + $0x218] sm:$0xff]
  %v82 = vld [vmem:[%s0 + $0x220] sm:$0xff]
  %v83 = vld [vmem:[%s0 + $0x228] sm:$0xff]
  %v84 = vld [vmem:[%s0 + $0x230] sm:$0xff]
  %v85 = vld [vmem:[%s0 + $0x238] sm:$0xff]
  %v86 = vld [vmem:[%s0 + $0x240] sm:$0xff]
  %v87 = vld [vmem:[%s0 + $0x248] sm:$0xff]
  %v88 = vld [vmem:[%s0 + $0x250] sm:$0xff]
  %v89 = vld [vmem:[%s0 + $0x258] sm:$0xff]
  %v90 = vld [vmem:[%s0 + $0x260] sm:$0xff]
  %v91 = vld [vmem:[%s0 + $0x268] sm:$0xff]
  %v92 = vld [vmem:[%s0 + $0x270] sm:$0xff]
  %v93 = vld [vmem:[%s0 + $0x278] sm:$0xff]
  %v94 = vld [vmem:[%s0 + $0x280] sm:$0xff]
  %v95 = vld [vmem:[%s0 + $0x288] sm:$0xff]
  %v96 = vld [vmem:[%s0 + $0x290] sm:$0xff]
  %v97 = vld [vmem:[%s0 + $0x298] sm:$0xff]
  %v98 = vld [vmem:[%s0 + $0x2a0] sm:$0xff]
  %v99 = vld [vmem:[%s0 + $0x2a8] sm:$0xff]
  %v100 = vld [vmem:[%s0 + $0x2b0] sm:$0xff]
  %v101 = vld [vmem:[%s0 + $0x2b8] sm:$0xff]
  %v102 = vld [vmem:[%s0 + $0x2c0] sm:$0xff]
  %v103 = vld [vmem:[%s0 + $0x2c8] sm:$0xff]
  %v104 = vld [vmem:[%s0 + $0x2d0] sm:$0xff]
  %v105 = vld [vmem:[%s0 + $0x2d8] sm:$0xff]
  %v106 = vld [vmem:[%s0 + $0x2e0] sm:$0xff]
  %v107 = vld [vmem:[%s0 + $0x2e8] sm:$0xff]
  %v108 = vld [vmem:[%s0 + $0x2f0] sm:$0xff]
  %v109 = vld [vmem:[%s0 + $0x2f8] sm:$0xff]
  %v110 = vld [vmem:[%s0 + $0x300] sm:$0xff]
  %v111 = vld [vmem:[%s0 + $0x308] sm:$0xff]
  %v112 = vld [vmem:[%s0 + $0x310] sm:$0xff]
  %v113 = vld [vmem:[%s0 + $0x318] sm:$0xff]
  %v114 = vld [vmem:[%s0 + $0x320] sm:$0xff]
  %v115 = vld [vmem:[%s0 + $0x328] sm:$0xff]
  %v116 = vld [vmem:[%s0 + $0x330] sm:$0xff]
  %v117 = vld [vmem:[%s0 + $0x338] sm:$0xff]
  %v118 = vld [vmem:[%s0 + $0x340] sm:$0xff]
  %v119 = vld [vmem:[%s0 + $0x348] sm:$0xff]
  %v120 = vld [vmem:[%s0 + $0x350] sm:$0xff]
  %v121 = vld [vmem:[%s0 + $0x358] sm:$0xff]
  %v122 = vld [vmem:[%s0 + $0x360] sm:$0xff]
  %v123 = vld [vmem:[%s0 + $0x368] sm:$0xff]
  %v124 = vld [vmem:[%s0 + $0x370] sm:$0xff]
  %v125 = vld [vmem:[%s0 + $0x378] sm:$0xff]
  %vm126 = vcmask 400384
  %v127 = vsel %vm126, %v14, 0.0
  %128 = vadd.xlane.f32.xlu0 %v127
  %v129 = vpop.xlane.xlu0 %128
  %v130 = vsel %vm126, %v15, 0.0
  %131 = vadd.xlane.f32.xlu0 %v130
  %v132 = vpop.xlane.xlu0 %131
  %v133 = vsel %vm126, %v16, 0.0
  %134 = vadd.xlane.f32.xlu0 %v133
  %v135 = vpop.xlane.xlu0 %134
  %v136 = vsel %vm126, %v17, 0.0
  %137 = vadd.xlane.f32.xlu0 %v136
  %v138 = vpop.xlane.xlu0 %137
  %v139 = vsel %vm126, %v18, 0.0
  %140 = vadd.xlane.f32.xlu0 %v139
  %v141 = vpop.xlane.xlu0 %140
  %v142 = vsel %vm126, %v19, 0.0
  %143 = vadd.xlane.f32.xlu0 %v142
  %v144 = vpop.xlane.xlu0 %143
  %v145 = vsel %vm126, %v20, 0.0
  %146 = vadd.xlane.f32.xlu0 %v145
  %v147 = vpop.xlane.xlu0 %146
  %v148 = vsel %vm126, %v21, 0.0
  %149 = vadd.xlane.f32.xlu0 %v148
  %v150 = vpop.xlane.xlu0 %149
  %v151 = vsel %vm126, %v22, 0.0
  %152 = vadd.xlane.f32.xlu0 %v151
  %v153 = vpop.xlane.xlu0 %152
  %v154 = vsel %vm126, %v23, 0.0
  %155 = vadd.xlane.f32.xlu0 %v154
  %v156 = vpop.xlane.xlu0 %155
  %v157 = vsel %vm126, %v24, 0.0
  %158 = vadd.xlane.f32.xlu0 %v157
  %v159 = vpop.xlane.xlu0 %158
  %v160 = vsel %vm126, %v25, 0.0
  %161 = vadd.xlane.f32.xlu0 %v160
  %v162 = vpop.xlane.xlu0 %161
  %v163 = vsel %vm126, %v26, 0.0
  %164 = vadd.xlane.f32.xlu0 %v163
  %v165 = vpop.xlane.xlu0 %164
  %v166 = vsel %vm126, %v27, 0.0
  %167 = vadd.xlane.f32.xlu0 %v166
  %v168 = vpop.xlane.xlu0 %167
  %v169 = vsel %vm126, %v28, 0.0
  %170 = vadd.xlane.f32.xlu0 %v169
  %v171 = vpop.xlane.xlu0 %170
  %v172 = vsel %vm126, %v29, 0.0
  %173 = vadd.xlane.f32.xlu0 %v172
  %v174 = vpop.xlane.xlu0 %173
  %v175 = vsel %vm126, %v30, 0.0
  %176 = vadd.xlane.f32.xlu0 %v175
  %v177 = vpop.xlane.xlu0 %176
  %v178 = vsel %vm126, %v31, 0.0
  %179 = vadd.xlane.f32.xlu0 %v178
  %v180 = vpop.xlane.xlu0 %179
  %v181 = vsel %vm126, %v32, 0.0
  %182 = vadd.xlane.f32.xlu0 %v181
  %v183 = vpop.xlane.xlu0 %182
  %v184 = vsel %vm126, %v33, 0.0
  %185 = vadd.xlane.f32.xlu0 %v184
  %v186 = vpop.xlane.xlu0 %185
  %v187 = vsel %vm126, %v34, 0.0
  %188 = vadd.xlane.f32.xlu0 %v187
  %v189 = vpop.xlane.xlu0 %188
  %v190 = vsel %vm126, %v35, 0.0
  %191 = vadd.xlane.f32.xlu0 %v190
  %v192 = vpop.xlane.xlu0 %191
  %v193 = vsel %vm126, %v36, 0.0
  %194 = vadd.xlane.f32.xlu0 %v193
  %v195 = vpop.xlane.xlu0 %194
  %v196 = vsel %vm126, %v37, 0.0
  %197 = vadd.xlane.f32.xlu0 %v196
  %v198 = vpop.xlane.xlu0 %197
  %v199 = vsel %vm126, %v38, 0.0
  %200 = vadd.xlane.f32.xlu0 %v199
  %v201 = vpop.xlane.xlu0 %200
  %v202 = vsel %vm126, %v39, 0.0
  %203 = vadd.xlane.f32.xlu0 %v202
  %v204 = vpop.xlane.xlu0 %203
  %v205 = vsel %vm126, %v40, 0.0
  %206 = vadd.xlane.f32.xlu0 %v205
  %v207 = vpop.xlane.xlu0 %206
  %v208 = vsel %vm126, %v41, 0.0
  %209 = vadd.xlane.f32.xlu0 %v208
  %v210 = vpop.xlane.xlu0 %209
  %v211 = vsel %vm126, %v42, 0.0
  %212 = vadd.xlane.f32.xlu0 %v211
  %v213 = vpop.xlane.xlu0 %212
  %v214 = vsel %vm126, %v43, 0.0
  %215 = vadd.xlane.f32.xlu0 %v214
  %v216 = vpop.xlane.xlu0 %215
  %v217 = vsel %vm126, %v44, 0.0
  %218 = vadd.xlane.f32.xlu0 %v217
  %v219 = vpop.xlane.xlu0 %218
  %v220 = vsel %vm126, %v45, 0.0
  %221 = vadd.xlane.f32.xlu0 %v220
  %v222 = vpop.xlane.xlu0 %221
  %v223 = vsel %vm126, %v46, 0.0
  %224 = vadd.xlane.f32.xlu0 %v223
  %v225 = vpop.xlane.xlu0 %224
  %v226 = vsel %vm126, %v47, 0.0
  %227 = vadd.xlane.f32.xlu0 %v226
  %v228 = vpop.xlane.xlu0 %227
  %v229 = vsel %vm126, %v48, 0.0
  %230 = vadd.xlane.f32.xlu0 %v229
  %v231 = vpop.xlane.xlu0 %230
  %v232 = vsel %vm126, %v49, 0.0
  %233 = vadd.xlane.f32.xlu0 %v232
  %v234 = vpop.xlane.xlu0 %233
  %v235 = vsel %vm126, %v50, 0.0
  %236 = vadd.xlane.f32.xlu0 %v235
  %v237 = vpop.xlane.xlu0 %236
  %v238 = vsel %vm126, %v51, 0.0
  %239 = vadd.xlane.f32.xlu0 %v238
  %v240 = vpop.xlane.xlu0 %239
  %v241 = vsel %vm126, %v52, 0.0
  %242 = vadd.xlane.f32.xlu0 %v241
  %v243 = vpop.xlane.xlu0 %242
  %v244 = vsel %vm126, %v53, 0.0
  %245 = vadd.xlane.f32.xlu0 %v244
  %v246 = vpop.xlane.xlu0 %245
  %v247 = vsel %vm126, %v54, 0.0
  %248 = vadd.xlane.f32.xlu0 %v247
  %v249 = vpop.xlane.xlu0 %248
  %v250 = vsel %vm126, %v55, 0.0
  %251 = vadd.xlane.f32.xlu0 %v250
  %v252 = vpop.xlane.xlu0 %251
  %v253 = vsel %vm126, %v56, 0.0
  %254 = vadd.xlane.f32.xlu0 %v253
  %v255 = vpop.xlane.xlu0 %254
  %v256 = vsel %vm126, %v57, 0.0
  %257 = vadd.xlane.f32.xlu0 %v256
  %v258 = vpop.xlane.xlu0 %257
  %v259 = vsel %vm126, %v58, 0.0
  %260 = vadd.xlane.f32.xlu0 %v259
  %v261 = vpop.xlane.xlu0 %260
  %v262 = vsel %vm126, %v59, 0.0
  %263 = vadd.xlane.f32.xlu0 %v262
  %v264 = vpop.xlane.xlu0 %263
  %v265 = vsel %vm126, %v60, 0.0
  %266 = vadd.xlane.f32.xlu0 %v265
  %v267 = vpop.xlane.xlu0 %266
  %v268 = vsel %vm126, %v61, 0.0
  %269 = vadd.xlane.f32.xlu0 %v268
  %v270 = vpop.xlane.xlu0 %269
  %v271 = vsel %vm126, %v62, 0.0
  %272 = vadd.xlane.f32.xlu0 %v271
  %v273 = vpop.xlane.xlu0 %272
  %v274 = vsel %vm126, %v63, 0.0
  %275 = vadd.xlane.f32.xlu0 %v274
  %v276 = vpop.xlane.xlu0 %275
  %v277 = vsel %vm126, %v64, 0.0
  %278 = vadd.xlane.f32.xlu0 %v277
  %v279 = vpop.xlane.xlu0 %278
  %v280 = vsel %vm126, %v65, 0.0
  %281 = vadd.xlane.f32.xlu0 %v280
  %v282 = vpop.xlane.xlu0 %281
  %v283 = vsel %vm126, %v66, 0.0
  %284 = vadd.xlane.f32.xlu0 %v283
  %v285 = vpop.xlane.xlu0 %284
  %v286 = vsel %vm126, %v67, 0.0
  %287 = vadd.xlane.f32.xlu0 %v286
  %v288 = vpop.xlane.xlu0 %287
  %v289 = vsel %vm126, %v68, 0.0
  %290 = vadd.xlane.f32.xlu0 %v289
  %v291 = vpop.xlane.xlu0 %290
  %v292 = vsel %vm126, %v69, 0.0
  %293 = vadd.xlane.f32.xlu0 %v292
  %v294 = vpop.xlane.xlu0 %293
  %v295 = vsel %vm126, %v70, 0.0
  %296 = vadd.xlane.f32.xlu0 %v295
  %v297 = vpop.xlane.xlu0 %296
  %v298 = vsel %vm126, %v71, 0.0
  %299 = vadd.xlane.f32.xlu0 %v298
  %v300 = vpop.xlane.xlu0 %299
  %v301 = vsel %vm126, %v72, 0.0
  %302 = vadd.xlane.f32.xlu0 %v301
  %v303 = vpop.xlane.xlu0 %302
  %v304 = vsel %vm126, %v73, 0.0
  %305 = vadd.xlane.f32.xlu0 %v304
  %v306 = vpop.xlane.xlu0 %305
  %v307 = vsel %vm126, %v74, 0.0
  %308 = vadd.xlane.f32.xlu0 %v307
  %v309 = vpop.xlane.xlu0 %308
  %v310 = vsel %vm126, %v75, 0.0
  %311 = vadd.xlane.f32.xlu0 %v310
  %v312 = vpop.xlane.xlu0 %311
  %v313 = vsel %vm126, %v76, 0.0
  %314 = vadd.xlane.f32.xlu0 %v313
  %v315 = vpop.xlane.xlu0 %314
  %v316 = vsel %vm126, %v77, 0.0
  %317 = vadd.xlane.f32.xlu0 %v316
  %v318 = vpop.xlane.xlu0 %317
  %v319 = vsel %vm126, %v78, 0.0
  %320 = vadd.xlane.f32.xlu0 %v319
  %v321 = vpop.xlane.xlu0 %320
  %v322 = vsel %vm126, %v79, 0.0
  %323 = vadd.xlane.f32.xlu0 %v322
  %v324 = vpop.xlane.xlu0 %323
  %v325 = vsel %vm126, %v80, 0.0
  %326 = vadd.xlane.f32.xlu0 %v325
  %v327 = vpop.xlane.xlu0 %326
  %v328 = vsel %vm126, %v81, 0.0
  %329 = vadd.xlane.f32.xlu0 %v328
  %v330 = vpop.xlane.xlu0 %329
  %v331 = vsel %vm126, %v82, 0.0
  %332 = vadd.xlane.f32.xlu0 %v331
  %v333 = vpop.xlane.xlu0 %332
  %v334 = vsel %vm126, %v83, 0.0
  %335 = vadd.xlane.f32.xlu0 %v334
  %v336 = vpop.xlane.xlu0 %335
  %v337 = vsel %vm126, %v84, 0.0
  %338 = vadd.xlane.f32.xlu0 %v337
  %v339 = vpop.xlane.xlu0 %338
  %v340 = vsel %vm126, %v85, 0.0
  %341 = vadd.xlane.f32.xlu0 %v340
  %v342 = vpop.xlane.xlu0 %341
  %v343 = vsel %vm126, %v86, 0.0
  %344 = vadd.xlane.f32.xlu0 %v343
  %v345 = vpop.xlane.xlu0 %344
  %v346 = vsel %vm126, %v87, 0.0
  %347 = vadd.xlane.f32.xlu0 %v346
  %v348 = vpop.xlane.xlu0 %347
  %v349 = vsel %vm126, %v88, 0.0
  %350 = vadd.xlane.f32.xlu0 %v349
  %v351 = vpop.xlane.xlu0 %350
  %v352 = vsel %vm126, %v89, 0.0
  %353 = vadd.xlane.f32.xlu0 %v352
  %v354 = vpop.xlane.xlu0 %353
  %v355 = vsel %vm126, %v90, 0.0
  %356 = vadd.xlane.f32.xlu0 %v355
  %v357 = vpop.xlane.xlu0 %356
  %v358 = vsel %vm126, %v91, 0.0
  %359 = vadd.xlane.f32.xlu0 %v358
  %v360 = vpop.xlane.xlu0 %359
  %v361 = vsel %vm126, %v92, 0.0
  %362 = vadd.xlane.f32.xlu0 %v361
  %v363 = vpop.xlane.xlu0 %362
  %v364 = vsel %vm126, %v93, 0.0
  %365 = vadd.xlane.f32.xlu0 %v364
  %v366 = vpop.xlane.xlu0 %365
  %v367 = vsel %vm126, %v94, 0.0
  %368 = vadd.xlane.f32.xlu0 %v367
  %v369 = vpop.xlane.xlu0 %368
  %v370 = vsel %vm126, %v95, 0.0
  %371 = vadd.xlane.f32.xlu0 %v370
  %v372 = vpop.xlane.xlu0 %371
  %v373 = vsel %vm126, %v96, 0.0
  %374 = vadd.xlane.f32.xlu0 %v373
  %v375 = vpop.xlane.xlu0 %374
  %v376 = vsel %vm126, %v97, 0.0
  %377 = vadd.xlane.f32.xlu0 %v376
  %v378 = vpop.xlane.xlu0 %377
  %v379 = vsel %vm126, %v98, 0.0
  %380 = vadd.xlane.f32.xlu0 %v379
  %v381 = vpop.xlane.xlu0 %380
  %v382 = vsel %vm126, %v99, 0.0
  %383 = vadd.xlane.f32.xlu0 %v382
  %v384 = vpop.xlane.xlu0 %383
  %v385 = vsel %vm126, %v100, 0.0
  %386 = vadd.xlane.f32.xlu0 %v385
  %v387 = vpop.xlane.xlu0 %386
  %v388 = vsel %vm126, %v101, 0.0
  %389 = vadd.xlane.f32.xlu0 %v388
  %v390 = vpop.xlane.xlu0 %389
  %v391 = vsel %vm126, %v102, 0.0
  %392 = vadd.xlane.f32.xlu0 %v391
  %v393 = vpop.xlane.xlu0 %392
  %v394 = vsel %vm126, %v103, 0.0
  %395 = vadd.xlane.f32.xlu0 %v394
  %v396 = vpop.xlane.xlu0 %395
  %v397 = vsel %vm126, %v104, 0.0
  %398 = vadd.xlane.f32.xlu0 %v397
  %v399 = vpop.xlane.xlu0 %398
  %v400 = vsel %vm126, %v105, 0.0
  %401 = vadd.xlane.f32.xlu0 %v400
  %v402 = vpop.xlane.xlu0 %401
  %v403 = vsel %vm126, %v106, 0.0
  %404 = vadd.xlane.f32.xlu0 %v403
  %v405 = vpop.xlane.xlu0 %404
  %v406 = vsel %vm126, %v107, 0.0
  %407 = vadd.xlane.f32.xlu0 %v406
  %v408 = vpop.xlane.xlu0 %407
  %v409 = vsel %vm126, %v108, 0.0
  %410 = vadd.xlane.f32.xlu0 %v409
  %v411 = vpop.xlane.xlu0 %410
  %v412 = vsel %vm126, %v109, 0.0
  %413 = vadd.xlane.f32.xlu0 %v412
  %v414 = vpop.xlane.xlu0 %413
  %v415 = vsel %vm126, %v110, 0.0
  %416 = vadd.xlane.f32.xlu0 %v415
  %v417 = vpop.xlane.xlu0 %416
  %v418 = vsel %vm126, %v111, 0.0
  %419 = vadd.xlane.f32.xlu0 %v418
  %v420 = vpop.xlane.xlu0 %419
  %v421 = vsel %vm126, %v112, 0.0
  %422 = vadd.xlane.f32.xlu0 %v421
  %v423 = vpop.xlane.xlu0 %422
  %v424 = vsel %vm126, %v113, 0.0
  %425 = vadd.xlane.f32.xlu0 %v424
  %v426 = vpop.xlane.xlu0 %425
  %v427 = vsel %vm126, %v114, 0.0
  %428 = vadd.xlane.f32.xlu0 %v427
  %v429 = vpop.xlane.xlu0 %428
  %v430 = vsel %vm126, %v115, 0.0
  %431 = vadd.xlane.f32.xlu0 %v430
  %v432 = vpop.xlane.xlu0 %431
  %v433 = vsel %vm126, %v116, 0.0
  %434 = vadd.xlane.f32.xlu0 %v433
  %v435 = vpop.xlane.xlu0 %434
  %v436 = vsel %vm126, %v117, 0.0
  %437 = vadd.xlane.f32.xlu0 %v436
  %v438 = vpop.xlane.xlu0 %437
  %v439 = vsel %vm126, %v118, 0.0
  %440 = vadd.xlane.f32.xlu0 %v439
  %v441 = vpop.xlane.xlu0 %440
  %v442 = vsel %vm126, %v119, 0.0
  %443 = vadd.xlane.f32.xlu0 %v442
  %v444 = vpop.xlane.xlu0 %443
  %v445 = vsel %vm126, %v120, 0.0
  %446 = vadd.xlane.f32.xlu0 %v445
  %v447 = vpop.xlane.xlu0 %446
  %v448 = vsel %vm126, %v121, 0.0
  %449 = vadd.xlane.f32.xlu0 %v448
  %v450 = vpop.xlane.xlu0 %449
  %v451 = vsel %vm126, %v122, 0.0
  %452 = vadd.xlane.f32.xlu0 %v451
  %v453 = vpop.xlane.xlu0 %452
  %v454 = vsel %vm126, %v123, 0.0
  %455 = vadd.xlane.f32.xlu0 %v454
  %v456 = vpop.xlane.xlu0 %455
  %v457 = vsel %vm126, %v124, 0.0
  %458 = vadd.xlane.f32.xlu0 %v457
  %v459 = vpop.xlane.xlu0 %458
  %v460 = vsel %vm126, %v125, 0.0
  %461 = vadd.xlane.f32.xlu0 %v460
  %v462 = vpop.xlane.xlu0 %461
  %v463 = vadd.f32 %v129, 0.0
  %v464 = vadd.f32 %v132, 0.0
  %v465 = vadd.f32 %v135, 0.0
  %v466 = vadd.f32 %v138, 0.0
  %v467 = vadd.f32 %v141, 0.0
  %v468 = vadd.f32 %v144, 0.0
  %v469 = vadd.f32 %v147, 0.0
  %v470 = vadd.f32 %v150, 0.0
  %v471 = vadd.f32 %v153, 0.0
  %v472 = vadd.f32 %v156, 0.0
  %v473 = vadd.f32 %v159, 0.0
  %v474 = vadd.f32 %v162, 0.0
  %v475 = vadd.f32 %v165, 0.0
  %v476 = vadd.f32 %v168, 0.0
  %v477 = vadd.f32 %v171, 0.0
  %v478 = vadd.f32 %v174, 0.0
  %v479 = vadd.f32 %v177, 0.0
  %v480 = vadd.f32 %v180, 0.0
  %v481 = vadd.f32 %v183, 0.0
  %v482 = vadd.f32 %v186, 0.0
  %v483 = vadd.f32 %v189, 0.0
  %v484 = vadd.f32 %v192, 0.0
  %v485 = vadd.f32 %v195, 0.0
  %v486 = vadd.f32 %v198, 0.0
  %v487 = vadd.f32 %v201, 0.0
  %v488 = vadd.f32 %v204, 0.0
  %v489 = vadd.f32 %v207, 0.0
  %v490 = vadd.f32 %v210, 0.0
  %v491 = vadd.f32 %v213, 0.0
  %v492 = vadd.f32 %v216, 0.0
  %v493 = vadd.f32 %v219, 0.0
  %v494 = vadd.f32 %v222, 0.0
  %v495 = vadd.f32 %v225, 0.0
  %v496 = vadd.f32 %v228, 0.0
  %v497 = vadd.f32 %v231, 0.0
  %v498 = vadd.f32 %v234, 0.0
  %v499 = vadd.f32 %v237, 0.0
  %v500 = vadd.f32 %v240, 0.0
  %v501 = vadd.f32 %v243, 0.0
  %v502 = vadd.f32 %v246, 0.0
  %v503 = vadd.f32 %v249, 0.0
  %v504 = vadd.f32 %v252, 0.0
  %v505 = vadd.f32 %v255, 0.0
  %v506 = vadd.f32 %v258, 0.0
  %v507 = vadd.f32 %v261, 0.0
  %v508 = vadd.f32 %v264, 0.0
  %v509 = vadd.f32 %v267, 0.0
  %v510 = vadd.f32 %v270, 0.0
  %v511 = vadd.f32 %v273, 0.0
  %v512 = vadd.f32 %v276, 0.0
  %v513 = vadd.f32 %v279, 0.0
  %v514 = vadd.f32 %v282, 0.0
  %v515 = vadd.f32 %v285, 0.0
  %v516 = vadd.f32 %v288, 0.0
  %v517 = vadd.f32 %v291, 0.0
  %v518 = vadd.f32 %v294, 0.0
  %v519 = vadd.f32 %v297, 0.0
  %v520 = vadd.f32 %v300, 0.0
  %v521 = vadd.f32 %v303, 0.0
  %v522 = vadd.f32 %v306, 0.0
  %v523 = vadd.f32 %v309, 0.0
  %v524 = vadd.f32 %v312, 0.0
  %v525 = vadd.f32 %v315, 0.0
  %v526 = vadd.f32 %v318, 0.0
  %v527 = vadd.f32 %v321, 0.0
  %v528 = vadd.f32 %v324, 0.0
  %v529 = vadd.f32 %v327, 0.0
  %v530 = vadd.f32 %v330, 0.0
  %v531 = vadd.f32 %v333, 0.0
  %v532 = vadd.f32 %v336, 0.0
  %v533 = vadd.f32 %v339, 0.0
  %v534 = vadd.f32 %v342, 0.0
  %v535 = vadd.f32 %v345, 0.0
  %v536 = vadd.f32 %v348, 0.0
  %v537 = vadd.f32 %v351, 0.0
  %v538 = vadd.f32 %v354, 0.0
  %v539 = vadd.f32 %v357, 0.0
  %v540 = vadd.f32 %v360, 0.0
  %v541 = vadd.f32 %v363, 0.0
  %v542 = vadd.f32 %v366, 0.0
  %v543 = vadd.f32 %v369, 0.0
  %v544 = vadd.f32 %v372, 0.0
  %v545 = vadd.f32 %v375, 0.0
  %v546 = vadd.f32 %v378, 0.0
  %v547 = vadd.f32 %v381, 0.0
  %v548 = vadd.f32 %v384, 0.0
  %v549 = vadd.f32 %v387, 0.0
  %v550 = vadd.f32 %v390, 0.0
  %v551 = vadd.f32 %v393, 0.0
  %v552 = vadd.f32 %v396, 0.0
  %v553 = vadd.f32 %v399, 0.0
  %v554 = vadd.f32 %v402, 0.0
  %v555 = vadd.f32 %v405, 0.0
  %v556 = vadd.f32 %v408, 0.0
  %v557 = vadd.f32 %v411, 0.0
  %v558 = vadd.f32 %v414, 0.0
  %v559 = vadd.f32 %v417, 0.0
  %v560 = vadd.f32 %v420, 0.0
  %v561 = vadd.f32 %v423, 0.0
  %v562 = vadd.f32 %v426, 0.0
  %v563 = vadd.f32 %v429, 0.0
  %v564 = vadd.f32 %v432, 0.0
  %v565 = vadd.f32 %v435, 0.0
  %v566 = vadd.f32 %v438, 0.0
  %v567 = vadd.f32 %v441, 0.0
  %v568 = vadd.f32 %v444, 0.0
  %v569 = vadd.f32 %v447, 0.0
  %v570 = vadd.f32 %v450, 0.0
  %v571 = vadd.f32 %v453, 0.0
  %v572 = vadd.f32 %v456, 0.0
  %v573 = vadd.f32 %v459, 0.0
  %v574 = vadd.f32 %v462, 0.0
  %v575 = vmul.f32 %v14, %v14
  %v576 = vmul.f32 %v15, %v15
  %v577 = vmul.f32 %v16, %v16
  %v578 = vmul.f32 %v17, %v17
  %v579 = vmul.f32 %v18, %v18
  %v580 = vmul.f32 %v19, %v19
  %v581 = vmul.f32 %v20, %v20
  %v582 = vmul.f32 %v21, %v21
  %v583 = vmul.f32 %v22, %v22
  %v584 = vmul.f32 %v23, %v23
  %v585 = vmul.f32 %v24, %v24
  %v586 = vmul.f32 %v25, %v25
  %v587 = vmul.f32 %v26, %v26
  %v588 = vmul.f32 %v27, %v27
  %v589 = vmul.f32 %v28, %v28
  %v590 = vmul.f32 %v29, %v29
  %v591 = vmul.f32 %v30, %v30
  %v592 = vmul.f32 %v31, %v31
  %v593 = vmul.f32 %v32, %v32
  %v594 = vmul.f32 %v33, %v33
  %v595 = vmul.f32 %v34, %v34
  %v596 = vmul.f32 %v35, %v35
  %v597 = vmul.f32 %v36, %v36
  %v598 = vmul.f32 %v37, %v37
  %v599 = vmul.f32 %v38, %v38
  %v600 = vmul.f32 %v39, %v39
  %v601 = vmul.f32 %v40, %v40
  %v602 = vmul.f32 %v41, %v41
  %v603 = vmul.f32 %v42, %v42
  %v604 = vmul.f32 %v43, %v43
  %v605 = vmul.f32 %v44, %v44
  %v606 = vmul.f32 %v45, %v45
  %v607 = vmul.f32 %v46, %v46
  %v608 = vmul.f32 %v47, %v47
  %v609 = vmul.f32 %v48, %v48
  %v610 = vmul.f32 %v49, %v49
  %v611 = vmul.f32 %v50, %v50
  %v612 = vmul.f32 %v51, %v51
  %v613 = vmul.f32 %v52, %v52
  %v614 = vmul.f32 %v53, %v53
  %v615 = vmul.f32 %v54, %v54
  %v616 = vmul.f32 %v55, %v55
  %v617 = vmul.f32 %v56, %v56
  %v618 = vmul.f32 %v57, %v57
  %v619 = vmul.f32 %v58, %v58
  %v620 = vmul.f32 %v59, %v59
  %v621 = vmul.f32 %v60, %v60
  %v622 = vmul.f32 %v61, %v61
  %v623 = vmul.f32 %v62, %v62
  %v624 = vmul.f32 %v63, %v63
  %v625 = vmul.f32 %v64, %v64
  %v626 = vmul.f32 %v65, %v65
  %v627 = vmul.f32 %v66, %v66
  %v628 = vmul.f32 %v67, %v67
  %v629 = vmul.f32 %v68, %v68
  %v630 = vmul.f32 %v69, %v69
  %v631 = vmul.f32 %v70, %v70
  %v632 = vmul.f32 %v71, %v71
  %v633 = vmul.f32 %v72, %v72
  %v634 = vmul.f32 %v73, %v73
  %v635 = vmul.f32 %v74, %v74
  %v636 = vmul.f32 %v75, %v75
  %v637 = vmul.f32 %v76, %v76
  %v638 = vmul.f32 %v77, %v77
  %v639 = vmul.f32 %v78, %v78
  %v640 = vmul.f32 %v79, %v79
  %v641 = vmul.f32 %v80, %v80
  %v642 = vmul.f32 %v81, %v81
  %v643 = vmul.f32 %v82, %v82
  %v644 = vmul.f32 %v83, %v83
  %v645 = vmul.f32 %v84, %v84
  %v646 = vmul.f32 %v85, %v85
  %v647 = vmul.f32 %v86, %v86
  %v648 = vmul.f32 %v87, %v87
  %v649 = vmul.f32 %v88, %v88
  %v650 = vmul.f32 %v89, %v89
  %v651 = vmul.f32 %v90, %v90
  %v652 = vmul.f32 %v91, %v91
  %v653 = vmul.f32 %v92, %v92
  %v654 = vmul.f32 %v93, %v93
  %v655 = vmul.f32 %v94, %v94
  %v656 = vmul.f32 %v95, %v95
  %v657 = vmul.f32 %v96, %v96
  %v658 = vmul.f32 %v97, %v97
  %v659 = vmul.f32 %v98, %v98
  %v660 = vmul.f32 %v99, %v99
  %v661 = vmul.f32 %v100, %v100
  %v662 = vmul.f32 %v101, %v101
  %v663 = vmul.f32 %v102, %v102
  %v664 = vmul.f32 %v103, %v103
  %v665 = vmul.f32 %v104, %v104
  %v666 = vmul.f32 %v105, %v105
  %v667 = vmul.f32 %v106, %v106
  %v668 = vmul.f32 %v107, %v107
  %v669 = vmul.f32 %v108, %v108
  %v670 = vmul.f32 %v109, %v109
  %v671 = vmul.f32 %v110, %v110
  %v672 = vmul.f32 %v111, %v111
  %v673 = vmul.f32 %v112, %v112
  %v674 = vmul.f32 %v113, %v113
  %v675 = vmul.f32 %v114, %v114
  %v676 = vmul.f32 %v115, %v115
  %v677 = vmul.f32 %v116, %v116
  %v678 = vmul.f32 %v117, %v117
  %v679 = vmul.f32 %v118, %v118
  %v680 = vmul.f32 %v119, %v119
  %v681 = vmul.f32 %v120, %v120
  %v682 = vmul.f32 %v121, %v121
  %v683 = vmul.f32 %v122, %v122
  %v684 = vmul.f32 %v123, %v123
  %v685 = vmul.f32 %v124, %v124
  %v686 = vmul.f32 %v125, %v125
  %v687 = vsel %vm126, %v575, 0.0
  %688 = vadd.xlane.f32.xlu0 %v687
  %v689 = vpop.xlane.xlu0 %688
  %v690 = vsel %vm126, %v576, 0.0
  %691 = vadd.xlane.f32.xlu0 %v690
  %v692 = vpop.xlane.xlu0 %691
  %v693 = vsel %vm126, %v577, 0.0
  %694 = vadd.xlane.f32.xlu0 %v693
  %v695 = vpop.xlane.xlu0 %694
  %v696 = vsel %vm126, %v578, 0.0
  %697 = vadd.xlane.f32.xlu0 %v696
  %v698 = vpop.xlane.xlu0 %697
  %v699 = vsel %vm126, %v579, 0.0
  %700 = vadd.xlane.f32.xlu0 %v699
  %v701 = vpop.xlane.xlu0 %700
  %v702 = vsel %vm126, %v580, 0.0
  %703 = vadd.xlane.f32.xlu0 %v702
  %v704 = vpop.xlane.xlu0 %703
  %v705 = vsel %vm126, %v581, 0.0
  %706 = vadd.xlane.f32.xlu0 %v705
  %v707 = vpop.xlane.xlu0 %706
  %v708 = vsel %vm126, %v582, 0.0
  %709 = vadd.xlane.f32.xlu0 %v708
  %v710 = vpop.xlane.xlu0 %709
  %v711 = vsel %vm126, %v583, 0.0
  %712 = vadd.xlane.f32.xlu0 %v711
  %v713 = vpop.xlane.xlu0 %712
  %v714 = vsel %vm126, %v584, 0.0
  %715 = vadd.xlane.f32.xlu0 %v714
  %v716 = vpop.xlane.xlu0 %715
  %v717 = vsel %vm126, %v585, 0.0
  %718 = vadd.xlane.f32.xlu0 %v717
  %v719 = vpop.xlane.xlu0 %718
  %v720 = vsel %vm126, %v586, 0.0
  %721 = vadd.xlane.f32.xlu0 %v720
  %v722 = vpop.xlane.xlu0 %721
  %v723 = vsel %vm126, %v587, 0.0
  %724 = vadd.xlane.f32.xlu0 %v723
  %v725 = vpop.xlane.xlu0 %724
  %v726 = vsel %vm126, %v588, 0.0
  %727 = vadd.xlane.f32.xlu0 %v726
  %v728 = vpop.xlane.xlu0 %727
  %v729 = vsel %vm126, %v589, 0.0
  %730 = vadd.xlane.f32.xlu0 %v729
  %v731 = vpop.xlane.xlu0 %730
  %v732 = vsel %vm126, %v590, 0.0
  %733 = vadd.xlane.f32.xlu0 %v732
  %v734 = vpop.xlane.xlu0 %733
  %v735 = vsel %vm126, %v591, 0.0
  %736 = vadd.xlane.f32.xlu0 %v735
  %v737 = vpop.xlane.xlu0 %736
  %v738 = vsel %vm126, %v592, 0.0
  %739 = vadd.xlane.f32.xlu0 %v738
  %v740 = vpop.xlane.xlu0 %739
  %v741 = vsel %vm126, %v593, 0.0
  %742 = vadd.xlane.f32.xlu0 %v741
  %v743 = vpop.xlane.xlu0 %742
  %v744 = vsel %vm126, %v594, 0.0
  %745 = vadd.xlane.f32.xlu0 %v744
  %v746 = vpop.xlane.xlu0 %745
  %v747 = vsel %vm126, %v595, 0.0
  %748 = vadd.xlane.f32.xlu0 %v747
  %v749 = vpop.xlane.xlu0 %748
  %v750 = vsel %vm126, %v596, 0.0
  %751 = vadd.xlane.f32.xlu0 %v750
  %v752 = vpop.xlane.xlu0 %751
  %v753 = vsel %vm126, %v597, 0.0
  %754 = vadd.xlane.f32.xlu0 %v753
  %v755 = vpop.xlane.xlu0 %754
  %v756 = vsel %vm126, %v598, 0.0
  %757 = vadd.xlane.f32.xlu0 %v756
  %v758 = vpop.xlane.xlu0 %757
  %v759 = vsel %vm126, %v599, 0.0
  %760 = vadd.xlane.f32.xlu0 %v759
  %v761 = vpop.xlane.xlu0 %760
  %v762 = vsel %vm126, %v600, 0.0
  %763 = vadd.xlane.f32.xlu0 %v762
  %v764 = vpop.xlane.xlu0 %763
  %v765 = vsel %vm126, %v601, 0.0
  %766 = vadd.xlane.f32.xlu0 %v765
  %v767 = vpop.xlane.xlu0 %766
  %v768 = vsel %vm126, %v602, 0.0
  %769 = vadd.xlane.f32.xlu0 %v768
  %v770 = vpop.xlane.xlu0 %769
  %v771 = vsel %vm126, %v603, 0.0
  %772 = vadd.xlane.f32.xlu0 %v771
  %v773 = vpop.xlane.xlu0 %772
  %v774 = vsel %vm126, %v604, 0.0
  %775 = vadd.xlane.f32.xlu0 %v774
  %v776 = vpop.xlane.xlu0 %775
  %v777 = vsel %vm126, %v605, 0.0
  %778 = vadd.xlane.f32.xlu0 %v777
  %v779 = vpop.xlane.xlu0 %778
  %v780 = vsel %vm126, %v606, 0.0
  %781 = vadd.xlane.f32.xlu0 %v780
  %v782 = vpop.xlane.xlu0 %781
  %v783 = vsel %vm126, %v607, 0.0
  %784 = vadd.xlane.f32.xlu0 %v783
  %v785 = vpop.xlane.xlu0 %784
  %v786 = vsel %vm126, %v608, 0.0
  %787 = vadd.xlane.f32.xlu0 %v786
  %v788 = vpop.xlane.xlu0 %787
  %v789 = vsel %vm126, %v609, 0.0
  %790 = vadd.xlane.f32.xlu0 %v789
  %v791 = vpop.xlane.xlu0 %790
  %v792 = vsel %vm126, %v610, 0.0
  %793 = vadd.xlane.f32.xlu0 %v792
  %v794 = vpop.xlane.xlu0 %793
  %v795 = vsel %vm126, %v611, 0.0
  %796 = vadd.xlane.f32.xlu0 %v795
  %v797 = vpop.xlane.xlu0 %796
  %v798 = vsel %vm126, %v612, 0.0
  %799 = vadd.xlane.f32.xlu0 %v798
  %v800 = vpop.xlane.xlu0 %799
  %v801 = vsel %vm126, %v613, 0.0
  %802 = vadd.xlane.f32.xlu0 %v801
  %v803 = vpop.xlane.xlu0 %802
  %v804 = vsel %vm126, %v614, 0.0
  %805 = vadd.xlane.f32.xlu0 %v804
  %v806 = vpop.xlane.xlu0 %805
  %v807 = vsel %vm126, %v615, 0.0
  %808 = vadd.xlane.f32.xlu0 %v807
  %v809 = vpop.xlane.xlu0 %808
  %v810 = vsel %vm126, %v616, 0.0
  %811 = vadd.xlane.f32.xlu0 %v810
  %v812 = vpop.xlane.xlu0 %811
  %v813 = vsel %vm126, %v617, 0.0
  %814 = vadd.xlane.f32.xlu0 %v813
  %v815 = vpop.xlane.xlu0 %814
  %v816 = vsel %vm126, %v618, 0.0
  %817 = vadd.xlane.f32.xlu0 %v816
  %v818 = vpop.xlane.xlu0 %817
  %v819 = vsel %vm126, %v619, 0.0
  %820 = vadd.xlane.f32.xlu0 %v819
  %v821 = vpop.xlane.xlu0 %820
  %v822 = vsel %vm126, %v620, 0.0
  %823 = vadd.xlane.f32.xlu0 %v822
  %v824 = vpop.xlane.xlu0 %823
  %v825 = vsel %vm126, %v621, 0.0
  %826 = vadd.xlane.f32.xlu0 %v825
  %v827 = vpop.xlane.xlu0 %826
  %v828 = vsel %vm126, %v622, 0.0
  %829 = vadd.xlane.f32.xlu0 %v828
  %v830 = vpop.xlane.xlu0 %829
  %v831 = vsel %vm126, %v623, 0.0
  %832 = vadd.xlane.f32.xlu0 %v831
  %v833 = vpop.xlane.xlu0 %832
  %v834 = vsel %vm126, %v624, 0.0
  %835 = vadd.xlane.f32.xlu0 %v834
  %v836 = vpop.xlane.xlu0 %835
  %v837 = vsel %vm126, %v625, 0.0
  %838 = vadd.xlane.f32.xlu0 %v837
  %v839 = vpop.xlane.xlu0 %838
  %v840 = vsel %vm126, %v626, 0.0
  %841 = vadd.xlane.f32.xlu0 %v840
  %v842 = vpop.xlane.xlu0 %841
  %v843 = vsel %vm126, %v627, 0.0
  %844 = vadd.xlane.f32.xlu0 %v843
  %v845 = vpop.xlane.xlu0 %844
  %v846 = vsel %vm126, %v628, 0.0
  %847 = vadd.xlane.f32.xlu0 %v846
  %v848 = vpop.xlane.xlu0 %847
  %v849 = vsel %vm126, %v629, 0.0
  %850 = vadd.xlane.f32.xlu0 %v849
  %v851 = vpop.xlane.xlu0 %850
  %v852 = vsel %vm126, %v630, 0.0
  %853 = vadd.xlane.f32.xlu0 %v852
  %v854 = vpop.xlane.xlu0 %853
  %v855 = vsel %vm126, %v631, 0.0
  %856 = vadd.xlane.f32.xlu0 %v855
  %v857 = vpop.xlane.xlu0 %856
  %v858 = vsel %vm126, %v632, 0.0
  %859 = vadd.xlane.f32.xlu0 %v858
  %v860 = vpop.xlane.xlu0 %859
  %v861 = vsel %vm126, %v633, 0.0
  %862 = vadd.xlane.f32.xlu0 %v861
  %v863 = vpop.xlane.xlu0 %862
  %v864 = vsel %vm126, %v634, 0.0
  %865 = vadd.xlane.f32.xlu0 %v864
  %v866 = vpop.xlane.xlu0 %865
  %v867 = vsel %vm126, %v635, 0.0
  %868 = vadd.xlane.f32.xlu0 %v867
  %v869 = vpop.xlane.xlu0 %868
  %v870 = vsel %vm126, %v636, 0.0
  %871 = vadd.xlane.f32.xlu0 %v870
  %v872 = vpop.xlane.xlu0 %871
  %v873 = vsel %vm126, %v637, 0.0
  %874 = vadd.xlane.f32.xlu0 %v873
  %v875 = vpop.xlane.xlu0 %874
  %v876 = vsel %vm126, %v638, 0.0
  %877 = vadd.xlane.f32.xlu0 %v876
  %v878 = vpop.xlane.xlu0 %877
  %v879 = vsel %vm126, %v639, 0.0
  %880 = vadd.xlane.f32.xlu0 %v879
  %v881 = vpop.xlane.xlu0 %880
  %v882 = vsel %vm126, %v640, 0.0
  %883 = vadd.xlane.f32.xlu0 %v882
  %v884 = vpop.xlane.xlu0 %883
  %v885 = vsel %vm126, %v641, 0.0
  %886 = vadd.xlane.f32.xlu0 %v885
  %v887 = vpop.xlane.xlu0 %886
  %v888 = vsel %vm126, %v642, 0.0
  %889 = vadd.xlane.f32.xlu0 %v888
  %v890 = vpop.xlane.xlu0 %889
  %v891 = vsel %vm126, %v643, 0.0
  %892 = vadd.xlane.f32.xlu0 %v891
  %v893 = vpop.xlane.xlu0 %892
  %v894 = vsel %vm126, %v644, 0.0
  %895 = vadd.xlane.f32.xlu0 %v894
  %v896 = vpop.xlane.xlu0 %895
  %v897 = vsel %vm126, %v645, 0.0
  %898 = vadd.xlane.f32.xlu0 %v897
  %v899 = vpop.xlane.xlu0 %898
  %v900 = vsel %vm126, %v646, 0.0
  %901 = vadd.xlane.f32.xlu0 %v900
  %v902 = vpop.xlane.xlu0 %901
  %v903 = vsel %vm126, %v647, 0.0
  %904 = vadd.xlane.f32.xlu0 %v903
  %v905 = vpop.xlane.xlu0 %904
  %v906 = vsel %vm126, %v648, 0.0
  %907 = vadd.xlane.f32.xlu0 %v906
  %v908 = vpop.xlane.xlu0 %907
  %v909 = vsel %vm126, %v649, 0.0
  %910 = vadd.xlane.f32.xlu0 %v909
  %v911 = vpop.xlane.xlu0 %910
  %v912 = vsel %vm126, %v650, 0.0
  %913 = vadd.xlane.f32.xlu0 %v912
  %v914 = vpop.xlane.xlu0 %913
  %v915 = vsel %vm126, %v651, 0.0
  %916 = vadd.xlane.f32.xlu0 %v915
  %v917 = vpop.xlane.xlu0 %916
  %v918 = vsel %vm126, %v652, 0.0
  %919 = vadd.xlane.f32.xlu0 %v918
  %v920 = vpop.xlane.xlu0 %919
  %v921 = vsel %vm126, %v653, 0.0
  %922 = vadd.xlane.f32.xlu0 %v921
  %v923 = vpop.xlane.xlu0 %922
  %v924 = vsel %vm126, %v654, 0.0
  %925 = vadd.xlane.f32.xlu0 %v924
  %v926 = vpop.xlane.xlu0 %925
  %v927 = vsel %vm126, %v655, 0.0
  %928 = vadd.xlane.f32.xlu0 %v927
  %v929 = vpop.xlane.xlu0 %928
  %v930 = vsel %vm126, %v656, 0.0
  %931 = vadd.xlane.f32.xlu0 %v930
  %v932 = vpop.xlane.xlu0 %931
  %v933 = vsel %vm126, %v657, 0.0
  %934 = vadd.xlane.f32.xlu0 %v933
  %v935 = vpop.xlane.xlu0 %934
  %v936 = vsel %vm126, %v658, 0.0
  %937 = vadd.xlane.f32.xlu0 %v936
  %v938 = vpop.xlane.xlu0 %937
  %v939 = vsel %vm126, %v659, 0.0
  %940 = vadd.xlane.f32.xlu0 %v939
  %v941 = vpop.xlane.xlu0 %940
  %v942 = vsel %vm126, %v660, 0.0
  %943 = vadd.xlane.f32.xlu0 %v942
  %v944 = vpop.xlane.xlu0 %943
  %v945 = vsel %vm126, %v661, 0.0
  %946 = vadd.xlane.f32.xlu0 %v945
  %v947 = vpop.xlane.xlu0 %946
  %v948 = vsel %vm126, %v662, 0.0
  %949 = vadd.xlane.f32.xlu0 %v948
  %v950 = vpop.xlane.xlu0 %949
  %v951 = vsel %vm126, %v663, 0.0
  %952 = vadd.xlane.f32.xlu0 %v951
  %v953 = vpop.xlane.xlu0 %952
  %v954 = vsel %vm126, %v664, 0.0
  %955 = vadd.xlane.f32.xlu0 %v954
  %v956 = vpop.xlane.xlu0 %955
  %v957 = vsel %vm126, %v665, 0.0
  %958 = vadd.xlane.f32.xlu0 %v957
  %v959 = vpop.xlane.xlu0 %958
  %v960 = vsel %vm126, %v666, 0.0
  %961 = vadd.xlane.f32.xlu0 %v960
  %v962 = vpop.xlane.xlu0 %961
  %v963 = vsel %vm126, %v667, 0.0
  %964 = vadd.xlane.f32.xlu0 %v963
  %v965 = vpop.xlane.xlu0 %964
  %v966 = vsel %vm126, %v668, 0.0
  %967 = vadd.xlane.f32.xlu0 %v966
  %v968 = vpop.xlane.xlu0 %967
  %v969 = vsel %vm126, %v669, 0.0
  %970 = vadd.xlane.f32.xlu0 %v969
  %v971 = vpop.xlane.xlu0 %970
  %v972 = vsel %vm126, %v670, 0.0
  %973 = vadd.xlane.f32.xlu0 %v972
  %v974 = vpop.xlane.xlu0 %973
  %v975 = vsel %vm126, %v671, 0.0
  %976 = vadd.xlane.f32.xlu0 %v975
  %v977 = vpop.xlane.xlu0 %976
  %v978 = vsel %vm126, %v672, 0.0
  %979 = vadd.xlane.f32.xlu0 %v978
  %v980 = vpop.xlane.xlu0 %979
  %v981 = vsel %vm126, %v673, 0.0
  %982 = vadd.xlane.f32.xlu0 %v981
  %v983 = vpop.xlane.xlu0 %982
  %v984 = vsel %vm126, %v674, 0.0
  %985 = vadd.xlane.f32.xlu0 %v984
  %v986 = vpop.xlane.xlu0 %985
  %v987 = vsel %vm126, %v675, 0.0
  %988 = vadd.xlane.f32.xlu0 %v987
  %v989 = vpop.xlane.xlu0 %988
  %v990 = vsel %vm126, %v676, 0.0
  %991 = vadd.xlane.f32.xlu0 %v990
  %v992 = vpop.xlane.xlu0 %991
  %v993 = vsel %vm126, %v677, 0.0
  %994 = vadd.xlane.f32.xlu0 %v993
  %v995 = vpop.xlane.xlu0 %994
  %v996 = vsel %vm126, %v678, 0.0
  %997 = vadd.xlane.f32.xlu0 %v996
  %v998 = vpop.xlane.xlu0 %997
  %v999 = vsel %vm126, %v679, 0.0
  %1000 = vadd.xlane.f32.xlu0 %v999
  %v1001 = vpop.xlane.xlu0 %1000
  %v1002 = vsel %vm126, %v680, 0.0
  %1003 = vadd.xlane.f32.xlu0 %v1002
  %v1004 = vpop.xlane.xlu0 %1003
  %v1005 = vsel %vm126, %v681, 0.0
  %1006 = vadd.xlane.f32.xlu0 %v1005
  %v1007 = vpop.xlane.xlu0 %1006
  %v1008 = vsel %vm126, %v682, 0.0
  %1009 = vadd.xlane.f32.xlu0 %v1008
  %v1010 = vpop.xlane.xlu0 %1009
  %v1011 = vsel %vm126, %v683, 0.0
  %1012 = vadd.xlane.f32.xlu0 %v1011
  %v1013 = vpop.xlane.xlu0 %1012
  %v1014 = vsel %vm126, %v684, 0.0
  %1015 = vadd.xlane.f32.xlu0 %v1014
  %v1016 = vpop.xlane.xlu0 %1015
  %v1017 = vsel %vm126, %v685, 0.0
  %1018 = vadd.xlane.f32.xlu0 %v1017
  %v1019 = vpop.xlane.xlu0 %1018
  %v1020 = vsel %vm126, %v686, 0.0
  %1021 = vadd.xlane.f32.xlu0 %v1020
  %v1022 = vpop.xlane.xlu0 %1021
  %v1023 = vadd.f32 %v689, 0.0
  %v1024 = vadd.f32 %v692, 0.0
  %v1025 = vadd.f32 %v695, 0.0
  %v1026 = vadd.f32 %v698, 0.0
  %v1027 = vadd.f32 %v701, 0.0
  %v1028 = vadd.f32 %v704, 0.0
  %v1029 = vadd.f32 %v707, 0.0
  %v1030 = vadd.f32 %v710, 0.0
  %v1031 = vadd.f32 %v713, 0.0
  %v1032 = vadd.f32 %v716, 0.0
  %v1033 = vadd.f32 %v719, 0.0
  %v1034 = vadd.f32 %v722, 0.0
  %v1035 = vadd.f32 %v725, 0.0
  %v1036 = vadd.f32 %v728, 0.0
  %v1037 = vadd.f32 %v731, 0.0
  %v1038 = vadd.f32 %v734, 0.0
  %v1039 = vadd.f32 %v737, 0.0
  %v1040 = vadd.f32 %v740, 0.0
  %v1041 = vadd.f32 %v743, 0.0
  %v1042 = vadd.f32 %v746, 0.0
  %v1043 = vadd.f32 %v749, 0.0
  %v1044 = vadd.f32 %v752, 0.0
  %v1045 = vadd.f32 %v755, 0.0
  %v1046 = vadd.f32 %v758, 0.0
  %v1047 = vadd.f32 %v761, 0.0
  %v1048 = vadd.f32 %v764, 0.0
  %v1049 = vadd.f32 %v767, 0.0
  %v1050 = vadd.f32 %v770, 0.0
  %v1051 = vadd.f32 %v773, 0.0
  %v1052 = vadd.f32 %v776, 0.0
  %v1053 = vadd.f32 %v779, 0.0
  %v1054 = vadd.f32 %v782, 0.0
  %v1055 = vadd.f32 %v785, 0.0
  %v1056 = vadd.f32 %v788, 0.0
  %v1057 = vadd.f32 %v791, 0.0
  %v1058 = vadd.f32 %v794, 0.0
  %v1059 = vadd.f32 %v797, 0.0
  %v1060 = vadd.f32 %v800, 0.0
  %v1061 = vadd.f32 %v803, 0.0
  %v1062 = vadd.f32 %v806, 0.0
  %v1063 = vadd.f32 %v809, 0.0
  %v1064 = vadd.f32 %v812, 0.0
  %v1065 = vadd.f32 %v815, 0.0
  %v1066 = vadd.f32 %v818, 0.0
  %v1067 = vadd.f32 %v821, 0.0
  %v1068 = vadd.f32 %v824, 0.0
  %v1069 = vadd.f32 %v827, 0.0
  %v1070 = vadd.f32 %v830, 0.0
  %v1071 = vadd.f32 %v833, 0.0
  %v1072 = vadd.f32 %v836, 0.0
  %v1073 = vadd.f32 %v839, 0.0
  %v1074 = vadd.f32 %v842, 0.0
  %v1075 = vadd.f32 %v845, 0.0
  %v1076 = vadd.f32 %v848, 0.0
  %v1077 = vadd.f32 %v851, 0.0
  %v1078 = vadd.f32 %v854, 0.0
  %v1079 = vadd.f32 %v857, 0.0
  %v1080 = vadd.f32 %v860, 0.0
  %v1081 = vadd.f32 %v863, 0.0
  %v1082 = vadd.f32 %v866, 0.0
  %v1083 = vadd.f32 %v869, 0.0
  %v1084 = vadd.f32 %v872, 0.0
  %v1085 = vadd.f32 %v875, 0.0
  %v1086 = vadd.f32 %v878, 0.0
  %v1087 = vadd.f32 %v881, 0.0
  %v1088 = vadd.f32 %v884, 0.0
  %v1089 = vadd.f32 %v887, 0.0
  %v1090 = vadd.f32 %v890, 0.0
  %v1091 = vadd.f32 %v893, 0.0
  %v1092 = vadd.f32 %v896, 0.0
  %v1093 = vadd.f32 %v899, 0.0
  %v1094 = vadd.f32 %v902, 0.0
  %v1095 = vadd.f32 %v905, 0.0
  %v1096 = vadd.f32 %v908, 0.0
  %v1097 = vadd.f32 %v911, 0.0
  %v1098 = vadd.f32 %v914, 0.0
  %v1099 = vadd.f32 %v917, 0.0
  %v1100 = vadd.f32 %v920, 0.0
  %v1101 = vadd.f32 %v923, 0.0
  %v1102 = vadd.f32 %v926, 0.0
  %v1103 = vadd.f32 %v929, 0.0
  %v1104 = vadd.f32 %v932, 0.0
  %v1105 = vadd.f32 %v935, 0.0
  %v1106 = vadd.f32 %v938, 0.0
  %v1107 = vadd.f32 %v941, 0.0
  %v1108 = vadd.f32 %v944, 0.0
  %v1109 = vadd.f32 %v947, 0.0
  %v1110 = vadd.f32 %v950, 0.0
  %v1111 = vadd.f32 %v953, 0.0
  %v1112 = vadd.f32 %v956, 0.0
  %v1113 = vadd.f32 %v959, 0.0
  %v1114 = vadd.f32 %v962, 0.0
  %v1115 = vadd.f32 %v965, 0.0
  %v1116 = vadd.f32 %v968, 0.0
  %v1117 = vadd.f32 %v971, 0.0
  %v1118 = vadd.f32 %v974, 0.0
  %v1119 = vadd.f32 %v977, 0.0
  %v1120 = vadd.f32 %v980, 0.0
  %v1121 = vadd.f32 %v983, 0.0
  %v1122 = vadd.f32 %v986, 0.0
  %v1123 = vadd.f32 %v989, 0.0
  %v1124 = vadd.f32 %v992, 0.0
  %v1125 = vadd.f32 %v995, 0.0
  %v1126 = vadd.f32 %v998, 0.0
  %v1127 = vadd.f32 %v1001, 0.0
  %v1128 = vadd.f32 %v1004, 0.0
  %v1129 = vadd.f32 %v1007, 0.0
  %v1130 = vadd.f32 %v1010, 0.0
  %v1131 = vadd.f32 %v1013, 0.0
  %v1132 = vadd.f32 %v1016, 0.0
  %v1133 = vadd.f32 %v1019, 0.0
  %v1134 = vadd.f32 %v1022, 0.0
  %v1135 = vmul.f32 %v463, 0.020408163
  %v1136 = vmul.f32 %v464, 0.020408163
  %v1137 = vmul.f32 %v465, 0.020408163
  %v1138 = vmul.f32 %v466, 0.020408163
  %v1139 = vmul.f32 %v467, 0.020408163
  %v1140 = vmul.f32 %v468, 0.020408163
  %v1141 = vmul.f32 %v469, 0.020408163
  %v1142 = vmul.f32 %v470, 0.020408163
  %v1143 = vmul.f32 %v471, 0.020408163
  %v1144 = vmul.f32 %v472, 0.020408163
  %v1145 = vmul.f32 %v473, 0.020408163
  %v1146 = vmul.f32 %v474, 0.020408163
  %v1147 = vmul.f32 %v475, 0.020408163
  %v1148 = vmul.f32 %v476, 0.020408163
  %v1149 = vmul.f32 %v477, 0.020408163
  %v1150 = vmul.f32 %v478, 0.020408163
  %v1151 = vmul.f32 %v479, 0.020408163
  %v1152 = vmul.f32 %v480, 0.020408163
  %v1153 = vmul.f32 %v481, 0.020408163
  %v1154 = vmul.f32 %v482, 0.020408163
  %v1155 = vmul.f32 %v483, 0.020408163
  %v1156 = vmul.f32 %v484, 0.020408163
  %v1157 = vmul.f32 %v485, 0.020408163
  %v1158 = vmul.f32 %v486, 0.020408163
  %v1159 = vmul.f32 %v487, 0.020408163
  %v1160 = vmul.f32 %v488, 0.020408163
  %v1161 = vmul.f32 %v489, 0.020408163
  %v1162 = vmul.f32 %v490, 0.020408163
  %v1163 = vmul.f32 %v491, 0.020408163
  %v1164 = vmul.f32 %v492, 0.020408163
  %v1165 = vmul.f32 %v493, 0.020408163
  %v1166 = vmul.f32 %v494, 0.020408163
  %v1167 = vmul.f32 %v495, 0.020408163
  %v1168 = vmul.f32 %v496, 0.020408163
  %v1169 = vmul.f32 %v497, 0.020408163
  %v1170 = vmul.f32 %v498, 0.020408163
  %v1171 = vmul.f32 %v499, 0.020408163
  %v1172 = vmul.f32 %v500, 0.020408163
  %v1173 = vmul.f32 %v501, 0.020408163
  %v1174 = vmul.f32 %v502, 0.020408163
  %v1175 = vmul.f32 %v503, 0.020408163
  %v1176 = vmul.f32 %v504, 0.020408163
  %v1177 = vmul.f32 %v505, 0.020408163
  %v1178 = vmul.f32 %v506, 0.020408163
  %v1179 = vmul.f32 %v507, 0.020408163
  %v1180 = vmul.f32 %v508, 0.020408163
  %v1181 = vmul.f32 %v509, 0.020408163
  %v1182 = vmul.f32 %v510, 0.020408163
  %v1183 = vmul.f32 %v511, 0.020408163
  %v1184 = vmul.f32 %v512, 0.020408163
  %v1185 = vmul.f32 %v513, 0.020408163
  %v1186 = vmul.f32 %v514, 0.020408163
  %v1187 = vmul.f32 %v515, 0.020408163
  %v1188 = vmul.f32 %v516, 0.020408163
  %v1189 = vmul.f32 %v517, 0.020408163
  %v1190 = vmul.f32 %v518, 0.020408163
  %v1191 = vmul.f32 %v519, 0.020408163
  %v1192 = vmul.f32 %v520, 0.020408163
  %v1193 = vmul.f32 %v521, 0.020408163
  %v1194 = vmul.f32 %v522, 0.020408163
  %v1195 = vmul.f32 %v523, 0.020408163
  %v1196 = vmul.f32 %v524, 0.020408163
  %v1197 = vmul.f32 %v525, 0.020408163
  %v1198 = vmul.f32 %v526, 0.020408163
  %v1199 = vmul.f32 %v527, 0.020408163
  %v1200 = vmul.f32 %v528, 0.020408163
  %v1201 = vmul.f32 %v529, 0.020408163
  %v1202 = vmul.f32 %v530, 0.020408163
  %v1203 = vmul.f32 %v531, 0.020408163
  %v1204 = vmul.f32 %v532, 0.020408163
  %v1205 = vmul.f32 %v533, 0.020408163
  %v1206 = vmul.f32 %v534, 0.020408163
  %v1207 = vmul.f32 %v535, 0.020408163
  %v1208 = vmul.f32 %v536, 0.020408163
  %v1209 = vmul.f32 %v537, 0.020408163
  %v1210 = vmul.f32 %v538, 0.020408163
  %v1211 = vmul.f32 %v539, 0.020408163
  %v1212 = vmul.f32 %v540, 0.020408163
  %v1213 = vmul.f32 %v541, 0.020408163
  %v1214 = vmul.f32 %v542, 0.020408163
  %v1215 = vmul.f32 %v543, 0.020408163
  %v1216 = vmul.f32 %v544, 0.020408163
  %v1217 = vmul.f32 %v545, 0.020408163
  %v1218 = vmul.f32 %v546, 0.020408163
  %v1219 = vmul.f32 %v547, 0.020408163
  %v1220 = vmul.f32 %v548, 0.020408163
  %v1221 = vmul.f32 %v549, 0.020408163
  %v1222 = vmul.f32 %v550, 0.020408163
  %v1223 = vmul.f32 %v551, 0.020408163
  %v1224 = vmul.f32 %v552, 0.020408163
  %v1225 = vmul.f32 %v553, 0.020408163
  %v1226 = vmul.f32 %v554, 0.020408163
  %v1227 = vmul.f32 %v555, 0.020408163
  %v1228 = vmul.f32 %v556, 0.020408163
  %v1229 = vmul.f32 %v557, 0.020408163
  %v1230 = vmul.f32 %v558, 0.020408163
  %v1231 = vmul.f32 %v559, 0.020408163
  %v1232 = vmul.f32 %v560, 0.020408163
  %v1233 = vmul.f32 %v561, 0.020408163
  %v1234 = vmul.f32 %v562, 0.020408163
  %v1235 = vmul.f32 %v563, 0.020408163
  %v1236 = vmul.f32 %v564, 0.020408163
  %v1237 = vmul.f32 %v565, 0.020408163
  %v1238 = vmul.f32 %v566, 0.020408163
  %v1239 = vmul.f32 %v567, 0.020408163
  %v1240 = vmul.f32 %v568, 0.020408163
  %v1241 = vmul.f32 %v569, 0.020408163
  %v1242 = vmul.f32 %v570, 0.020408163
  %v1243 = vmul.f32 %v571, 0.020408163
  %v1244 = vmul.f32 %v572, 0.020408163
  %v1245 = vmul.f32 %v573, 0.020408163
  %v1246 = vmul.f32 %v574, 0.020408163
  %v1247 = vmul.f32 %v1023, 0.020408163
  %v1248 = vmul.f32 %v1024, 0.020408163
  %v1249 = vmul.f32 %v1025, 0.020408163
  %v1250 = vmul.f32 %v1026, 0.020408163
  %v1251 = vmul.f32 %v1027, 0.020408163
  %v1252 = vmul.f32 %v1028, 0.020408163
  %v1253 = vmul.f32 %v1029, 0.020408163
  %v1254 = vmul.f32 %v1030, 0.020408163
  %v1255 = vmul.f32 %v1031, 0.020408163
  %v1256 = vmul.f32 %v1032, 0.020408163
  %v1257 = vmul.f32 %v1033, 0.020408163
  %v1258 = vmul.f32 %v1034, 0.020408163
  %v1259 = vmul.f32 %v1035, 0.020408163
  %v1260 = vmul.f32 %v1036, 0.020408163
  %v1261 = vmul.f32 %v1037, 0.020408163
  %v1262 = vmul.f32 %v1038, 0.020408163
  %v1263 = vmul.f32 %v1039, 0.020408163
  %v1264 = vmul.f32 %v1040, 0.020408163
  %v1265 = vmul.f32 %v1041, 0.020408163
  %v1266 = vmul.f32 %v1042, 0.020408163
  %v1267 = vmul.f32 %v1043, 0.020408163
  %v1268 = vmul.f32 %v1044, 0.020408163
  %v1269 = vmul.f32 %v1045, 0.020408163
  %v1270 = vmul.f32 %v1046, 0.020408163
  %v1271 = vmul.f32 %v1047, 0.020408163
  %v1272 = vmul.f32 %v1048, 0.020408163
  %v1273 = vmul.f32 %v1049, 0.020408163
  %v1274 = vmul.f32 %v1050, 0.020408163
  %v1275 = vmul.f32 %v1051, 0.020408163
  %v1276 = vmul.f32 %v1052, 0.020408163
  %v1277 = vmul.f32 %v1053, 0.020408163
  %v1278 = vmul.f32 %v1054, 0.020408163
  %v1279 = vmul.f32 %v1055, 0.020408163
  %v1280 = vmul.f32 %v1056, 0.020408163
  %v1281 = vmul.f32 %v1057, 0.020408163
  %v1282 = vmul.f32 %v1058, 0.020408163
  %v1283 = vmul.f32 %v1059, 0.020408163
  %v1284 = vmul.f32 %v1060, 0.020408163
  %v1285 = vmul.f32 %v1061, 0.020408163
  %v1286 = vmul.f32 %v1062, 0.020408163
  %v1287 = vmul.f32 %v1063, 0.020408163
  %v1288 = vmul.f32 %v1064, 0.020408163
  %v1289 = vmul.f32 %v1065, 0.020408163
  %v1290 = vmul.f32 %v1066, 0.020408163
  %v1291 = vmul.f32 %v1067, 0.020408163
  %v1292 = vmul.f32 %v1068, 0.020408163
  %v1293 = vmul.f32 %v1069, 0.020408163
  %v1294 = vmul.f32 %v1070, 0.020408163
  %v1295 = vmul.f32 %v1071, 0.020408163
  %v1296 = vmul.f32 %v1072, 0.020408163
  %v1297 = vmul.f32 %v1073, 0.020408163
  %v1298 = vmul.f32 %v1074, 0.020408163
  %v1299 = vmul.f32 %v1075, 0.020408163
  %v1300 = vmul.f32 %v1076, 0.020408163
  %v1301 = vmul.f32 %v1077, 0.020408163
  %v1302 = vmul.f32 %v1078, 0.020408163
  %v1303 = vmul.f32 %v1079, 0.020408163
  %v1304 = vmul.f32 %v1080, 0.020408163
  %v1305 = vmul.f32 %v1081, 0.020408163
  %v1306 = vmul.f32 %v1082, 0.020408163
  %v1307 = vmul.f32 %v1083, 0.020408163
  %v1308 = vmul.f32 %v1084, 0.020408163
  %v1309 = vmul.f32 %v1085, 0.020408163
  %v1310 = vmul.f32 %v1086, 0.020408163
  %v1311 = vmul.f32 %v1087, 0.020408163
  %v1312 = vmul.f32 %v1088, 0.020408163
  %v1313 = vmul.f32 %v1089, 0.020408163
  %v1314 = vmul.f32 %v1090, 0.020408163
  %v1315 = vmul.f32 %v1091, 0.020408163
  %v1316 = vmul.f32 %v1092, 0.020408163
  %v1317 = vmul.f32 %v1093, 0.020408163
  %v1318 = vmul.f32 %v1094, 0.020408163
  %v1319 = vmul.f32 %v1095, 0.020408163
  %v1320 = vmul.f32 %v1096, 0.020408163
  %v1321 = vmul.f32 %v1097, 0.020408163
  %v1322 = vmul.f32 %v1098, 0.020408163
  %v1323 = vmul.f32 %v1099, 0.020408163
  %v1324 = vmul.f32 %v1100, 0.020408163
  %v1325 = vmul.f32 %v1101, 0.020408163
  %v1326 = vmul.f32 %v1102, 0.020408163
  %v1327 = vmul.f32 %v1103, 0.020408163
  %v1328 = vmul.f32 %v1104, 0.020408163
  %v1329 = vmul.f32 %v1105, 0.020408163
  %v1330 = vmul.f32 %v1106, 0.020408163
  %v1331 = vmul.f32 %v1107, 0.020408163
  %v1332 = vmul.f32 %v1108, 0.020408163
  %v1333 = vmul.f32 %v1109, 0.020408163
  %v1334 = vmul.f32 %v1110, 0.020408163
  %v1335 = vmul.f32 %v1111, 0.020408163
  %v1336 = vmul.f32 %v1112, 0.020408163
  %v1337 = vmul.f32 %v1113, 0.020408163
  %v1338 = vmul.f32 %v1114, 0.020408163
  %v1339 = vmul.f32 %v1115, 0.020408163
  %v1340 = vmul.f32 %v1116, 0.020408163
  %v1341 = vmul.f32 %v1117, 0.020408163
  %v1342 = vmul.f32 %v1118, 0.020408163
  %v1343 = vmul.f32 %v1119, 0.020408163
  %v1344 = vmul.f32 %v1120, 0.020408163
  %v1345 = vmul.f32 %v1121, 0.020408163
  %v1346 = vmul.f32 %v1122, 0.020408163
  %v1347 = vmul.f32 %v1123, 0.020408163
  %v1348 = vmul.f32 %v1124, 0.020408163
  %v1349 = vmul.f32 %v1125, 0.020408163
  %v1350 = vmul.f32 %v1126, 0.020408163
  %v1351 = vmul.f32 %v1127, 0.020408163
  %v1352 = vmul.f32 %v1128, 0.020408163
  %v1353 = vmul.f32 %v1129, 0.020408163
  %v1354 = vmul.f32 %v1130, 0.020408163
  %v1355 = vmul.f32 %v1131, 0.020408163
  %v1356 = vmul.f32 %v1132, 0.020408163
  %v1357 = vmul.f32 %v1133, 0.020408163
  %v1358 = vmul.f32 %v1134, 0.020408163
  %v1359 = vmul.f32 %v1135, %v1135
  %v1360 = vmul.f32 %v1136, %v1136
  %v1361 = vmul.f32 %v1137, %v1137
  %v1362 = vmul.f32 %v1138, %v1138
  %v1363 = vmul.f32 %v1139, %v1139
  %v1364 = vmul.f32 %v1140, %v1140
  %v1365 = vmul.f32 %v1141, %v1141
  %v1366 = vmul.f32 %v1142, %v1142
  %v1367 = vmul.f32 %v1143, %v1143
  %v1368 = vmul.f32 %v1144, %v1144
  %v1369 = vmul.f32 %v1145, %v1145
  %v1370 = vmul.f32 %v1146, %v1146
  %v1371 = vmul.f32 %v1147, %v1147
  %v1372 = vmul.f32 %v1148, %v1148
  %v1373 = vmul.f32 %v1149, %v1149
  %v1374 = vmul.f32 %v1150, %v1150
  %v1375 = vmul.f32 %v1151, %v1151
  %v1376 = vmul.f32 %v1152, %v1152
  %v1377 = vmul.f32 %v1153, %v1153
  %v1378 = vmul.f32 %v1154, %v1154
  %v1379 = vmul.f32 %v1155, %v1155
  %v1380 = vmul.f32 %v1156, %v1156
  %v1381 = vmul.f32 %v1157, %v1157
  %v1382 = vmul.f32 %v1158, %v1158
  %v1383 = vmul.f32 %v1159, %v1159
  %v1384 = vmul.f32 %v1160, %v1160
  %v1385 = vmul.f32 %v1161, %v1161
  %v1386 = vmul.f32 %v1162, %v1162
  %v1387 = vmul.f32 %v1163, %v1163
  %v1388 = vmul.f32 %v1164, %v1164
  %v1389 = vmul.f32 %v1165, %v1165
  %v1390 = vmul.f32 %v1166, %v1166
  %v1391 = vmul.f32 %v1167, %v1167
  %v1392 = vmul.f32 %v1168, %v1168
  %v1393 = vmul.f32 %v1169, %v1169
  %v1394 = vmul.f32 %v1170, %v1170
  %v1395 = vmul.f32 %v1171, %v1171
  %v1396 = vmul.f32 %v1172, %v1172
  %v1397 = vmul.f32 %v1173, %v1173
  %v1398 = vmul.f32 %v1174, %v1174
  %v1399 = vmul.f32 %v1175, %v1175
  %v1400 = vmul.f32 %v1176, %v1176
  %v1401 = vmul.f32 %v1177, %v1177
  %v1402 = vmul.f32 %v1178, %v1178
  %v1403 = vmul.f32 %v1179, %v1179
  %v1404 = vmul.f32 %v1180, %v1180
  %v1405 = vmul.f32 %v1181, %v1181
  %v1406 = vmul.f32 %v1182, %v1182
  %v1407 = vmul.f32 %v1183, %v1183
  %v1408 = vmul.f32 %v1184, %v1184
  %v1409 = vmul.f32 %v1185, %v1185
  %v1410 = vmul.f32 %v1186, %v1186
  %v1411 = vmul.f32 %v1187, %v1187
  %v1412 = vmul.f32 %v1188, %v1188
  %v1413 = vmul.f32 %v1189, %v1189
  %v1414 = vmul.f32 %v1190, %v1190
  %v1415 = vmul.f32 %v1191, %v1191
  %v1416 = vmul.f32 %v1192, %v1192
  %v1417 = vmul.f32 %v1193, %v1193
  %v1418 = vmul.f32 %v1194, %v1194
  %v1419 = vmul.f32 %v1195, %v1195
  %v1420 = vmul.f32 %v1196, %v1196
  %v1421 = vmul.f32 %v1197, %v1197
  %v1422 = vmul.f32 %v1198, %v1198
  %v1423 = vmul.f32 %v1199, %v1199
  %v1424 = vmul.f32 %v1200, %v1200
  %v1425 = vmul.f32 %v1201, %v1201
  %v1426 = vmul.f32 %v1202, %v1202
  %v1427 = vmul.f32 %v1203, %v1203
  %v1428 = vmul.f32 %v1204, %v1204
  %v1429 = vmul.f32 %v1205, %v1205
  %v1430 = vmul.f32 %v1206, %v1206
  %v1431 = vmul.f32 %v1207, %v1207
  %v1432 = vmul.f32 %v1208, %v1208
  %v1433 = vmul.f32 %v1209, %v1209
  %v1434 = vmul.f32 %v1210, %v1210
  %v1435 = vmul.f32 %v1211, %v1211
  %v1436 = vmul.f32 %v1212, %v1212
  %v1437 = vmul.f32 %v1213, %v1213
  %v1438 = vmul.f32 %v1214, %v1214
  %v1439 = vmul.f32 %v1215, %v1215
  %v1440 = vmul.f32 %v1216, %v1216
  %v1441 = vmul.f32 %v1217, %v1217
  %v1442 = vmul.f32 %v1218, %v1218
  %v1443 = vmul.f32 %v1219, %v1219
  %v1444 = vmul.f32 %v1220, %v1220
  %v1445 = vmul.f32 %v1221, %v1221
  %v1446 = vmul.f32 %v1222, %v1222
  %v1447 = vmul.f32 %v1223, %v1223
  %v1448 = vmul.f32 %v1224, %v1224
  %v1449 = vmul.f32 %v1225, %v1225
  %v1450 = vmul.f32 %v1226, %v1226
  %v1451 = vmul.f32 %v1227, %v1227
  %v1452 = vmul.f32 %v1228, %v1228
  %v1453 = vmul.f32 %v1229, %v1229
  %v1454 = vmul.f32 %v1230, %v1230
  %v1455 = vmul.f32 %v1231, %v1231
  %v1456 = vmul.f32 %v1232, %v1232
  %v1457 = vmul.f32 %v1233, %v1233
  %v1458 = vmul.f32 %v1234, %v1234
  %v1459 = vmul.f32 %v1235, %v1235
  %v1460 = vmul.f32 %v1236, %v1236
  %v1461 = vmul.f32 %v1237, %v1237
  %v1462 = vmul.f32 %v1238, %v1238
  %v1463 = vmul.f32 %v1239, %v1239
  %v1464 = vmul.f32 %v1240, %v1240
  %v1465 = vmul.f32 %v1241, %v1241
  %v1466 = vmul.f32 %v1242, %v1242
  %v1467 = vmul.f32 %v1243, %v1243
  %v1468 = vmul.f32 %v1244, %v1244
  %v1469 = vmul.f32 %v1245, %v1245
  %v1470 = vmul.f32 %v1246, %v1246
  %v1471 = vsub.f32 %v1247, %v1359
  %v1472 = vsub.f32 %v1248, %v1360
  %v1473 = vsub.f32 %v1249, %v1361
  %v1474 = vsub.f32 %v1250, %v1362
  %v1475 = vsub.f32 %v1251, %v1363
  %v1476 = vsub.f32 %v1252, %v1364
  %v1477 = vsub.f32 %v1253, %v1365
  %v1478 = vsub.f32 %v1254, %v1366
  %v1479 = vsub.f32 %v1255, %v1367
  %v1480 = vsub.f32 %v1256, %v1368
  %v1481 = vsub.f32 %v1257, %v1369
  %v1482 = vsub.f32 %v1258, %v1370
  %v1483 = vsub.f32 %v1259, %v1371
  %v1484 = vsub.f32 %v1260, %v1372
  %v1485 = vsub.f32 %v1261, %v1373
  %v1486 = vsub.f32 %v1262, %v1374
  %v1487 = vsub.f32 %v1263, %v1375
  %v1488 = vsub.f32 %v1264, %v1376
  %v1489 = vsub.f32 %v1265, %v1377
  %v1490 = vsub.f32 %v1266, %v1378
  %v1491 = vsub.f32 %v1267, %v1379
  %v1492 = vsub.f32 %v1268, %v1380
  %v1493 = vsub.f32 %v1269, %v1381
  %v1494 = vsub.f32 %v1270, %v1382
  %v1495 = vsub.f32 %v1271, %v1383
  %v1496 = vsub.f32 %v1272, %v1384
  %v1497 = vsub.f32 %v1273, %v1385
  %v1498 = vsub.f32 %v1274, %v1386
  %v1499 = vsub.f32 %v1275, %v1387
  %v1500 = vsub.f32 %v1276, %v1388
  %v1501 = vsub.f32 %v1277, %v1389
  %v1502 = vsub.f32 %v1278, %v1390
  %v1503 = vsub.f32 %v1279, %v1391
  %v1504 = vsub.f32 %v1280, %v1392
  %v1505 = vsub.f32 %v1281, %v1393
  %v1506 = vsub.f32 %v1282, %v1394
  %v1507 = vsub.f32 %v1283, %v1395
  %v1508 = vsub.f32 %v1284, %v1396
  %v1509 = vsub.f32 %v1285, %v1397
  %v1510 = vsub.f32 %v1286, %v1398
  %v1511 = vsub.f32 %v1287, %v1399
  %v1512 = vsub.f32 %v1288, %v1400
  %v1513 = vsub.f32 %v1289, %v1401
  %v1514 = vsub.f32 %v1290, %v1402
  %v1515 = vsub.f32 %v1291, %v1403
  %v1516 = vsub.f32 %v1292, %v1404
  %v1517 = vsub.f32 %v1293, %v1405
  %v1518 = vsub.f32 %v1294, %v1406
  %v1519 = vsub.f32 %v1295, %v1407
  %v1520 = vsub.f32 %v1296, %v1408
  %v1521 = vsub.f32 %v1297, %v1409
  %v1522 = vsub.f32 %v1298, %v1410
  %v1523 = vsub.f32 %v1299, %v1411
  %v1524 = vsub.f32 %v1300, %v1412
  %v1525 = vsub.f32 %v1301, %v1413
  %v1526 = vsub.f32 %v1302, %v1414
  %v1527 = vsub.f32 %v1303, %v1415
  %v1528 = vsub.f32 %v1304, %v1416
  %v1529 = vsub.f32 %v1305, %v1417
  %v1530 = vsub.f32 %v1306, %v1418
  %v1531 = vsub.f32 %v1307, %v1419
  %v1532 = vsub.f32 %v1308, %v1420
  %v1533 = vsub.f32 %v1309, %v1421
  %v1534 = vsub.f32 %v1310, %v1422
  %v1535 = vsub.f32 %v1311, %v1423
  %v1536 = vsub.f32 %v1312, %v1424
  %v1537 = vsub.f32 %v1313, %v1425
  %v1538 = vsub.f32 %v1314, %v1426
  %v1539 = vsub.f32 %v1315, %v1427
  %v1540 = vsub.f32 %v1316, %v1428
  %v1541 = vsub.f32 %v1317, %v1429
  %v1542 = vsub.f32 %v1318, %v1430
  %v1543 = vsub.f32 %v1319, %v1431
  %v1544 = vsub.f32 %v1320, %v1432
  %v1545 = vsub.f32 %v1321, %v1433
  %v1546 = vsub.f32 %v1322, %v1434
  %v1547 = vsub.f32 %v1323, %v1435
  %v1548 = vsub.f32 %v1324, %v1436
  %v1549 = vsub.f32 %v1325, %v1437
  %v1550 = vsub.f32 %v1326, %v1438
  %v1551 = vsub.f32 %v1327, %v1439
  %v1552 = vsub.f32 %v1328, %v1440
  %v1553 = vsub.f32 %v1329, %v1441
  %v1554 = vsub.f32 %v1330, %v1442
  %v1555 = vsub.f32 %v1331, %v1443
  %v1556 = vsub.f32 %v1332, %v1444
  %v1557 = vsub.f32 %v1333, %v1445
  %v1558 = vsub.f32 %v1334, %v1446
  %v1559 = vsub.f32 %v1335, %v1447
  %v1560 = vsub.f32 %v1336, %v1448
  %v1561 = vsub.f32 %v1337, %v1449
  %v1562 = vsub.f32 %v1338, %v1450
  %v1563 = vsub.f32 %v1339, %v1451
  %v1564 = vsub.f32 %v1340, %v1452
  %v1565 = vsub.f32 %v1341, %v1453
  %v1566 = vsub.f32 %v1342, %v1454
  %v1567 = vsub.f32 %v1343, %v1455
  %v1568 = vsub.f32 %v1344, %v1456
  %v1569 = vsub.f32 %v1345, %v1457
  %v1570 = vsub.f32 %v1346, %v1458
  %v1571 = vsub.f32 %v1347, %v1459
  %v1572 = vsub.f32 %v1348, %v1460
  %v1573 = vsub.f32 %v1349, %v1461
  %v1574 = vsub.f32 %v1350, %v1462
  %v1575 = vsub.f32 %v1351, %v1463
  %v1576 = vsub.f32 %v1352, %v1464
  %v1577 = vsub.f32 %v1353, %v1465
  %v1578 = vsub.f32 %v1354, %v1466
  %v1579 = vsub.f32 %v1355, %v1467
  %v1580 = vsub.f32 %v1356, %v1468
  %v1581 = vsub.f32 %v1357, %v1469
  %v1582 = vsub.f32 %v1358, %v1470
  %v1583 = vmax.f32 %v1471, 0.0
  %v1584 = vmax.f32 %v1472, 0.0
  %v1585 = vmax.f32 %v1473, 0.0
  %v1586 = vmax.f32 %v1474, 0.0
  %v1587 = vmax.f32 %v1475, 0.0
  %v1588 = vmax.f32 %v1476, 0.0
  %v1589 = vmax.f32 %v1477, 0.0
  %v1590 = vmax.f32 %v1478, 0.0
  %v1591 = vmax.f32 %v1479, 0.0
  %v1592 = vmax.f32 %v1480, 0.0
  %v1593 = vmax.f32 %v1481, 0.0
  %v1594 = vmax.f32 %v1482, 0.0
  %v1595 = vmax.f32 %v1483, 0.0
  %v1596 = vmax.f32 %v1484, 0.0
  %v1597 = vmax.f32 %v1485, 0.0
  %v1598 = vmax.f32 %v1486, 0.0
  %v1599 = vmax.f32 %v1487, 0.0
  %v1600 = vmax.f32 %v1488, 0.0
  %v1601 = vmax.f32 %v1489, 0.0
  %v1602 = vmax.f32 %v1490, 0.0
  %v1603 = vmax.f32 %v1491, 0.0
  %v1604 = vmax.f32 %v1492, 0.0
  %v1605 = vmax.f32 %v1493, 0.0
  %v1606 = vmax.f32 %v1494, 0.0
  %v1607 = vmax.f32 %v1495, 0.0
  %v1608 = vmax.f32 %v1496, 0.0
  %v1609 = vmax.f32 %v1497, 0.0
  %v1610 = vmax.f32 %v1498, 0.0
  %v1611 = vmax.f32 %v1499, 0.0
  %v1612 = vmax.f32 %v1500, 0.0
  %v1613 = vmax.f32 %v1501, 0.0
  %v1614 = vmax.f32 %v1502, 0.0
  %v1615 = vmax.f32 %v1503, 0.0
  %v1616 = vmax.f32 %v1504, 0.0
  %v1617 = vmax.f32 %v1505, 0.0
  %v1618 = vmax.f32 %v1506, 0.0
  %v1619 = vmax.f32 %v1507, 0.0
  %v1620 = vmax.f32 %v1508, 0.0
  %v1621 = vmax.f32 %v1509, 0.0
  %v1622 = vmax.f32 %v1510, 0.0
  %v1623 = vmax.f32 %v1511, 0.0
  %v1624 = vmax.f32 %v1512, 0.0
  %v1625 = vmax.f32 %v1513, 0.0
  %v1626 = vmax.f32 %v1514, 0.0
  %v1627 = vmax.f32 %v1515, 0.0
  %v1628 = vmax.f32 %v1516, 0.0
  %v1629 = vmax.f32 %v1517, 0.0
  %v1630 = vmax.f32 %v1518, 0.0
  %v1631 = vmax.f32 %v1519, 0.0
  %v1632 = vmax.f32 %v1520, 0.0
  %v1633 = vmax.f32 %v1521, 0.0
  %v1634 = vmax.f32 %v1522, 0.0
  %v1635 = vmax.f32 %v1523, 0.0
  %v1636 = vmax.f32 %v1524, 0.0
  %v1637 = vmax.f32 %v1525, 0.0
  %v1638 = vmax.f32 %v1526, 0.0
  %v1639 = vmax.f32 %v1527, 0.0
  %v1640 = vmax.f32 %v1528, 0.0
  %v1641 = vmax.f32 %v1529, 0.0
  %v1642 = vmax.f32 %v1530, 0.0
  %v1643 = vmax.f32 %v1531, 0.0
  %v1644 = vmax.f32 %v1532, 0.0
  %v1645 = vmax.f32 %v1533, 0.0
  %v1646 = vmax.f32 %v1534, 0.0
  %v1647 = vmax.f32 %v1535, 0.0
  %v1648 = vmax.f32 %v1536, 0.0
  %v1649 = vmax.f32 %v1537, 0.0
  %v1650 = vmax.f32 %v1538, 0.0
  %v1651 = vmax.f32 %v1539, 0.0
  %v1652 = vmax.f32 %v1540, 0.0
  %v1653 = vmax.f32 %v1541, 0.0
  %v1654 = vmax.f32 %v1542, 0.0
  %v1655 = vmax.f32 %v1543, 0.0
  %v1656 = vmax.f32 %v1544, 0.0
  %v1657 = vmax.f32 %v1545, 0.0
  %v1658 = vmax.f32 %v1546, 0.0
  %v1659 = vmax.f32 %v1547, 0.0
  %v1660 = vmax.f32 %v1548, 0.0
  %v1661 = vmax.f32 %v1549, 0.0
  %v1662 = vmax.f32 %v1550, 0.0
  %v1663 = vmax.f32 %v1551, 0.0
  %v1664 = vmax.f32 %v1552, 0.0
  %v1665 = vmax.f32 %v1553, 0.0
  %v1666 = vmax.f32 %v1554, 0.0
  %v1667 = vmax.f32 %v1555, 0.0
  %v1668 = vmax.f32 %v1556, 0.0
  %v1669 = vmax.f32 %v1557, 0.0
  %v1670 = vmax.f32 %v1558, 0.0
  %v1671 = vmax.f32 %v1559, 0.0
  %v1672 = vmax.f32 %v1560, 0.0
  %v1673 = vmax.f32 %v1561, 0.0
  %v1674 = vmax.f32 %v1562, 0.0
  %v1675 = vmax.f32 %v1563, 0.0
  %v1676 = vmax.f32 %v1564, 0.0
  %v1677 = vmax.f32 %v1565, 0.0
  %v1678 = vmax.f32 %v1566, 0.0
  %v1679 = vmax.f32 %v1567, 0.0
  %v1680 = vmax.f32 %v1568, 0.0
  %v1681 = vmax.f32 %v1569, 0.0
  %v1682 = vmax.f32 %v1570, 0.0
  %v1683 = vmax.f32 %v1571, 0.0
  %v1684 = vmax.f32 %v1572, 0.0
  %v1685 = vmax.f32 %v1573, 0.0
  %v1686 = vmax.f32 %v1574, 0.0
  %v1687 = vmax.f32 %v1575, 0.0
  %v1688 = vmax.f32 %v1576, 0.0
  %v1689 = vmax.f32 %v1577, 0.0
  %v1690 = vmax.f32 %v1578, 0.0
  %v1691 = vmax.f32 %v1579, 0.0
  %v1692 = vmax.f32 %v1580, 0.0
  %v1693 = vmax.f32 %v1581, 0.0
  %v1694 = vmax.f32 %v1582, 0.0
  %v1695 = vadd.f32 %v1583, 1e-05
  %v1696 = vadd.f32 %v1584, 1e-05
  %v1697 = vadd.f32 %v1585, 1e-05
  %v1698 = vadd.f32 %v1586, 1e-05
  %v1699 = vadd.f32 %v1587, 1e-05
  %v1700 = vadd.f32 %v1588, 1e-05
  %v1701 = vadd.f32 %v1589, 1e-05
  %v1702 = vadd.f32 %v1590, 1e-05
  %v1703 = vadd.f32 %v1591, 1e-05
  %v1704 = vadd.f32 %v1592, 1e-05
  %v1705 = vadd.f32 %v1593, 1e-05
  %v1706 = vadd.f32 %v1594, 1e-05
  %v1707 = vadd.f32 %v1595, 1e-05
  %v1708 = vadd.f32 %v1596, 1e-05
  %v1709 = vadd.f32 %v1597, 1e-05
  %v1710 = vadd.f32 %v1598, 1e-05
  %v1711 = vadd.f32 %v1599, 1e-05
  %v1712 = vadd.f32 %v1600, 1e-05
  %v1713 = vadd.f32 %v1601, 1e-05
  %v1714 = vadd.f32 %v1602, 1e-05
  %v1715 = vadd.f32 %v1603, 1e-05
  %v1716 = vadd.f32 %v1604, 1e-05
  %v1717 = vadd.f32 %v1605, 1e-05
  %v1718 = vadd.f32 %v1606, 1e-05
  %v1719 = vadd.f32 %v1607, 1e-05
  %v1720 = vadd.f32 %v1608, 1e-05
  %v1721 = vadd.f32 %v1609, 1e-05
  %v1722 = vadd.f32 %v1610, 1e-05
  %v1723 = vadd.f32 %v1611, 1e-05
  %v1724 = vadd.f32 %v1612, 1e-05
  %v1725 = vadd.f32 %v1613, 1e-05
  %v1726 = vadd.f32 %v1614, 1e-05
  %v1727 = vadd.f32 %v1615, 1e-05
  %v1728 = vadd.f32 %v1616, 1e-05
  %v1729 = vadd.f32 %v1617, 1e-05
  %v1730 = vadd.f32 %v1618, 1e-05
  %v1731 = vadd.f32 %v1619, 1e-05
  %v1732 = vadd.f32 %v1620, 1e-05
  %v1733 = vadd.f32 %v1621, 1e-05
  %v1734 = vadd.f32 %v1622, 1e-05
  %v1735 = vadd.f32 %v1623, 1e-05
  %v1736 = vadd.f32 %v1624, 1e-05
  %v1737 = vadd.f32 %v1625, 1e-05
  %v1738 = vadd.f32 %v1626, 1e-05
  %v1739 = vadd.f32 %v1627, 1e-05
  %v1740 = vadd.f32 %v1628, 1e-05
  %v1741 = vadd.f32 %v1629, 1e-05
  %v1742 = vadd.f32 %v1630, 1e-05
  %v1743 = vadd.f32 %v1631, 1e-05
  %v1744 = vadd.f32 %v1632, 1e-05
  %v1745 = vadd.f32 %v1633, 1e-05
  %v1746 = vadd.f32 %v1634, 1e-05
  %v1747 = vadd.f32 %v1635, 1e-05
  %v1748 = vadd.f32 %v1636, 1e-05
  %v1749 = vadd.f32 %v1637, 1e-05
  %v1750 = vadd.f32 %v1638, 1e-05
  %v1751 = vadd.f32 %v1639, 1e-05
  %v1752 = vadd.f32 %v1640, 1e-05
  %v1753 = vadd.f32 %v1641, 1e-05
  %v1754 = vadd.f32 %v1642, 1e-05
  %v1755 = vadd.f32 %v1643, 1e-05
  %v1756 = vadd.f32 %v1644, 1e-05
  %v1757 = vadd.f32 %v1645, 1e-05
  %v1758 = vadd.f32 %v1646, 1e-05
  %v1759 = vadd.f32 %v1647, 1e-05
  %v1760 = vadd.f32 %v1648, 1e-05
  %v1761 = vadd.f32 %v1649, 1e-05
  %v1762 = vadd.f32 %v1650, 1e-05
  %v1763 = vadd.f32 %v1651, 1e-05
  %v1764 = vadd.f32 %v1652, 1e-05
  %v1765 = vadd.f32 %v1653, 1e-05
  %v1766 = vadd.f32 %v1654, 1e-05
  %v1767 = vadd.f32 %v1655, 1e-05
  %v1768 = vadd.f32 %v1656, 1e-05
  %v1769 = vadd.f32 %v1657, 1e-05
  %v1770 = vadd.f32 %v1658, 1e-05
  %v1771 = vadd.f32 %v1659, 1e-05
  %v1772 = vadd.f32 %v1660, 1e-05
  %v1773 = vadd.f32 %v1661, 1e-05
  %v1774 = vadd.f32 %v1662, 1e-05
  %v1775 = vadd.f32 %v1663, 1e-05
  %v1776 = vadd.f32 %v1664, 1e-05
  %v1777 = vadd.f32 %v1665, 1e-05
  %v1778 = vadd.f32 %v1666, 1e-05
  %v1779 = vadd.f32 %v1667, 1e-05
  %v1780 = vadd.f32 %v1668, 1e-05
  %v1781 = vadd.f32 %v1669, 1e-05
  %v1782 = vadd.f32 %v1670, 1e-05
  %v1783 = vadd.f32 %v1671, 1e-05
  %v1784 = vadd.f32 %v1672, 1e-05
  %v1785 = vadd.f32 %v1673, 1e-05
  %v1786 = vadd.f32 %v1674, 1e-05
  %v1787 = vadd.f32 %v1675, 1e-05
  %v1788 = vadd.f32 %v1676, 1e-05
  %v1789 = vadd.f32 %v1677, 1e-05
  %v1790 = vadd.f32 %v1678, 1e-05
  %v1791 = vadd.f32 %v1679, 1e-05
  %v1792 = vadd.f32 %v1680, 1e-05
  %v1793 = vadd.f32 %v1681, 1e-05
  %v1794 = vadd.f32 %v1682, 1e-05
  %v1795 = vadd.f32 %v1683, 1e-05
  %v1796 = vadd.f32 %v1684, 1e-05
  %v1797 = vadd.f32 %v1685, 1e-05
  %v1798 = vadd.f32 %v1686, 1e-05
  %v1799 = vadd.f32 %v1687, 1e-05
  %v1800 = vadd.f32 %v1688, 1e-05
  %v1801 = vadd.f32 %v1689, 1e-05
  %v1802 = vadd.f32 %v1690, 1e-05
  %v1803 = vadd.f32 %v1691, 1e-05
  %v1804 = vadd.f32 %v1692, 1e-05
  %v1805 = vadd.f32 %v1693, 1e-05
  %v1806 = vadd.f32 %v1694, 1e-05
  %v1807 = vrsqrt.pop %v1695
  %v1808 = vrsqrt.pop %v1696
  %v1809 = vrsqrt.pop %v1697
  %v1810 = vrsqrt.pop %v1698
  %v1811 = vrsqrt.pop %v1699
  %v1812 = vrsqrt.pop %v1700
  %v1813 = vrsqrt.pop %v1701
  %v1814 = vrsqrt.pop %v1702
  %v1815 = vrsqrt.pop %v1703
  %v1816 = vrsqrt.pop %v1704
  %v1817 = vrsqrt.pop %v1705
  %v1818 = vrsqrt.pop %v1706
  %v1819 = vrsqrt.pop %v1707
  %v1820 = vrsqrt.pop %v1708
  %v1821 = vrsqrt.pop %v1709
  %v1822 = vrsqrt.pop %v1710
  %v1823 = vrsqrt.pop %v1711
  %v1824 = vrsqrt.pop %v1712
  %v1825 = vrsqrt.pop %v1713
  %v1826 = vrsqrt.pop %v1714
  %v1827 = vrsqrt.pop %v1715
  %v1828 = vrsqrt.pop %v1716
  %v1829 = vrsqrt.pop %v1717
  %v1830 = vrsqrt.pop %v1718
  %v1831 = vrsqrt.pop %v1719
  %v1832 = vrsqrt.pop %v1720
  %v1833 = vrsqrt.pop %v1721
  %v1834 = vrsqrt.pop %v1722
  %v1835 = vrsqrt.pop %v1723
  %v1836 = vrsqrt.pop %v1724
  %v1837 = vrsqrt.pop %v1725
  %v1838 = vrsqrt.pop %v1726
  %v1839 = vrsqrt.pop %v1727
  %v1840 = vrsqrt.pop %v1728
  %v1841 = vrsqrt.pop %v1729
  %v1842 = vrsqrt.pop %v1730
  %v1843 = vrsqrt.pop %v1731
  %v1844 = vrsqrt.pop %v1732
  %v1845 = vrsqrt.pop %v1733
  %v1846 = vrsqrt.pop %v1734
  %v1847 = vrsqrt.pop %v1735
  %v1848 = vrsqrt.pop %v1736
  %v1849 = vrsqrt.pop %v1737
  %v1850 = vrsqrt.pop %v1738
  %v1851 = vrsqrt.pop %v1739
  %v1852 = vrsqrt.pop %v1740
  %v1853 = vrsqrt.pop %v1741
  %v1854 = vrsqrt.pop %v1742
  %v1855 = vrsqrt.pop %v1743
  %v1856 = vrsqrt.pop %v1744
  %v1857 = vrsqrt.pop %v1745
  %v1858 = vrsqrt.pop %v1746
  %v1859 = vrsqrt.pop %v1747
  %v1860 = vrsqrt.pop %v1748
  %v1861 = vrsqrt.pop %v1749
  %v1862 = vrsqrt.pop %v1750
  %v1863 = vrsqrt.pop %v1751
  %v1864 = vrsqrt.pop %v1752
  %v1865 = vrsqrt.pop %v1753
  %v1866 = vrsqrt.pop %v1754
  %v1867 = vrsqrt.pop %v1755
  %v1868 = vrsqrt.pop %v1756
  %v1869 = vrsqrt.pop %v1757
  %v1870 = vrsqrt.pop %v1758
  %v1871 = vrsqrt.pop %v1759
  %v1872 = vrsqrt.pop %v1760
  %v1873 = vrsqrt.pop %v1761
  %v1874 = vrsqrt.pop %v1762
  %v1875 = vrsqrt.pop %v1763
  %v1876 = vrsqrt.pop %v1764
  %v1877 = vrsqrt.pop %v1765
  %v1878 = vrsqrt.pop %v1766
  %v1879 = vrsqrt.pop %v1767
  %v1880 = vrsqrt.pop %v1768
  %v1881 = vrsqrt.pop %v1769
  %v1882 = vrsqrt.pop %v1770
  %v1883 = vrsqrt.pop %v1771
  %v1884 = vrsqrt.pop %v1772
  %v1885 = vrsqrt.pop %v1773
  %v1886 = vrsqrt.pop %v1774
  %v1887 = vrsqrt.pop %v1775
  %v1888 = vrsqrt.pop %v1776
  %v1889 = vrsqrt.pop %v1777
  %v1890 = vrsqrt.pop %v1778
  %v1891 = vrsqrt.pop %v1779
  %v1892 = vrsqrt.pop %v1780
  %v1893 = vrsqrt.pop %v1781
  %v1894 = vrsqrt.pop %v1782
  %v1895 = vrsqrt.pop %v1783
  %v1896 = vrsqrt.pop %v1784
  %v1897 = vrsqrt.pop %v1785
  %v1898 = vrsqrt.pop %v1786
  %v1899 = vrsqrt.pop %v1787
  %v1900 = vrsqrt.pop %v1788
  %v1901 = vrsqrt.pop %v1789
  %v1902 = vrsqrt.pop %v1790
  %v1903 = vrsqrt.pop %v1791
  %v1904 = vrsqrt.pop %v1792
  %v1905 = vrsqrt.pop %v1793
  %v1906 = vrsqrt.pop %v1794
  %v1907 = vrsqrt.pop %v1795
  %v1908 = vrsqrt.pop %v1796
  %v1909 = vrsqrt.pop %v1797
  %v1910 = vrsqrt.pop %v1798
  %v1911 = vrsqrt.pop %v1799
  %v1912 = vrsqrt.pop %v1800
  %v1913 = vrsqrt.pop %v1801
  %v1914 = vrsqrt.pop %v1802
  %v1915 = vrsqrt.pop %v1803
  %v1916 = vrsqrt.pop %v1804
  %v1917 = vrsqrt.pop %v1805
  %v1918 = vrsqrt.pop %v1806
  %v1919 = vld [vmem:[%s1] sm:$0xff]
  %v1920 = vld [vmem:[%s1 + $0x8] sm:$0xff]
  %v1921 = vld [vmem:[%s1 + $0x10] sm:$0xff]
  %v1922 = vld [vmem:[%s1 + $0x18] sm:$0xff]
  %v1923 = vld [vmem:[%s1 + $0x20] sm:$0xff]
  %v1924 = vld [vmem:[%s1 + $0x28] sm:$0xff]
  %v1925 = vld [vmem:[%s1 + $0x30] sm:$0xff]
  %v1926 = vld [vmem:[%s1 + $0x38] sm:$0xff]
  %v1927 = vld [vmem:[%s1 + $0x40] sm:$0xff]
  %v1928 = vld [vmem:[%s1 + $0x48] sm:$0xff]
  %v1929 = vld [vmem:[%s1 + $0x50] sm:$0xff]
  %v1930 = vld [vmem:[%s1 + $0x58] sm:$0xff]
  %v1931 = vld [vmem:[%s1 + $0x60] sm:$0xff]
  %v1932 = vld [vmem:[%s1 + $0x68] sm:$0xff]
  %v1933 = vld [vmem:[%s1 + $0x70] sm:$0xff]
  %v1934 = vld [vmem:[%s1 + $0x78] sm:$0xff]
  %v1935 = vld [vmem:[%s1 + $0x80] sm:$0xff]
  %v1936 = vld [vmem:[%s1 + $0x88] sm:$0xff]
  %v1937 = vld [vmem:[%s1 + $0x90] sm:$0xff]
  %v1938 = vld [vmem:[%s1 + $0x98] sm:$0xff]
  %v1939 = vld [vmem:[%s1 + $0xa0] sm:$0xff]
  %v1940 = vld [vmem:[%s1 + $0xa8] sm:$0xff]
  %v1941 = vld [vmem:[%s1 + $0xb0] sm:$0xff]
  %v1942 = vld [vmem:[%s1 + $0xb8] sm:$0xff]
  %v1943 = vld [vmem:[%s1 + $0xc0] sm:$0xff]
  %v1944 = vld [vmem:[%s1 + $0xc8] sm:$0xff]
  %v1945 = vld [vmem:[%s1 + $0xd0] sm:$0xff]
  %v1946 = vld [vmem:[%s1 + $0xd8] sm:$0xff]
  %v1947 = vld [vmem:[%s1 + $0xe0] sm:$0xff]
  %v1948 = vld [vmem:[%s1 + $0xe8] sm:$0xff]
  %v1949 = vld [vmem:[%s1 + $0xf0] sm:$0xff]
  %v1950 = vld [vmem:[%s1 + $0xf8] sm:$0xff]
  %v1951 = vld [vmem:[%s1 + $0x100] sm:$0xff]
  %v1952 = vld [vmem:[%s1 + $0x108] sm:$0xff]
  %v1953 = vld [vmem:[%s1 + $0x110] sm:$0xff]
  %v1954 = vld [vmem:[%s1 + $0x118] sm:$0xff]
  %v1955 = vld [vmem:[%s1 + $0x120] sm:$0xff]
  %v1956 = vld [vmem:[%s1 + $0x128] sm:$0xff]
  %v1957 = vld [vmem:[%s1 + $0x130] sm:$0xff]
  %v1958 = vld [vmem:[%s1 + $0x138] sm:$0xff]
  %v1959 = vld [vmem:[%s1 + $0x140] sm:$0xff]
  %v1960 = vld [vmem:[%s1 + $0x148] sm:$0xff]
  %v1961 = vld [vmem:[%s1 + $0x150] sm:$0xff]
  %v1962 = vld [vmem:[%s1 + $0x158] sm:$0xff]
  %v1963 = vld [vmem:[%s1 + $0x160] sm:$0xff]
  %v1964 = vld [vmem:[%s1 + $0x168] sm:$0xff]
  %v1965 = vld [vmem:[%s1 + $0x170] sm:$0xff]
  %v1966 = vld [vmem:[%s1 + $0x178] sm:$0xff]
  %v1967 = vld [vmem:[%s1 + $0x180] sm:$0xff]
  %v1968 = vld [vmem:[%s1 + $0x188] sm:$0xff]
  %v1969 = vld [vmem:[%s1 + $0x190] sm:$0xff]
  %v1970 = vld [vmem:[%s1 + $0x198] sm:$0xff]
  %v1971 = vld [vmem:[%s1 + $0x1a0] sm:$0xff]
  %v1972 = vld [vmem:[%s1 + $0x1a8] sm:$0xff]
  %v1973 = vld [vmem:[%s1 + $0x1b0] sm:$0xff]
  %v1974 = vld [vmem:[%s1 + $0x1b8] sm:$0xff]
  %v1975 = vld [vmem:[%s1 + $0x1c0] sm:$0xff]
  %v1976 = vld [vmem:[%s1 + $0x1c8] sm:$0xff]
  %v1977 = vld [vmem:[%s1 + $0x1d0] sm:$0xff]
  %v1978 = vld [vmem:[%s1 + $0x1d8] sm:$0xff]
  %v1979 = vld [vmem:[%s1 + $0x1e0] sm:$0xff]
  %v1980 = vld [vmem:[%s1 + $0x1e8] sm:$0xff]
  %v1981 = vld [vmem:[%s1 + $0x1f0] sm:$0xff]
  %v1982 = vld [vmem:[%s1 + $0x1f8] sm:$0xff]
  %v1983 = vld [vmem:[%s1 + $0x200] sm:$0xff]
  %v1984 = vld [vmem:[%s1 + $0x208] sm:$0xff]
  %v1985 = vld [vmem:[%s1 + $0x210] sm:$0xff]
  %v1986 = vld [vmem:[%s1 + $0x218] sm:$0xff]
  %v1987 = vld [vmem:[%s1 + $0x220] sm:$0xff]
  %v1988 = vld [vmem:[%s1 + $0x228] sm:$0xff]
  %v1989 = vld [vmem:[%s1 + $0x230] sm:$0xff]
  %v1990 = vld [vmem:[%s1 + $0x238] sm:$0xff]
  %v1991 = vld [vmem:[%s1 + $0x240] sm:$0xff]
  %v1992 = vld [vmem:[%s1 + $0x248] sm:$0xff]
  %v1993 = vld [vmem:[%s1 + $0x250] sm:$0xff]
  %v1994 = vld [vmem:[%s1 + $0x258] sm:$0xff]
  %v1995 = vld [vmem:[%s1 + $0x260] sm:$0xff]
  %v1996 = vld [vmem:[%s1 + $0x268] sm:$0xff]
  %v1997 = vld [vmem:[%s1 + $0x270] sm:$0xff]
  %v1998 = vld [vmem:[%s1 + $0x278] sm:$0xff]
  %v1999 = vld [vmem:[%s1 + $0x280] sm:$0xff]
  %v2000 = vld [vmem:[%s1 + $0x288] sm:$0xff]
  %v2001 = vld [vmem:[%s1 + $0x290] sm:$0xff]
  %v2002 = vld [vmem:[%s1 + $0x298] sm:$0xff]
  %v2003 = vld [vmem:[%s1 + $0x2a0] sm:$0xff]
  %v2004 = vld [vmem:[%s1 + $0x2a8] sm:$0xff]
  %v2005 = vld [vmem:[%s1 + $0x2b0] sm:$0xff]
  %v2006 = vld [vmem:[%s1 + $0x2b8] sm:$0xff]
  %v2007 = vld [vmem:[%s1 + $0x2c0] sm:$0xff]
  %v2008 = vld [vmem:[%s1 + $0x2c8] sm:$0xff]
  %v2009 = vld [vmem:[%s1 + $0x2d0] sm:$0xff]
  %v2010 = vld [vmem:[%s1 + $0x2d8] sm:$0xff]
  %v2011 = vld [vmem:[%s1 + $0x2e0] sm:$0xff]
  %v2012 = vld [vmem:[%s1 + $0x2e8] sm:$0xff]
  %v2013 = vld [vmem:[%s1 + $0x2f0] sm:$0xff]
  %v2014 = vld [vmem:[%s1 + $0x2f8] sm:$0xff]
  %v2015 = vld [vmem:[%s1 + $0x300] sm:$0xff]
  %v2016 = vld [vmem:[%s1 + $0x308] sm:$0xff]
  %v2017 = vld [vmem:[%s1 + $0x310] sm:$0xff]
  %v2018 = vld [vmem:[%s1 + $0x318] sm:$0xff]
  %v2019 = vld [vmem:[%s1 + $0x320] sm:$0xff]
  %v2020 = vld [vmem:[%s1 + $0x328] sm:$0xff]
  %v2021 = vld [vmem:[%s1 + $0x330] sm:$0xff]
  %v2022 = vld [vmem:[%s1 + $0x338] sm:$0xff]
  %v2023 = vld [vmem:[%s1 + $0x340] sm:$0xff]
  %v2024 = vld [vmem:[%s1 + $0x348] sm:$0xff]
  %v2025 = vld [vmem:[%s1 + $0x350] sm:$0xff]
  %v2026 = vld [vmem:[%s1 + $0x358] sm:$0xff]
  %v2027 = vld [vmem:[%s1 + $0x360] sm:$0xff]
  %v2028 = vld [vmem:[%s1 + $0x368] sm:$0xff]
  %v2029 = vld [vmem:[%s1 + $0x370] sm:$0xff]
  %v2030 = vld [vmem:[%s1 + $0x378] sm:$0xff]
  %v2031 = vmul.f32 %v1919, %v1807
  %v2032 = vmul.f32 %v1920, %v1808
  %v2033 = vmul.f32 %v1921, %v1809
  %v2034 = vmul.f32 %v1922, %v1810
  %v2035 = vmul.f32 %v1923, %v1811
  %v2036 = vmul.f32 %v1924, %v1812
  %v2037 = vmul.f32 %v1925, %v1813
  %v2038 = vmul.f32 %v1926, %v1814
  %v2039 = vmul.f32 %v1927, %v1815
  %v2040 = vmul.f32 %v1928, %v1816
  %v2041 = vmul.f32 %v1929, %v1817
  %v2042 = vmul.f32 %v1930, %v1818
  %v2043 = vmul.f32 %v1931, %v1819
  %v2044 = vmul.f32 %v1932, %v1820
  %v2045 = vmul.f32 %v1933, %v1821
  %v2046 = vmul.f32 %v1934, %v1822
  %v2047 = vmul.f32 %v1935, %v1823
  %v2048 = vmul.f32 %v1936, %v1824
  %v2049 = vmul.f32 %v1937, %v1825
  %v2050 = vmul.f32 %v1938, %v1826
  %v2051 = vmul.f32 %v1939, %v1827
  %v2052 = vmul.f32 %v1940, %v1828
  %v2053 = vmul.f32 %v1941, %v1829
  %v2054 = vmul.f32 %v1942, %v1830
  %v2055 = vmul.f32 %v1943, %v1831
  %v2056 = vmul.f32 %v1944, %v1832
  %v2057 = vmul.f32 %v1945, %v1833
  %v2058 = vmul.f32 %v1946, %v1834
  %v2059 = vmul.f32 %v1947, %v1835
  %v2060 = vmul.f32 %v1948, %v1836
  %v2061 = vmul.f32 %v1949, %v1837
  %v2062 = vmul.f32 %v1950, %v1838
  %v2063 = vmul.f32 %v1951, %v1839
  %v2064 = vmul.f32 %v1952, %v1840
  %v2065 = vmul.f32 %v1953, %v1841
  %v2066 = vmul.f32 %v1954, %v1842
  %v2067 = vmul.f32 %v1955, %v1843
  %v2068 = vmul.f32 %v1956, %v1844
  %v2069 = vmul.f32 %v1957, %v1845
  %v2070 = vmul.f32 %v1958, %v1846
  %v2071 = vmul.f32 %v1959, %v1847
  %v2072 = vmul.f32 %v1960, %v1848
  %v2073 = vmul.f32 %v1961, %v1849
  %v2074 = vmul.f32 %v1962, %v1850
  %v2075 = vmul.f32 %v1963, %v1851
  %v2076 = vmul.f32 %v1964, %v1852
  %v2077 = vmul.f32 %v1965, %v1853
  %v2078 = vmul.f32 %v1966, %v1854
  %v2079 = vmul.f32 %v1967, %v1855
  %v2080 = vmul.f32 %v1968, %v1856
  %v2081 = vmul.f32 %v1969, %v1857
  %v2082 = vmul.f32 %v1970, %v1858
  %v2083 = vmul.f32 %v1971, %v1859
  %v2084 = vmul.f32 %v1972, %v1860
  %v2085 = vmul.f32 %v1973, %v1861
  %v2086 = vmul.f32 %v1974, %v1862
  %v2087 = vmul.f32 %v1975, %v1863
  %v2088 = vmul.f32 %v1976, %v1864
  %v2089 = vmul.f32 %v1977, %v1865
  %v2090 = vmul.f32 %v1978, %v1866
  %v2091 = vmul.f32 %v1979, %v1867
  %v2092 = vmul.f32 %v1980, %v1868
  %v2093 = vmul.f32 %v1981, %v1869
  %v2094 = vmul.f32 %v1982, %v1870
  %v2095 = vmul.f32 %v1983, %v1871
  %v2096 = vmul.f32 %v1984, %v1872
  %v2097 = vmul.f32 %v1985, %v1873
  %v2098 = vmul.f32 %v1986, %v1874
  %v2099 = vmul.f32 %v1987, %v1875
  %v2100 = vmul.f32 %v1988, %v1876
  %v2101 = vmul.f32 %v1989, %v1877
  %v2102 = vmul.f32 %v1990, %v1878
  %v2103 = vmul.f32 %v1991, %v1879
  %v2104 = vmul.f32 %v1992, %v1880
  %v2105 = vmul.f32 %v1993, %v1881
  %v2106 = vmul.f32 %v1994, %v1882
  %v2107 = vmul.f32 %v1995, %v1883
  %v2108 = vmul.f32 %v1996, %v1884
  %v2109 = vmul.f32 %v1997, %v1885
  %v2110 = vmul.f32 %v1998, %v1886
  %v2111 = vmul.f32 %v1999, %v1887
  %v2112 = vmul.f32 %v2000, %v1888
  %v2113 = vmul.f32 %v2001, %v1889
  %v2114 = vmul.f32 %v2002, %v1890
  %v2115 = vmul.f32 %v2003, %v1891
  %v2116 = vmul.f32 %v2004, %v1892
  %v2117 = vmul.f32 %v2005, %v1893
  %v2118 = vmul.f32 %v2006, %v1894
  %v2119 = vmul.f32 %v2007, %v1895
  %v2120 = vmul.f32 %v2008, %v1896
  %v2121 = vmul.f32 %v2009, %v1897
  %v2122 = vmul.f32 %v2010, %v1898
  %v2123 = vmul.f32 %v2011, %v1899
  %v2124 = vmul.f32 %v2012, %v1900
  %v2125 = vmul.f32 %v2013, %v1901
  %v2126 = vmul.f32 %v2014, %v1902
  %v2127 = vmul.f32 %v2015, %v1903
  %v2128 = vmul.f32 %v2016, %v1904
  %v2129 = vmul.f32 %v2017, %v1905
  %v2130 = vmul.f32 %v2018, %v1906
  %v2131 = vmul.f32 %v2019, %v1907
  %v2132 = vmul.f32 %v2020, %v1908
  %v2133 = vmul.f32 %v2021, %v1909
  %v2134 = vmul.f32 %v2022, %v1910
  %v2135 = vmul.f32 %v2023, %v1911
  %v2136 = vmul.f32 %v2024, %v1912
  %v2137 = vmul.f32 %v2025, %v1913
  %v2138 = vmul.f32 %v2026, %v1914
  %v2139 = vmul.f32 %v2027, %v1915
  %v2140 = vmul.f32 %v2028, %v1916
  %v2141 = vmul.f32 %v2029, %v1917
  %v2142 = vmul.f32 %v2030, %v1918
  %v2143 = vld [vmem:[%s2] sm:$0xff]
  %v2144 = vld [vmem:[%s2 + $0x8] sm:$0xff]
  %v2145 = vld [vmem:[%s2 + $0x10] sm:$0xff]
  %v2146 = vld [vmem:[%s2 + $0x18] sm:$0xff]
  %v2147 = vld [vmem:[%s2 + $0x20] sm:$0xff]
  %v2148 = vld [vmem:[%s2 + $0x28] sm:$0xff]
  %v2149 = vld [vmem:[%s2 + $0x30] sm:$0xff]
  %v2150 = vld [vmem:[%s2 + $0x38] sm:$0xff]
  %v2151 = vld [vmem:[%s2 + $0x40] sm:$0xff]
  %v2152 = vld [vmem:[%s2 + $0x48] sm:$0xff]
  %v2153 = vld [vmem:[%s2 + $0x50] sm:$0xff]
  %v2154 = vld [vmem:[%s2 + $0x58] sm:$0xff]
  %v2155 = vld [vmem:[%s2 + $0x60] sm:$0xff]
  %v2156 = vld [vmem:[%s2 + $0x68] sm:$0xff]
  %v2157 = vld [vmem:[%s2 + $0x70] sm:$0xff]
  %v2158 = vld [vmem:[%s2 + $0x78] sm:$0xff]
  %v2159 = vld [vmem:[%s2 + $0x80] sm:$0xff]
  %v2160 = vld [vmem:[%s2 + $0x88] sm:$0xff]
  %v2161 = vld [vmem:[%s2 + $0x90] sm:$0xff]
  %v2162 = vld [vmem:[%s2 + $0x98] sm:$0xff]
  %v2163 = vld [vmem:[%s2 + $0xa0] sm:$0xff]
  %v2164 = vld [vmem:[%s2 + $0xa8] sm:$0xff]
  %v2165 = vld [vmem:[%s2 + $0xb0] sm:$0xff]
  %v2166 = vld [vmem:[%s2 + $0xb8] sm:$0xff]
  %v2167 = vld [vmem:[%s2 + $0xc0] sm:$0xff]
  %v2168 = vld [vmem:[%s2 + $0xc8] sm:$0xff]
  %v2169 = vld [vmem:[%s2 + $0xd0] sm:$0xff]
  %v2170 = vld [vmem:[%s2 + $0xd8] sm:$0xff]
  %v2171 = vld [vmem:[%s2 + $0xe0] sm:$0xff]
  %v2172 = vld [vmem:[%s2 + $0xe8] sm:$0xff]
  %v2173 = vld [vmem:[%s2 + $0xf0] sm:$0xff]
  %v2174 = vld [vmem:[%s2 + $0xf8] sm:$0xff]
  %v2175 = vld [vmem:[%s2 + $0x100] sm:$0xff]
  %v2176 = vld [vmem:[%s2 + $0x108] sm:$0xff]
  %v2177 = vld [vmem:[%s2 + $0x110] sm:$0xff]
  %v2178 = vld [vmem:[%s2 + $0x118] sm:$0xff]
  %v2179 = vld [vmem:[%s2 + $0x120] sm:$0xff]
  %v2180 = vld [vmem:[%s2 + $0x128] sm:$0xff]
  %v2181 = vld [vmem:[%s2 + $0x130] sm:$0xff]
  %v2182 = vld [vmem:[%s2 + $0x138] sm:$0xff]
  %v2183 = vld [vmem:[%s2 + $0x140] sm:$0xff]
  %v2184 = vld [vmem:[%s2 + $0x148] sm:$0xff]
  %v2185 = vld [vmem:[%s2 + $0x150] sm:$0xff]
  %v2186 = vld [vmem:[%s2 + $0x158] sm:$0xff]
  %v2187 = vld [vmem:[%s2 + $0x160] sm:$0xff]
  %v2188 = vld [vmem:[%s2 + $0x168] sm:$0xff]
  %v2189 = vld [vmem:[%s2 + $0x170] sm:$0xff]
  %v2190 = vld [vmem:[%s2 + $0x178] sm:$0xff]
  %v2191 = vld [vmem:[%s2 + $0x180] sm:$0xff]
  %v2192 = vld [vmem:[%s2 + $0x188] sm:$0xff]
  %v2193 = vld [vmem:[%s2 + $0x190] sm:$0xff]
  %v2194 = vld [vmem:[%s2 + $0x198] sm:$0xff]
  %v2195 = vld [vmem:[%s2 + $0x1a0] sm:$0xff]
  %v2196 = vld [vmem:[%s2 + $0x1a8] sm:$0xff]
  %v2197 = vld [vmem:[%s2 + $0x1b0] sm:$0xff]
  %v2198 = vld [vmem:[%s2 + $0x1b8] sm:$0xff]
  %v2199 = vld [vmem:[%s2 + $0x1c0] sm:$0xff]
  %v2200 = vld [vmem:[%s2 + $0x1c8] sm:$0xff]
  %v2201 = vld [vmem:[%s2 + $0x1d0] sm:$0xff]
  %v2202 = vld [vmem:[%s2 + $0x1d8] sm:$0xff]
  %v2203 = vld [vmem:[%s2 + $0x1e0] sm:$0xff]
  %v2204 = vld [vmem:[%s2 + $0x1e8] sm:$0xff]
  %v2205 = vld [vmem:[%s2 + $0x1f0] sm:$0xff]
  %v2206 = vld [vmem:[%s2 + $0x1f8] sm:$0xff]
  %v2207 = vld [vmem:[%s2 + $0x200] sm:$0xff]
  %v2208 = vld [vmem:[%s2 + $0x208] sm:$0xff]
  %v2209 = vld [vmem:[%s2 + $0x210] sm:$0xff]
  %v2210 = vld [vmem:[%s2 + $0x218] sm:$0xff]
  %v2211 = vld [vmem:[%s2 + $0x220] sm:$0xff]
  %v2212 = vld [vmem:[%s2 + $0x228] sm:$0xff]
  %v2213 = vld [vmem:[%s2 + $0x230] sm:$0xff]
  %v2214 = vld [vmem:[%s2 + $0x238] sm:$0xff]
  %v2215 = vld [vmem:[%s2 + $0x240] sm:$0xff]
  %v2216 = vld [vmem:[%s2 + $0x248] sm:$0xff]
  %v2217 = vld [vmem:[%s2 + $0x250] sm:$0xff]
  %v2218 = vld [vmem:[%s2 + $0x258] sm:$0xff]
  %v2219 = vld [vmem:[%s2 + $0x260] sm:$0xff]
  %v2220 = vld [vmem:[%s2 + $0x268] sm:$0xff]
  %v2221 = vld [vmem:[%s2 + $0x270] sm:$0xff]
  %v2222 = vld [vmem:[%s2 + $0x278] sm:$0xff]
  %v2223 = vld [vmem:[%s2 + $0x280] sm:$0xff]
  %v2224 = vld [vmem:[%s2 + $0x288] sm:$0xff]
  %v2225 = vld [vmem:[%s2 + $0x290] sm:$0xff]
  %v2226 = vld [vmem:[%s2 + $0x298] sm:$0xff]
  %v2227 = vld [vmem:[%s2 + $0x2a0] sm:$0xff]
  %v2228 = vld [vmem:[%s2 + $0x2a8] sm:$0xff]
  %v2229 = vld [vmem:[%s2 + $0x2b0] sm:$0xff]
  %v2230 = vld [vmem:[%s2 + $0x2b8] sm:$0xff]
  %v2231 = vld [vmem:[%s2 + $0x2c0] sm:$0xff]
  %v2232 = vld [vmem:[%s2 + $0x2c8] sm:$0xff]
  %v2233 = vld [vmem:[%s2 + $0x2d0] sm:$0xff]
  %v2234 = vld [vmem:[%s2 + $0x2d8] sm:$0xff]
  %v2235 = vld [vmem:[%s2 + $0x2e0] sm:$0xff]
  %v2236 = vld [vmem:[%s2 + $0x2e8] sm:$0xff]
  %v2237 = vld [vmem:[%s2 + $0x2f0] sm:$0xff]
  %v2238 = vld [vmem:[%s2 + $0x2f8] sm:$0xff]
  %v2239 = vld [vmem:[%s2 + $0x300] sm:$0xff]
  %v2240 = vld [vmem:[%s2 + $0x308] sm:$0xff]
  %v2241 = vld [vmem:[%s2 + $0x310] sm:$0xff]
  %v2242 = vld [vmem:[%s2 + $0x318] sm:$0xff]
  %v2243 = vld [vmem:[%s2 + $0x320] sm:$0xff]
  %v2244 = vld [vmem:[%s2 + $0x328] sm:$0xff]
  %v2245 = vld [vmem:[%s2 + $0x330] sm:$0xff]
  %v2246 = vld [vmem:[%s2 + $0x338] sm:$0xff]
  %v2247 = vld [vmem:[%s2 + $0x340] sm:$0xff]
  %v2248 = vld [vmem:[%s2 + $0x348] sm:$0xff]
  %v2249 = vld [vmem:[%s2 + $0x350] sm:$0xff]
  %v2250 = vld [vmem:[%s2 + $0x358] sm:$0xff]
  %v2251 = vld [vmem:[%s2 + $0x360] sm:$0xff]
  %v2252 = vld [vmem:[%s2 + $0x368] sm:$0xff]
  %v2253 = vld [vmem:[%s2 + $0x370] sm:$0xff]
  %v2254 = vld [vmem:[%s2 + $0x378] sm:$0xff]
  %v2255 = vmul.f32 %v1135, %v2031
  %v2256 = vmul.f32 %v1136, %v2032
  %v2257 = vmul.f32 %v1137, %v2033
  %v2258 = vmul.f32 %v1138, %v2034
  %v2259 = vmul.f32 %v1139, %v2035
  %v2260 = vmul.f32 %v1140, %v2036
  %v2261 = vmul.f32 %v1141, %v2037
  %v2262 = vmul.f32 %v1142, %v2038
  %v2263 = vmul.f32 %v1143, %v2039
  %v2264 = vmul.f32 %v1144, %v2040
  %v2265 = vmul.f32 %v1145, %v2041
  %v2266 = vmul.f32 %v1146, %v2042
  %v2267 = vmul.f32 %v1147, %v2043
  %v2268 = vmul.f32 %v1148, %v2044
  %v2269 = vmul.f32 %v1149, %v2045
  %v2270 = vmul.f32 %v1150, %v2046
  %v2271 = vmul.f32 %v1151, %v2047
  %v2272 = vmul.f32 %v1152, %v2048
  %v2273 = vmul.f32 %v1153, %v2049
  %v2274 = vmul.f32 %v1154, %v2050
  %v2275 = vmul.f32 %v1155, %v2051
  %v2276 = vmul.f32 %v1156, %v2052
  %v2277 = vmul.f32 %v1157, %v2053
  %v2278 = vmul.f32 %v1158, %v2054
  %v2279 = vmul.f32 %v1159, %v2055
  %v2280 = vmul.f32 %v1160, %v2056
  %v2281 = vmul.f32 %v1161, %v2057
  %v2282 = vmul.f32 %v1162, %v2058
  %v2283 = vmul.f32 %v1163, %v2059
  %v2284 = vmul.f32 %v1164, %v2060
  %v2285 = vmul.f32 %v1165, %v2061
  %v2286 = vmul.f32 %v1166, %v2062
  %v2287 = vmul.f32 %v1167, %v2063
  %v2288 = vmul.f32 %v1168, %v2064
  %v2289 = vmul.f32 %v1169, %v2065
  %v2290 = vmul.f32 %v1170, %v2066
  %v2291 = vmul.f32 %v1171, %v2067
  %v2292 = vmul.f32 %v1172, %v2068
  %v2293 = vmul.f32 %v1173, %v2069
  %v2294 = vmul.f32 %v1174, %v2070
  %v2295 = vmul.f32 %v1175, %v2071
  %v2296 = vmul.f32 %v1176, %v2072
  %v2297 = vmul.f32 %v1177, %v2073
  %v2298 = vmul.f32 %v1178, %v2074
  %v2299 = vmul.f32 %v1179, %v2075
  %v2300 = vmul.f32 %v1180, %v2076
  %v2301 = vmul.f32 %v1181, %v2077
  %v2302 = vmul.f32 %v1182, %v2078
  %v2303 = vmul.f32 %v1183, %v2079
  %v2304 = vmul.f32 %v1184, %v2080
  %v2305 = vmul.f32 %v1185, %v2081
  %v2306 = vmul.f32 %v1186, %v2082
  %v2307 = vmul.f32 %v1187, %v2083
  %v2308 = vmul.f32 %v1188, %v2084
  %v2309 = vmul.f32 %v1189, %v2085
  %v2310 = vmul.f32 %v1190, %v2086
  %v2311 = vmul.f32 %v1191, %v2087
  %v2312 = vmul.f32 %v1192, %v2088
  %v2313 = vmul.f32 %v1193, %v2089
  %v2314 = vmul.f32 %v1194, %v2090
  %v2315 = vmul.f32 %v1195, %v2091
  %v2316 = vmul.f32 %v1196, %v2092
  %v2317 = vmul.f32 %v1197, %v2093
  %v2318 = vmul.f32 %v1198, %v2094
  %v2319 = vmul.f32 %v1199, %v2095
  %v2320 = vmul.f32 %v1200, %v2096
  %v2321 = vmul.f32 %v1201, %v2097
  %v2322 = vmul.f32 %v1202, %v2098
  %v2323 = vmul.f32 %v1203, %v2099
  %v2324 = vmul.f32 %v1204, %v2100
  %v2325 = vmul.f32 %v1205, %v2101
  %v2326 = vmul.f32 %v1206, %v2102
  %v2327 = vmul.f32 %v1207, %v2103
  %v2328 = vmul.f32 %v1208, %v2104
  %v2329 = vmul.f32 %v1209, %v2105
  %v2330 = vmul.f32 %v1210, %v2106
  %v2331 = vmul.f32 %v1211, %v2107
  %v2332 = vmul.f32 %v1212, %v2108
  %v2333 = vmul.f32 %v1213, %v2109
  %v2334 = vmul.f32 %v1214, %v2110
  %v2335 = vmul.f32 %v1215, %v2111
  %v2336 = vmul.f32 %v1216, %v2112
  %v2337 = vmul.f32 %v1217, %v2113
  %v2338 = vmul.f32 %v1218, %v2114
  %v2339 = vmul.f32 %v1219, %v2115
  %v2340 = vmul.f32 %v1220, %v2116
  %v2341 = vmul.f32 %v1221, %v2117
  %v2342 = vmul.f32 %v1222, %v2118
  %v2343 = vmul.f32 %v1223, %v2119
  %v2344 = vmul.f32 %v1224, %v2120
  %v2345 = vmul.f32 %v1225, %v2121
  %v2346 = vmul.f32 %v1226, %v2122
  %v2347 = vmul.f32 %v1227, %v2123
  %v2348 = vmul.f32 %v1228, %v2124
  %v2349 = vmul.f32 %v1229, %v2125
  %v2350 = vmul.f32 %v1230, %v2126
  %v2351 = vmul.f32 %v1231, %v2127
  %v2352 = vmul.f32 %v1232, %v2128
  %v2353 = vmul.f32 %v1233, %v2129
  %v2354 = vmul.f32 %v1234, %v2130
  %v2355 = vmul.f32 %v1235, %v2131
  %v2356 = vmul.f32 %v1236, %v2132
  %v2357 = vmul.f32 %v1237, %v2133
  %v2358 = vmul.f32 %v1238, %v2134
  %v2359 = vmul.f32 %v1239, %v2135
  %v2360 = vmul.f32 %v1240, %v2136
  %v2361 = vmul.f32 %v1241, %v2137
  %v2362 = vmul.f32 %v1242, %v2138
  %v2363 = vmul.f32 %v1243, %v2139
  %v2364 = vmul.f32 %v1244, %v2140
  %v2365 = vmul.f32 %v1245, %v2141
  %v2366 = vmul.f32 %v1246, %v2142
  %v2367 = vsub.f32 %v2143, %v2255
  %v2368 = vsub.f32 %v2144, %v2256
  %v2369 = vsub.f32 %v2145, %v2257
  %v2370 = vsub.f32 %v2146, %v2258
  %v2371 = vsub.f32 %v2147, %v2259
  %v2372 = vsub.f32 %v2148, %v2260
  %v2373 = vsub.f32 %v2149, %v2261
  %v2374 = vsub.f32 %v2150, %v2262
  %v2375 = vsub.f32 %v2151, %v2263
  %v2376 = vsub.f32 %v2152, %v2264
  %v2377 = vsub.f32 %v2153, %v2265
  %v2378 = vsub.f32 %v2154, %v2266
  %v2379 = vsub.f32 %v2155, %v2267
  %v2380 = vsub.f32 %v2156, %v2268
  %v2381 = vsub.f32 %v2157, %v2269
  %v2382 = vsub.f32 %v2158, %v2270
  %v2383 = vsub.f32 %v2159, %v2271
  %v2384 = vsub.f32 %v2160, %v2272
  %v2385 = vsub.f32 %v2161, %v2273
  %v2386 = vsub.f32 %v2162, %v2274
  %v2387 = vsub.f32 %v2163, %v2275
  %v2388 = vsub.f32 %v2164, %v2276
  %v2389 = vsub.f32 %v2165, %v2277
  %v2390 = vsub.f32 %v2166, %v2278
  %v2391 = vsub.f32 %v2167, %v2279
  %v2392 = vsub.f32 %v2168, %v2280
  %v2393 = vsub.f32 %v2169, %v2281
  %v2394 = vsub.f32 %v2170, %v2282
  %v2395 = vsub.f32 %v2171, %v2283
  %v2396 = vsub.f32 %v2172, %v2284
  %v2397 = vsub.f32 %v2173, %v2285
  %v2398 = vsub.f32 %v2174, %v2286
  %v2399 = vsub.f32 %v2175, %v2287
  %v2400 = vsub.f32 %v2176, %v2288
  %v2401 = vsub.f32 %v2177, %v2289
  %v2402 = vsub.f32 %v2178, %v2290
  %v2403 = vsub.f32 %v2179, %v2291
  %v2404 = vsub.f32 %v2180, %v2292
  %v2405 = vsub.f32 %v2181, %v2293
  %v2406 = vsub.f32 %v2182, %v2294
  %v2407 = vsub.f32 %v2183, %v2295
  %v2408 = vsub.f32 %v2184, %v2296
  %v2409 = vsub.f32 %v2185, %v2297
  %v2410 = vsub.f32 %v2186, %v2298
  %v2411 = vsub.f32 %v2187, %v2299
  %v2412 = vsub.f32 %v2188, %v2300
  %v2413 = vsub.f32 %v2189, %v2301
  %v2414 = vsub.f32 %v2190, %v2302
  %v2415 = vsub.f32 %v2191, %v2303
  %v2416 = vsub.f32 %v2192, %v2304
  %v2417 = vsub.f32 %v2193, %v2305
  %v2418 = vsub.f32 %v2194, %v2306
  %v2419 = vsub.f32 %v2195, %v2307
  %v2420 = vsub.f32 %v2196, %v2308
  %v2421 = vsub.f32 %v2197, %v2309
  %v2422 = vsub.f32 %v2198, %v2310
  %v2423 = vsub.f32 %v2199, %v2311
  %v2424 = vsub.f32 %v2200, %v2312
  %v2425 = vsub.f32 %v2201, %v2313
  %v2426 = vsub.f32 %v2202, %v2314
  %v2427 = vsub.f32 %v2203, %v2315
  %v2428 = vsub.f32 %v2204, %v2316
  %v2429 = vsub.f32 %v2205, %v2317
  %v2430 = vsub.f32 %v2206, %v2318
  %v2431 = vsub.f32 %v2207, %v2319
  %v2432 = vsub.f32 %v2208, %v2320
  %v2433 = vsub.f32 %v2209, %v2321
  %v2434 = vsub.f32 %v2210, %v2322
  %v2435 = vsub.f32 %v2211, %v2323
  %v2436 = vsub.f32 %v2212, %v2324
  %v2437 = vsub.f32 %v2213, %v2325
  %v2438 = vsub.f32 %v2214, %v2326
  %v2439 = vsub.f32 %v2215, %v2327
  %v2440 = vsub.f32 %v2216, %v2328
  %v2441 = vsub.f32 %v2217, %v2329
  %v2442 = vsub.f32 %v2218, %v2330
  %v2443 = vsub.f32 %v2219, %v2331
  %v2444 = vsub.f32 %v2220, %v2332
  %v2445 = vsub.f32 %v2221, %v2333
  %v2446 = vsub.f32 %v2222, %v2334
  %v2447 = vsub.f32 %v2223, %v2335
  %v2448 = vsub.f32 %v2224, %v2336
  %v2449 = vsub.f32 %v2225, %v2337
  %v2450 = vsub.f32 %v2226, %v2338
  %v2451 = vsub.f32 %v2227, %v2339
  %v2452 = vsub.f32 %v2228, %v2340
  %v2453 = vsub.f32 %v2229, %v2341
  %v2454 = vsub.f32 %v2230, %v2342
  %v2455 = vsub.f32 %v2231, %v2343
  %v2456 = vsub.f32 %v2232, %v2344
  %v2457 = vsub.f32 %v2233, %v2345
  %v2458 = vsub.f32 %v2234, %v2346
  %v2459 = vsub.f32 %v2235, %v2347
  %v2460 = vsub.f32 %v2236, %v2348
  %v2461 = vsub.f32 %v2237, %v2349
  %v2462 = vsub.f32 %v2238, %v2350
  %v2463 = vsub.f32 %v2239, %v2351
  %v2464 = vsub.f32 %v2240, %v2352
  %v2465 = vsub.f32 %v2241, %v2353
  %v2466 = vsub.f32 %v2242, %v2354
  %v2467 = vsub.f32 %v2243, %v2355
  %v2468 = vsub.f32 %v2244, %v2356
  %v2469 = vsub.f32 %v2245, %v2357
  %v2470 = vsub.f32 %v2246, %v2358
  %v2471 = vsub.f32 %v2247, %v2359
  %v2472 = vsub.f32 %v2248, %v2360
  %v2473 = vsub.f32 %v2249, %v2361
  %v2474 = vsub.f32 %v2250, %v2362
  %v2475 = vsub.f32 %v2251, %v2363
  %v2476 = vsub.f32 %v2252, %v2364
  %v2477 = vsub.f32 %v2253, %v2365
  %v2478 = vsub.f32 %v2254, %v2366
  %2480 = vset.pattern.permute.xlu0 0
  %2481 = vperm.xlu0 %2480, %v2031
  %v2482 = vpop.permute.xlu0 %2481
  %2485 = vset.pattern.permute.xlu0 0
  %2486 = vperm.xlu0 %2485, %v2032
  %v2487 = vpop.permute.xlu0 %2486
  %2490 = vset.pattern.permute.xlu0 0
  %2491 = vperm.xlu0 %2490, %v2033
  %v2492 = vpop.permute.xlu0 %2491
  %2495 = vset.pattern.permute.xlu0 0
  %2496 = vperm.xlu0 %2495, %v2034
  %v2497 = vpop.permute.xlu0 %2496
  %2500 = vset.pattern.permute.xlu0 0
  %2501 = vperm.xlu0 %2500, %v2035
  %v2502 = vpop.permute.xlu0 %2501
  %2505 = vset.pattern.permute.xlu0 0
  %2506 = vperm.xlu0 %2505, %v2036
  %v2507 = vpop.permute.xlu0 %2506
  %2510 = vset.pattern.permute.xlu0 0
  %2511 = vperm.xlu0 %2510, %v2037
  %v2512 = vpop.permute.xlu0 %2511
  %2515 = vset.pattern.permute.xlu0 0
  %2516 = vperm.xlu0 %2515, %v2038
  %v2517 = vpop.permute.xlu0 %2516
  %2520 = vset.pattern.permute.xlu0 0
  %2521 = vperm.xlu0 %2520, %v2039
  %v2522 = vpop.permute.xlu0 %2521
  %2525 = vset.pattern.permute.xlu0 0
  %2526 = vperm.xlu0 %2525, %v2040
  %v2527 = vpop.permute.xlu0 %2526
  %2530 = vset.pattern.permute.xlu0 0
  %2531 = vperm.xlu0 %2530, %v2041
  %v2532 = vpop.permute.xlu0 %2531
  %2535 = vset.pattern.permute.xlu0 0
  %2536 = vperm.xlu0 %2535, %v2042
  %v2537 = vpop.permute.xlu0 %2536
  %2540 = vset.pattern.permute.xlu0 0
  %2541 = vperm.xlu0 %2540, %v2043
  %v2542 = vpop.permute.xlu0 %2541
  %2545 = vset.pattern.permute.xlu0 0
  %2546 = vperm.xlu0 %2545, %v2044
  %v2547 = vpop.permute.xlu0 %2546
  %2550 = vset.pattern.permute.xlu0 0
  %2551 = vperm.xlu0 %2550, %v2045
  %v2552 = vpop.permute.xlu0 %2551
  %2555 = vset.pattern.permute.xlu0 0
  %2556 = vperm.xlu0 %2555, %v2046
  %v2557 = vpop.permute.xlu0 %2556
  %2560 = vset.pattern.permute.xlu0 0
  %2561 = vperm.xlu0 %2560, %v2047
  %v2562 = vpop.permute.xlu0 %2561
  %2565 = vset.pattern.permute.xlu0 0
  %2566 = vperm.xlu0 %2565, %v2048
  %v2567 = vpop.permute.xlu0 %2566
  %2570 = vset.pattern.permute.xlu0 0
  %2571 = vperm.xlu0 %2570, %v2049
  %v2572 = vpop.permute.xlu0 %2571
  %2575 = vset.pattern.permute.xlu0 0
  %2576 = vperm.xlu0 %2575, %v2050
  %v2577 = vpop.permute.xlu0 %2576
  %2580 = vset.pattern.permute.xlu0 0
  %2581 = vperm.xlu0 %2580, %v2051
  %v2582 = vpop.permute.xlu0 %2581
  %2585 = vset.pattern.permute.xlu0 0
  %2586 = vperm.xlu0 %2585, %v2052
  %v2587 = vpop.permute.xlu0 %2586
  %2590 = vset.pattern.permute.xlu0 0
  %2591 = vperm.xlu0 %2590, %v2053
  %v2592 = vpop.permute.xlu0 %2591
  %2595 = vset.pattern.permute.xlu0 0
  %2596 = vperm.xlu0 %2595, %v2054
  %v2597 = vpop.permute.xlu0 %2596
  %2600 = vset.pattern.permute.xlu0 0
  %2601 = vperm.xlu0 %2600, %v2055
  %v2602 = vpop.permute.xlu0 %2601
  %2605 = vset.pattern.permute.xlu0 0
  %2606 = vperm.xlu0 %2605, %v2056
  %v2607 = vpop.permute.xlu0 %2606
  %2610 = vset.pattern.permute.xlu0 0
  %2611 = vperm.xlu0 %2610, %v2057
  %v2612 = vpop.permute.xlu0 %2611
  %2615 = vset.pattern.permute.xlu0 0
  %2616 = vperm.xlu0 %2615, %v2058
  %v2617 = vpop.permute.xlu0 %2616
  %2620 = vset.pattern.permute.xlu0 0
  %2621 = vperm.xlu0 %2620, %v2059
  %v2622 = vpop.permute.xlu0 %2621
  %2625 = vset.pattern.permute.xlu0 0
  %2626 = vperm.xlu0 %2625, %v2060
  %v2627 = vpop.permute.xlu0 %2626
  %2630 = vset.pattern.permute.xlu0 0
  %2631 = vperm.xlu0 %2630, %v2061
  %v2632 = vpop.permute.xlu0 %2631
  %2635 = vset.pattern.permute.xlu0 0
  %2636 = vperm.xlu0 %2635, %v2062
  %v2637 = vpop.permute.xlu0 %2636
  %2640 = vset.pattern.permute.xlu0 0
  %2641 = vperm.xlu0 %2640, %v2063
  %v2642 = vpop.permute.xlu0 %2641
  %2645 = vset.pattern.permute.xlu0 0
  %2646 = vperm.xlu0 %2645, %v2064
  %v2647 = vpop.permute.xlu0 %2646
  %2650 = vset.pattern.permute.xlu0 0
  %2651 = vperm.xlu0 %2650, %v2065
  %v2652 = vpop.permute.xlu0 %2651
  %2655 = vset.pattern.permute.xlu0 0
  %2656 = vperm.xlu0 %2655, %v2066
  %v2657 = vpop.permute.xlu0 %2656
  %2660 = vset.pattern.permute.xlu0 0
  %2661 = vperm.xlu0 %2660, %v2067
  %v2662 = vpop.permute.xlu0 %2661
  %2665 = vset.pattern.permute.xlu0 0
  %2666 = vperm.xlu0 %2665, %v2068
  %v2667 = vpop.permute.xlu0 %2666
  %2670 = vset.pattern.permute.xlu0 0
  %2671 = vperm.xlu0 %2670, %v2069
  %v2672 = vpop.permute.xlu0 %2671
  %2675 = vset.pattern.permute.xlu0 0
  %2676 = vperm.xlu0 %2675, %v2070
  %v2677 = vpop.permute.xlu0 %2676
  %2680 = vset.pattern.permute.xlu0 0
  %2681 = vperm.xlu0 %2680, %v2071
  %v2682 = vpop.permute.xlu0 %2681
  %2685 = vset.pattern.permute.xlu0 0
  %2686 = vperm.xlu0 %2685, %v2072
  %v2687 = vpop.permute.xlu0 %2686
  %2690 = vset.pattern.permute.xlu0 0
  %2691 = vperm.xlu0 %2690, %v2073
  %v2692 = vpop.permute.xlu0 %2691
  %2695 = vset.pattern.permute.xlu0 0
  %2696 = vperm.xlu0 %2695, %v2074
  %v2697 = vpop.permute.xlu0 %2696
  %2700 = vset.pattern.permute.xlu0 0
  %2701 = vperm.xlu0 %2700, %v2075
  %v2702 = vpop.permute.xlu0 %2701
  %2705 = vset.pattern.permute.xlu0 0
  %2706 = vperm.xlu0 %2705, %v2076
  %v2707 = vpop.permute.xlu0 %2706
  %2710 = vset.pattern.permute.xlu0 0
  %2711 = vperm.xlu0 %2710, %v2077
  %v2712 = vpop.permute.xlu0 %2711
  %2715 = vset.pattern.permute.xlu0 0
  %2716 = vperm.xlu0 %2715, %v2078
  %v2717 = vpop.permute.xlu0 %2716
  %2720 = vset.pattern.permute.xlu0 0
  %2721 = vperm.xlu0 %2720, %v2079
  %v2722 = vpop.permute.xlu0 %2721
  %2725 = vset.pattern.permute.xlu0 0
  %2726 = vperm.xlu0 %2725, %v2080
  %v2727 = vpop.permute.xlu0 %2726
  %2730 = vset.pattern.permute.xlu0 0
  %2731 = vperm.xlu0 %2730, %v2081
  %v2732 = vpop.permute.xlu0 %2731
  %2735 = vset.pattern.permute.xlu0 0
  %2736 = vperm.xlu0 %2735, %v2082
  %v2737 = vpop.permute.xlu0 %2736
  %2740 = vset.pattern.permute.xlu0 0
  %2741 = vperm.xlu0 %2740, %v2083
  %v2742 = vpop.permute.xlu0 %2741
  %2745 = vset.pattern.permute.xlu0 0
  %2746 = vperm.xlu0 %2745, %v2084
  %v2747 = vpop.permute.xlu0 %2746
  %2750 = vset.pattern.permute.xlu0 0
  %2751 = vperm.xlu0 %2750, %v2085
  %v2752 = vpop.permute.xlu0 %2751
  %2755 = vset.pattern.permute.xlu0 0
  %2756 = vperm.xlu0 %2755, %v2086
  %v2757 = vpop.permute.xlu0 %2756
  %2760 = vset.pattern.permute.xlu0 0
  %2761 = vperm.xlu0 %2760, %v2087
  %v2762 = vpop.permute.xlu0 %2761
  %2765 = vset.pattern.permute.xlu0 0
  %2766 = vperm.xlu0 %2765, %v2088
  %v2767 = vpop.permute.xlu0 %2766
  %2770 = vset.pattern.permute.xlu0 0
  %2771 = vperm.xlu0 %2770, %v2089
  %v2772 = vpop.permute.xlu0 %2771
  %2775 = vset.pattern.permute.xlu0 0
  %2776 = vperm.xlu0 %2775, %v2090
  %v2777 = vpop.permute.xlu0 %2776
  %2780 = vset.pattern.permute.xlu0 0
  %2781 = vperm.xlu0 %2780, %v2091
  %v2782 = vpop.permute.xlu0 %2781
  %2785 = vset.pattern.permute.xlu0 0
  %2786 = vperm.xlu0 %2785, %v2092
  %v2787 = vpop.permute.xlu0 %2786
  %2790 = vset.pattern.permute.xlu0 0
  %2791 = vperm.xlu0 %2790, %v2093
  %v2792 = vpop.permute.xlu0 %2791
  %2795 = vset.pattern.permute.xlu0 0
  %2796 = vperm.xlu0 %2795, %v2094
  %v2797 = vpop.permute.xlu0 %2796
  %2800 = vset.pattern.permute.xlu0 0
  %2801 = vperm.xlu0 %2800, %v2095
  %v2802 = vpop.permute.xlu0 %2801
  %2805 = vset.pattern.permute.xlu0 0
  %2806 = vperm.xlu0 %2805, %v2096
  %v2807 = vpop.permute.xlu0 %2806
  %2810 = vset.pattern.permute.xlu0 0
  %2811 = vperm.xlu0 %2810, %v2097
  %v2812 = vpop.permute.xlu0 %2811
  %2815 = vset.pattern.permute.xlu0 0
  %2816 = vperm.xlu0 %2815, %v2098
  %v2817 = vpop.permute.xlu0 %2816
  %2820 = vset.pattern.permute.xlu0 0
  %2821 = vperm.xlu0 %2820, %v2099
  %v2822 = vpop.permute.xlu0 %2821
  %2825 = vset.pattern.permute.xlu0 0
  %2826 = vperm.xlu0 %2825, %v2100
  %v2827 = vpop.permute.xlu0 %2826
  %2830 = vset.pattern.permute.xlu0 0
  %2831 = vperm.xlu0 %2830, %v2101
  %v2832 = vpop.permute.xlu0 %2831
  %2835 = vset.pattern.permute.xlu0 0
  %2836 = vperm.xlu0 %2835, %v2102
  %v2837 = vpop.permute.xlu0 %2836
  %2840 = vset.pattern.permute.xlu0 0
  %2841 = vperm.xlu0 %2840, %v2103
  %v2842 = vpop.permute.xlu0 %2841
  %2845 = vset.pattern.permute.xlu0 0
  %2846 = vperm.xlu0 %2845, %v2104
  %v2847 = vpop.permute.xlu0 %2846
  %2850 = vset.pattern.permute.xlu0 0
  %2851 = vperm.xlu0 %2850, %v2105
  %v2852 = vpop.permute.xlu0 %2851
  %2855 = vset.pattern.permute.xlu0 0
  %2856 = vperm.xlu0 %2855, %v2106
  %v2857 = vpop.permute.xlu0 %2856
  %2860 = vset.pattern.permute.xlu0 0
  %2861 = vperm.xlu0 %2860, %v2107
  %v2862 = vpop.permute.xlu0 %2861
  %2865 = vset.pattern.permute.xlu0 0
  %2866 = vperm.xlu0 %2865, %v2108
  %v2867 = vpop.permute.xlu0 %2866
  %2870 = vset.pattern.permute.xlu0 0
  %2871 = vperm.xlu0 %2870, %v2109
  %v2872 = vpop.permute.xlu0 %2871
  %2875 = vset.pattern.permute.xlu0 0
  %2876 = vperm.xlu0 %2875, %v2110
  %v2877 = vpop.permute.xlu0 %2876
  %2880 = vset.pattern.permute.xlu0 0
  %2881 = vperm.xlu0 %2880, %v2111
  %v2882 = vpop.permute.xlu0 %2881
  %2885 = vset.pattern.permute.xlu0 0
  %2886 = vperm.xlu0 %2885, %v2112
  %v2887 = vpop.permute.xlu0 %2886
  %2890 = vset.pattern.permute.xlu0 0
  %2891 = vperm.xlu0 %2890, %v2113
  %v2892 = vpop.permute.xlu0 %2891
  %2895 = vset.pattern.permute.xlu0 0
  %2896 = vperm.xlu0 %2895, %v2114
  %v2897 = vpop.permute.xlu0 %2896
  %2900 = vset.pattern.permute.xlu0 0
  %2901 = vperm.xlu0 %2900, %v2115
  %v2902 = vpop.permute.xlu0 %2901
  %2905 = vset.pattern.permute.xlu0 0
  %2906 = vperm.xlu0 %2905, %v2116
  %v2907 = vpop.permute.xlu0 %2906
  %2910 = vset.pattern.permute.xlu0 0
  %2911 = vperm.xlu0 %2910, %v2117
  %v2912 = vpop.permute.xlu0 %2911
  %2915 = vset.pattern.permute.xlu0 0
  %2916 = vperm.xlu0 %2915, %v2118
  %v2917 = vpop.permute.xlu0 %2916
  %2920 = vset.pattern.permute.xlu0 0
  %2921 = vperm.xlu0 %2920, %v2119
  %v2922 = vpop.permute.xlu0 %2921
  %2925 = vset.pattern.permute.xlu0 0
  %2926 = vperm.xlu0 %2925, %v2120
  %v2927 = vpop.permute.xlu0 %2926
  %2930 = vset.pattern.permute.xlu0 0
  %2931 = vperm.xlu0 %2930, %v2121
  %v2932 = vpop.permute.xlu0 %2931
  %2935 = vset.pattern.permute.xlu0 0
  %2936 = vperm.xlu0 %2935, %v2122
  %v2937 = vpop.permute.xlu0 %2936
  %2940 = vset.pattern.permute.xlu0 0
  %2941 = vperm.xlu0 %2940, %v2123
  %v2942 = vpop.permute.xlu0 %2941
  %2945 = vset.pattern.permute.xlu0 0
  %2946 = vperm.xlu0 %2945, %v2124
  %v2947 = vpop.permute.xlu0 %2946
  %2950 = vset.pattern.permute.xlu0 0
  %2951 = vperm.xlu0 %2950, %v2125
  %v2952 = vpop.permute.xlu0 %2951
  %2955 = vset.pattern.permute.xlu0 0
  %2956 = vperm.xlu0 %2955, %v2126
  %v2957 = vpop.permute.xlu0 %2956
  %2960 = vset.pattern.permute.xlu0 0
  %2961 = vperm.xlu0 %2960, %v2127
  %v2962 = vpop.permute.xlu0 %2961
  %2965 = vset.pattern.permute.xlu0 0
  %2966 = vperm.xlu0 %2965, %v2128
  %v2967 = vpop.permute.xlu0 %2966
  %2970 = vset.pattern.permute.xlu0 0
  %2971 = vperm.xlu0 %2970, %v2129
  %v2972 = vpop.permute.xlu0 %2971
  %2975 = vset.pattern.permute.xlu0 0
  %2976 = vperm.xlu0 %2975, %v2130
  %v2977 = vpop.permute.xlu0 %2976
  %2980 = vset.pattern.permute.xlu0 0
  %2981 = vperm.xlu0 %2980, %v2131
  %v2982 = vpop.permute.xlu0 %2981
  %2985 = vset.pattern.permute.xlu0 0
  %2986 = vperm.xlu0 %2985, %v2132
  %v2987 = vpop.permute.xlu0 %2986
  %2990 = vset.pattern.permute.xlu0 0
  %2991 = vperm.xlu0 %2990, %v2133
  %v2992 = vpop.permute.xlu0 %2991
  %2995 = vset.pattern.permute.xlu0 0
  %2996 = vperm.xlu0 %2995, %v2134
  %v2997 = vpop.permute.xlu0 %2996
  %3000 = vset.pattern.permute.xlu0 0
  %3001 = vperm.xlu0 %3000, %v2135
  %v3002 = vpop.permute.xlu0 %3001
  %3005 = vset.pattern.permute.xlu0 0
  %3006 = vperm.xlu0 %3005, %v2136
  %v3007 = vpop.permute.xlu0 %3006
  %3010 = vset.pattern.permute.xlu0 0
  %3011 = vperm.xlu0 %3010, %v2137
  %v3012 = vpop.permute.xlu0 %3011
  %3015 = vset.pattern.permute.xlu0 0
  %3016 = vperm.xlu0 %3015, %v2138
  %v3017 = vpop.permute.xlu0 %3016
  %3020 = vset.pattern.permute.xlu0 0
  %3021 = vperm.xlu0 %3020, %v2139
  %v3022 = vpop.permute.xlu0 %3021
  %3025 = vset.pattern.permute.xlu0 0
  %3026 = vperm.xlu0 %3025, %v2140
  %v3027 = vpop.permute.xlu0 %3026
  %3030 = vset.pattern.permute.xlu0 0
  %3031 = vperm.xlu0 %3030, %v2141
  %v3032 = vpop.permute.xlu0 %3031
  %3035 = vset.pattern.permute.xlu0 0
  %3036 = vperm.xlu0 %3035, %v2142
  %v3037 = vpop.permute.xlu0 %3036
  %v3039 = vmul.f32 %v14, %v2482
  %v3040 = vmul.f32 %v15, %v2487
  %v3041 = vmul.f32 %v16, %v2492
  %v3042 = vmul.f32 %v17, %v2497
  %v3043 = vmul.f32 %v18, %v2502
  %v3044 = vmul.f32 %v19, %v2507
  %v3045 = vmul.f32 %v20, %v2512
  %v3046 = vmul.f32 %v21, %v2517
  %v3047 = vmul.f32 %v22, %v2522
  %v3048 = vmul.f32 %v23, %v2527
  %v3049 = vmul.f32 %v24, %v2532
  %v3050 = vmul.f32 %v25, %v2537
  %v3051 = vmul.f32 %v26, %v2542
  %v3052 = vmul.f32 %v27, %v2547
  %v3053 = vmul.f32 %v28, %v2552
  %v3054 = vmul.f32 %v29, %v2557
  %v3055 = vmul.f32 %v30, %v2562
  %v3056 = vmul.f32 %v31, %v2567
  %v3057 = vmul.f32 %v32, %v2572
  %v3058 = vmul.f32 %v33, %v2577
  %v3059 = vmul.f32 %v34, %v2582
  %v3060 = vmul.f32 %v35, %v2587
  %v3061 = vmul.f32 %v36, %v2592
  %v3062 = vmul.f32 %v37, %v2597
  %v3063 = vmul.f32 %v38, %v2602
  %v3064 = vmul.f32 %v39, %v2607
  %v3065 = vmul.f32 %v40, %v2612
  %v3066 = vmul.f32 %v41, %v2617
  %v3067 = vmul.f32 %v42, %v2622
  %v3068 = vmul.f32 %v43, %v2627
  %v3069 = vmul.f32 %v44, %v2632
  %v3070 = vmul.f32 %v45, %v2637
  %v3071 = vmul.f32 %v46, %v2642
  %v3072 = vmul.f32 %v47, %v2647
  %v3073 = vmul.f32 %v48, %v2652
  %v3074 = vmul.f32 %v49, %v2657
  %v3075 = vmul.f32 %v50, %v2662
  %v3076 = vmul.f32 %v51, %v2667
  %v3077 = vmul.f32 %v52, %v2672
  %v3078 = vmul.f32 %v53, %v2677
  %v3079 = vmul.f32 %v54, %v2682
  %v3080 = vmul.f32 %v55, %v2687
  %v3081 = vmul.f32 %v56, %v2692
  %v3082 = vmul.f32 %v57, %v2697
  %v3083 = vmul.f32 %v58, %v2702
  %v3084 = vmul.f32 %v59, %v2707
  %v3085 = vmul.f32 %v60, %v2712
  %v3086 = vmul.f32 %v61, %v2717
  %v3087 = vmul.f32 %v62, %v2722
  %v3088 = vmul.f32 %v63, %v2727
  %v3089 = vmul.f32 %v64, %v2732
  %v3090 = vmul.f32 %v65, %v2737
  %v3091 = vmul.f32 %v66, %v2742
  %v3092 = vmul.f32 %v67, %v2747
  %v3093 = vmul.f32 %v68, %v2752
  %v3094 = vmul.f32 %v69, %v2757
  %v3095 = vmul.f32 %v70, %v2762
  %v3096 = vmul.f32 %v71, %v2767
  %v3097 = vmul.f32 %v72, %v2772
  %v3098 = vmul.f32 %v73, %v2777
  %v3099 = vmul.f32 %v74, %v2782
  %v3100 = vmul.f32 %v75, %v2787
  %v3101 = vmul.f32 %v76, %v2792
  %v3102 = vmul.f32 %v77, %v2797
  %v3103 = vmul.f32 %v78, %v2802
  %v3104 = vmul.f32 %v79, %v2807
  %v3105 = vmul.f32 %v80, %v2812
  %v3106 = vmul.f32 %v81, %v2817
  %v3107 = vmul.f32 %v82, %v2822
  %v3108 = vmul.f32 %v83, %v2827
  %v3109 = vmul.f32 %v84, %v2832
  %v3110 = vmul.f32 %v85, %v2837
  %v3111 = vmul.f32 %v86, %v2842
  %v3112 = vmul.f32 %v87, %v2847
  %v3113 = vmul.f32 %v88, %v2852
  %v3114 = vmul.f32 %v89, %v2857
  %v3115 = vmul.f32 %v90, %v2862
  %v3116 = vmul.f32 %v91, %v2867
  %v3117 = vmul.f32 %v92, %v2872
  %v3118 = vmul.f32 %v93, %v2877
  %v3119 = vmul.f32 %v94, %v2882
  %v3120 = vmul.f32 %v95, %v2887
  %v3121 = vmul.f32 %v96, %v2892
  %v3122 = vmul.f32 %v97, %v2897
  %v3123 = vmul.f32 %v98, %v2902
  %v3124 = vmul.f32 %v99, %v2907
  %v3125 = vmul.f32 %v100, %v2912
  %v3126 = vmul.f32 %v101, %v2917
  %v3127 = vmul.f32 %v102, %v2922
  %v3128 = vmul.f32 %v103, %v2927
  %v3129 = vmul.f32 %v104, %v2932
  %v3130 = vmul.f32 %v105, %v2937
  %v3131 = vmul.f32 %v106, %v2942
  %v3132 = vmul.f32 %v107, %v2947
  %v3133 = vmul.f32 %v108, %v2952
  %v3134 = vmul.f32 %v109, %v2957
  %v3135 = vmul.f32 %v110, %v2962
  %v3136 = vmul.f32 %v111, %v2967
  %v3137 = vmul.f32 %v112, %v2972
  %v3138 = vmul.f32 %v113, %v2977
  %v3139 = vmul.f32 %v114, %v2982
  %v3140 = vmul.f32 %v115, %v2987
  %v3141 = vmul.f32 %v116, %v2992
  %v3142 = vmul.f32 %v117, %v2997
  %v3143 = vmul.f32 %v118, %v3002
  %v3144 = vmul.f32 %v119, %v3007
  %v3145 = vmul.f32 %v120, %v3012
  %v3146 = vmul.f32 %v121, %v3017
  %v3147 = vmul.f32 %v122, %v3022
  %v3148 = vmul.f32 %v123, %v3027
  %v3149 = vmul.f32 %v124, %v3032
  %v3150 = vmul.f32 %v125, %v3037
  %3152 = vset.pattern.permute.xlu0 0
  %3153 = vperm.xlu0 %3152, %v2367
  %v3154 = vpop.permute.xlu0 %3153
  %3157 = vset.pattern.permute.xlu0 0
  %3158 = vperm.xlu0 %3157, %v2368
  %v3159 = vpop.permute.xlu0 %3158
  %3162 = vset.pattern.permute.xlu0 0
  %3163 = vperm.xlu0 %3162, %v2369
  %v3164 = vpop.permute.xlu0 %3163
  %3167 = vset.pattern.permute.xlu0 0
  %3168 = vperm.xlu0 %3167, %v2370
  %v3169 = vpop.permute.xlu0 %3168
  %3172 = vset.pattern.permute.xlu0 0
  %3173 = vperm.xlu0 %3172, %v2371
  %v3174 = vpop.permute.xlu0 %3173
  %3177 = vset.pattern.permute.xlu0 0
  %3178 = vperm.xlu0 %3177, %v2372
  %v3179 = vpop.permute.xlu0 %3178
  %3182 = vset.pattern.permute.xlu0 0
  %3183 = vperm.xlu0 %3182, %v2373
  %v3184 = vpop.permute.xlu0 %3183
  %3187 = vset.pattern.permute.xlu0 0
  %3188 = vperm.xlu0 %3187, %v2374
  %v3189 = vpop.permute.xlu0 %3188
  %3192 = vset.pattern.permute.xlu0 0
  %3193 = vperm.xlu0 %3192, %v2375
  %v3194 = vpop.permute.xlu0 %3193
  %3197 = vset.pattern.permute.xlu0 0
  %3198 = vperm.xlu0 %3197, %v2376
  %v3199 = vpop.permute.xlu0 %3198
  %3202 = vset.pattern.permute.xlu0 0
  %3203 = vperm.xlu0 %3202, %v2377
  %v3204 = vpop.permute.xlu0 %3203
  %3207 = vset.pattern.permute.xlu0 0
  %3208 = vperm.xlu0 %3207, %v2378
  %v3209 = vpop.permute.xlu0 %3208
  %3212 = vset.pattern.permute.xlu0 0
  %3213 = vperm.xlu0 %3212, %v2379
  %v3214 = vpop.permute.xlu0 %3213
  %3217 = vset.pattern.permute.xlu0 0
  %3218 = vperm.xlu0 %3217, %v2380
  %v3219 = vpop.permute.xlu0 %3218
  %3222 = vset.pattern.permute.xlu0 0
  %3223 = vperm.xlu0 %3222, %v2381
  %v3224 = vpop.permute.xlu0 %3223
  %3227 = vset.pattern.permute.xlu0 0
  %3228 = vperm.xlu0 %3227, %v2382
  %v3229 = vpop.permute.xlu0 %3228
  %3232 = vset.pattern.permute.xlu0 0
  %3233 = vperm.xlu0 %3232, %v2383
  %v3234 = vpop.permute.xlu0 %3233
  %3237 = vset.pattern.permute.xlu0 0
  %3238 = vperm.xlu0 %3237, %v2384
  %v3239 = vpop.permute.xlu0 %3238
  %3242 = vset.pattern.permute.xlu0 0
  %3243 = vperm.xlu0 %3242, %v2385
  %v3244 = vpop.permute.xlu0 %3243
  %3247 = vset.pattern.permute.xlu0 0
  %3248 = vperm.xlu0 %3247, %v2386
  %v3249 = vpop.permute.xlu0 %3248
  %3252 = vset.pattern.permute.xlu0 0
  %3253 = vperm.xlu0 %3252, %v2387
  %v3254 = vpop.permute.xlu0 %3253
  %3257 = vset.pattern.permute.xlu0 0
  %3258 = vperm.xlu0 %3257, %v2388
  %v3259 = vpop.permute.xlu0 %3258
  %3262 = vset.pattern.permute.xlu0 0
  %3263 = vperm.xlu0 %3262, %v2389
  %v3264 = vpop.permute.xlu0 %3263
  %3267 = vset.pattern.permute.xlu0 0
  %3268 = vperm.xlu0 %3267, %v2390
  %v3269 = vpop.permute.xlu0 %3268
  %3272 = vset.pattern.permute.xlu0 0
  %3273 = vperm.xlu0 %3272, %v2391
  %v3274 = vpop.permute.xlu0 %3273
  %3277 = vset.pattern.permute.xlu0 0
  %3278 = vperm.xlu0 %3277, %v2392
  %v3279 = vpop.permute.xlu0 %3278
  %3282 = vset.pattern.permute.xlu0 0
  %3283 = vperm.xlu0 %3282, %v2393
  %v3284 = vpop.permute.xlu0 %3283
  %3287 = vset.pattern.permute.xlu0 0
  %3288 = vperm.xlu0 %3287, %v2394
  %v3289 = vpop.permute.xlu0 %3288
  %3292 = vset.pattern.permute.xlu0 0
  %3293 = vperm.xlu0 %3292, %v2395
  %v3294 = vpop.permute.xlu0 %3293
  %3297 = vset.pattern.permute.xlu0 0
  %3298 = vperm.xlu0 %3297, %v2396
  %v3299 = vpop.permute.xlu0 %3298
  %3302 = vset.pattern.permute.xlu0 0
  %3303 = vperm.xlu0 %3302, %v2397
  %v3304 = vpop.permute.xlu0 %3303
  %3307 = vset.pattern.permute.xlu0 0
  %3308 = vperm.xlu0 %3307, %v2398
  %v3309 = vpop.permute.xlu0 %3308
  %3312 = vset.pattern.permute.xlu0 0
  %3313 = vperm.xlu0 %3312, %v2399
  %v3314 = vpop.permute.xlu0 %3313
  %3317 = vset.pattern.permute.xlu0 0
  %3318 = vperm.xlu0 %3317, %v2400
  %v3319 = vpop.permute.xlu0 %3318
  %3322 = vset.pattern.permute.xlu0 0
  %3323 = vperm.xlu0 %3322, %v2401
  %v3324 = vpop.permute.xlu0 %3323
  %3327 = vset.pattern.permute.xlu0 0
  %3328 = vperm.xlu0 %3327, %v2402
  %v3329 = vpop.permute.xlu0 %3328
  %3332 = vset.pattern.permute.xlu0 0
  %3333 = vperm.xlu0 %3332, %v2403
  %v3334 = vpop.permute.xlu0 %3333
  %3337 = vset.pattern.permute.xlu0 0
  %3338 = vperm.xlu0 %3337, %v2404
  %v3339 = vpop.permute.xlu0 %3338
  %3342 = vset.pattern.permute.xlu0 0
  %3343 = vperm.xlu0 %3342, %v2405
  %v3344 = vpop.permute.xlu0 %3343
  %3347 = vset.pattern.permute.xlu0 0
  %3348 = vperm.xlu0 %3347, %v2406
  %v3349 = vpop.permute.xlu0 %3348
  %3352 = vset.pattern.permute.xlu0 0
  %3353 = vperm.xlu0 %3352, %v2407
  %v3354 = vpop.permute.xlu0 %3353
  %3357 = vset.pattern.permute.xlu0 0
  %3358 = vperm.xlu0 %3357, %v2408
  %v3359 = vpop.permute.xlu0 %3358
  %3362 = vset.pattern.permute.xlu0 0
  %3363 = vperm.xlu0 %3362, %v2409
  %v3364 = vpop.permute.xlu0 %3363
  %3367 = vset.pattern.permute.xlu0 0
  %3368 = vperm.xlu0 %3367, %v2410
  %v3369 = vpop.permute.xlu0 %3368
  %3372 = vset.pattern.permute.xlu0 0
  %3373 = vperm.xlu0 %3372, %v2411
  %v3374 = vpop.permute.xlu0 %3373
  %3377 = vset.pattern.permute.xlu0 0
  %3378 = vperm.xlu0 %3377, %v2412
  %v3379 = vpop.permute.xlu0 %3378
  %3382 = vset.pattern.permute.xlu0 0
  %3383 = vperm.xlu0 %3382, %v2413
  %v3384 = vpop.permute.xlu0 %3383
  %3387 = vset.pattern.permute.xlu0 0
  %3388 = vperm.xlu0 %3387, %v2414
  %v3389 = vpop.permute.xlu0 %3388
  %3392 = vset.pattern.permute.xlu0 0
  %3393 = vperm.xlu0 %3392, %v2415
  %v3394 = vpop.permute.xlu0 %3393
  %3397 = vset.pattern.permute.xlu0 0
  %3398 = vperm.xlu0 %3397, %v2416
  %v3399 = vpop.permute.xlu0 %3398
  %3402 = vset.pattern.permute.xlu0 0
  %3403 = vperm.xlu0 %3402, %v2417
  %v3404 = vpop.permute.xlu0 %3403
  %3407 = vset.pattern.permute.xlu0 0
  %3408 = vperm.xlu0 %3407, %v2418
  %v3409 = vpop.permute.xlu0 %3408
  %3412 = vset.pattern.permute.xlu0 0
  %3413 = vperm.xlu0 %3412, %v2419
  %v3414 = vpop.permute.xlu0 %3413
  %3417 = vset.pattern.permute.xlu0 0
  %3418 = vperm.xlu0 %3417, %v2420
  %v3419 = vpop.permute.xlu0 %3418
  %3422 = vset.pattern.permute.xlu0 0
  %3423 = vperm.xlu0 %3422, %v2421
  %v3424 = vpop.permute.xlu0 %3423
  %3427 = vset.pattern.permute.xlu0 0
  %3428 = vperm.xlu0 %3427, %v2422
  %v3429 = vpop.permute.xlu0 %3428
  %3432 = vset.pattern.permute.xlu0 0
  %3433 = vperm.xlu0 %3432, %v2423
  %v3434 = vpop.permute.xlu0 %3433
  %3437 = vset.pattern.permute.xlu0 0
  %3438 = vperm.xlu0 %3437, %v2424
  %v3439 = vpop.permute.xlu0 %3438
  %3442 = vset.pattern.permute.xlu0 0
  %3443 = vperm.xlu0 %3442, %v2425
  %v3444 = vpop.permute.xlu0 %3443
  %3447 = vset.pattern.permute.xlu0 0
  %3448 = vperm.xlu0 %3447, %v2426
  %v3449 = vpop.permute.xlu0 %3448
  %3452 = vset.pattern.permute.xlu0 0
  %3453 = vperm.xlu0 %3452, %v2427
  %v3454 = vpop.permute.xlu0 %3453
  %3457 = vset.pattern.permute.xlu0 0
  %3458 = vperm.xlu0 %3457, %v2428
  %v3459 = vpop.permute.xlu0 %3458
  %3462 = vset.pattern.permute.xlu0 0
  %3463 = vperm.xlu0 %3462, %v2429
  %v3464 = vpop.permute.xlu0 %3463
  %3467 = vset.pattern.permute.xlu0 0
  %3468 = vperm.xlu0 %3467, %v2430
  %v3469 = vpop.permute.xlu0 %3468
  %3472 = vset.pattern.permute.xlu0 0
  %3473 = vperm.xlu0 %3472, %v2431
  %v3474 = vpop.permute.xlu0 %3473
  %3477 = vset.pattern.permute.xlu0 0
  %3478 = vperm.xlu0 %3477, %v2432
  %v3479 = vpop.permute.xlu0 %3478
  %3482 = vset.pattern.permute.xlu0 0
  %3483 = vperm.xlu0 %3482, %v2433
  %v3484 = vpop.permute.xlu0 %3483
  %3487 = vset.pattern.permute.xlu0 0
  %3488 = vperm.xlu0 %3487, %v2434
  %v3489 = vpop.permute.xlu0 %3488
  %3492 = vset.pattern.permute.xlu0 0
  %3493 = vperm.xlu0 %3492, %v2435
  %v3494 = vpop.permute.xlu0 %3493
  %3497 = vset.pattern.permute.xlu0 0
  %3498 = vperm.xlu0 %3497, %v2436
  %v3499 = vpop.permute.xlu0 %3498
  %3502 = vset.pattern.permute.xlu0 0
  %3503 = vperm.xlu0 %3502, %v2437
  %v3504 = vpop.permute.xlu0 %3503
  %3507 = vset.pattern.permute.xlu0 0
  %3508 = vperm.xlu0 %3507, %v2438
  %v3509 = vpop.permute.xlu0 %3508
  %3512 = vset.pattern.permute.xlu0 0
  %3513 = vperm.xlu0 %3512, %v2439
  %v3514 = vpop.permute.xlu0 %3513
  %3517 = vset.pattern.permute.xlu0 0
  %3518 = vperm.xlu0 %3517, %v2440
  %v3519 = vpop.permute.xlu0 %3518
  %3522 = vset.pattern.permute.xlu0 0
  %3523 = vperm.xlu0 %3522, %v2441
  %v3524 = vpop.permute.xlu0 %3523
  %3527 = vset.pattern.permute.xlu0 0
  %3528 = vperm.xlu0 %3527, %v2442
  %v3529 = vpop.permute.xlu0 %3528
  %3532 = vset.pattern.permute.xlu0 0
  %3533 = vperm.xlu0 %3532, %v2443
  %v3534 = vpop.permute.xlu0 %3533
  %3537 = vset.pattern.permute.xlu0 0
  %3538 = vperm.xlu0 %3537, %v2444
  %v3539 = vpop.permute.xlu0 %3538
  %3542 = vset.pattern.permute.xlu0 0
  %3543 = vperm.xlu0 %3542, %v2445
  %v3544 = vpop.permute.xlu0 %3543
  %3547 = vset.pattern.permute.xlu0 0
  %3548 = vperm.xlu0 %3547, %v2446
  %v3549 = vpop.permute.xlu0 %3548
  %3552 = vset.pattern.permute.xlu0 0
  %3553 = vperm.xlu0 %3552, %v2447
  %v3554 = vpop.permute.xlu0 %3553
  %3557 = vset.pattern.permute.xlu0 0
  %3558 = vperm.xlu0 %3557, %v2448
  %v3559 = vpop.permute.xlu0 %3558
  %3562 = vset.pattern.permute.xlu0 0
  %3563 = vperm.xlu0 %3562, %v2449
  %v3564 = vpop.permute.xlu0 %3563
  %3567 = vset.pattern.permute.xlu0 0
  %3568 = vperm.xlu0 %3567, %v2450
  %v3569 = vpop.permute.xlu0 %3568
  %3572 = vset.pattern.permute.xlu0 0
  %3573 = vperm.xlu0 %3572, %v2451
  %v3574 = vpop.permute.xlu0 %3573
  %3577 = vset.pattern.permute.xlu0 0
  %3578 = vperm.xlu0 %3577, %v2452
  %v3579 = vpop.permute.xlu0 %3578
  %3582 = vset.pattern.permute.xlu0 0
  %3583 = vperm.xlu0 %3582, %v2453
  %v3584 = vpop.permute.xlu0 %3583
  %3587 = vset.pattern.permute.xlu0 0
  %3588 = vperm.xlu0 %3587, %v2454
  %v3589 = vpop.permute.xlu0 %3588
  %3592 = vset.pattern.permute.xlu0 0
  %3593 = vperm.xlu0 %3592, %v2455
  %v3594 = vpop.permute.xlu0 %3593
  %3597 = vset.pattern.permute.xlu0 0
  %3598 = vperm.xlu0 %3597, %v2456
  %v3599 = vpop.permute.xlu0 %3598
  %3602 = vset.pattern.permute.xlu0 0
  %3603 = vperm.xlu0 %3602, %v2457
  %v3604 = vpop.permute.xlu0 %3603
  %3607 = vset.pattern.permute.xlu0 0
  %3608 = vperm.xlu0 %3607, %v2458
  %v3609 = vpop.permute.xlu0 %3608
  %3612 = vset.pattern.permute.xlu0 0
  %3613 = vperm.xlu0 %3612, %v2459
  %v3614 = vpop.permute.xlu0 %3613
  %3617 = vset.pattern.permute.xlu0 0
  %3618 = vperm.xlu0 %3617, %v2460
  %v3619 = vpop.permute.xlu0 %3618
  %3622 = vset.pattern.permute.xlu0 0
  %3623 = vperm.xlu0 %3622, %v2461
  %v3624 = vpop.permute.xlu0 %3623
  %3627 = vset.pattern.permute.xlu0 0
  %3628 = vperm.xlu0 %3627, %v2462
  %v3629 = vpop.permute.xlu0 %3628
  %3632 = vset.pattern.permute.xlu0 0
  %3633 = vperm.xlu0 %3632, %v2463
  %v3634 = vpop.permute.xlu0 %3633
  %3637 = vset.pattern.permute.xlu0 0
  %3638 = vperm.xlu0 %3637, %v2464
  %v3639 = vpop.permute.xlu0 %3638
  %3642 = vset.pattern.permute.xlu0 0
  %3643 = vperm.xlu0 %3642, %v2465
  %v3644 = vpop.permute.xlu0 %3643
  %3647 = vset.pattern.permute.xlu0 0
  %3648 = vperm.xlu0 %3647, %v2466
  %v3649 = vpop.permute.xlu0 %3648
  %3652 = vset.pattern.permute.xlu0 0
  %3653 = vperm.xlu0 %3652, %v2467
  %v3654 = vpop.permute.xlu0 %3653
  %3657 = vset.pattern.permute.xlu0 0
  %3658 = vperm.xlu0 %3657, %v2468
  %v3659 = vpop.permute.xlu0 %3658
  %3662 = vset.pattern.permute.xlu0 0
  %3663 = vperm.xlu0 %3662, %v2469
  %v3664 = vpop.permute.xlu0 %3663
  %3667 = vset.pattern.permute.xlu0 0
  %3668 = vperm.xlu0 %3667, %v2470
  %v3669 = vpop.permute.xlu0 %3668
  %3672 = vset.pattern.permute.xlu0 0
  %3673 = vperm.xlu0 %3672, %v2471
  %v3674 = vpop.permute.xlu0 %3673
  %3677 = vset.pattern.permute.xlu0 0
  %3678 = vperm.xlu0 %3677, %v2472
  %v3679 = vpop.permute.xlu0 %3678
  %3682 = vset.pattern.permute.xlu0 0
  %3683 = vperm.xlu0 %3682, %v2473
  %v3684 = vpop.permute.xlu0 %3683
  %3687 = vset.pattern.permute.xlu0 0
  %3688 = vperm.xlu0 %3687, %v2474
  %v3689 = vpop.permute.xlu0 %3688
  %3692 = vset.pattern.permute.xlu0 0
  %3693 = vperm.xlu0 %3692, %v2475
  %v3694 = vpop.permute.xlu0 %3693
  %3697 = vset.pattern.permute.xlu0 0
  %3698 = vperm.xlu0 %3697, %v2476
  %v3699 = vpop.permute.xlu0 %3698
  %3702 = vset.pattern.permute.xlu0 0
  %3703 = vperm.xlu0 %3702, %v2477
  %v3704 = vpop.permute.xlu0 %3703
  %3707 = vset.pattern.permute.xlu0 0
  %3708 = vperm.xlu0 %3707, %v2478
  %v3709 = vpop.permute.xlu0 %3708
  %v3711 = vadd.f32 %v3039, %v3154
  %v3712 = vadd.f32 %v3040, %v3159
  %v3713 = vadd.f32 %v3041, %v3164
  %v3714 = vadd.f32 %v3042, %v3169
  %v3715 = vadd.f32 %v3043, %v3174
  %v3716 = vadd.f32 %v3044, %v3179
  %v3717 = vadd.f32 %v3045, %v3184
  %v3718 = vadd.f32 %v3046, %v3189
  %v3719 = vadd.f32 %v3047, %v3194
  %v3720 = vadd.f32 %v3048, %v3199
  %v3721 = vadd.f32 %v3049, %v3204
  %v3722 = vadd.f32 %v3050, %v3209
  %v3723 = vadd.f32 %v3051, %v3214
  %v3724 = vadd.f32 %v3052, %v3219
  %v3725 = vadd.f32 %v3053, %v3224
  %v3726 = vadd.f32 %v3054, %v3229
  %v3727 = vadd.f32 %v3055, %v3234
  %v3728 = vadd.f32 %v3056, %v3239
  %v3729 = vadd.f32 %v3057, %v3244
  %v3730 = vadd.f32 %v3058, %v3249
  %v3731 = vadd.f32 %v3059, %v3254
  %v3732 = vadd.f32 %v3060, %v3259
  %v3733 = vadd.f32 %v3061, %v3264
  %v3734 = vadd.f32 %v3062, %v3269
  %v3735 = vadd.f32 %v3063, %v3274
  %v3736 = vadd.f32 %v3064, %v3279
  %v3737 = vadd.f32 %v3065, %v3284
  %v3738 = vadd.f32 %v3066, %v3289
  %v3739 = vadd.f32 %v3067, %v3294
  %v3740 = vadd.f32 %v3068, %v3299
  %v3741 = vadd.f32 %v3069, %v3304
  %v3742 = vadd.f32 %v3070, %v3309
  %v3743 = vadd.f32 %v3071, %v3314
  %v3744 = vadd.f32 %v3072, %v3319
  %v3745 = vadd.f32 %v3073, %v3324
  %v3746 = vadd.f32 %v3074, %v3329
  %v3747 = vadd.f32 %v3075, %v3334
  %v3748 = vadd.f32 %v3076, %v3339
  %v3749 = vadd.f32 %v3077, %v3344
  %v3750 = vadd.f32 %v3078, %v3349
  %v3751 = vadd.f32 %v3079, %v3354
  %v3752 = vadd.f32 %v3080, %v3359
  %v3753 = vadd.f32 %v3081, %v3364
  %v3754 = vadd.f32 %v3082, %v3369
  %v3755 = vadd.f32 %v3083, %v3374
  %v3756 = vadd.f32 %v3084, %v3379
  %v3757 = vadd.f32 %v3085, %v3384
  %v3758 = vadd.f32 %v3086, %v3389
  %v3759 = vadd.f32 %v3087, %v3394
  %v3760 = vadd.f32 %v3088, %v3399
  %v3761 = vadd.f32 %v3089, %v3404
  %v3762 = vadd.f32 %v3090, %v3409
  %v3763 = vadd.f32 %v3091, %v3414
  %v3764 = vadd.f32 %v3092, %v3419
  %v3765 = vadd.f32 %v3093, %v3424
  %v3766 = vadd.f32 %v3094, %v3429
  %v3767 = vadd.f32 %v3095, %v3434
  %v3768 = vadd.f32 %v3096, %v3439
  %v3769 = vadd.f32 %v3097, %v3444
  %v3770 = vadd.f32 %v3098, %v3449
  %v3771 = vadd.f32 %v3099, %v3454
  %v3772 = vadd.f32 %v3100, %v3459
  %v3773 = vadd.f32 %v3101, %v3464
  %v3774 = vadd.f32 %v3102, %v3469
  %v3775 = vadd.f32 %v3103, %v3474
  %v3776 = vadd.f32 %v3104, %v3479
  %v3777 = vadd.f32 %v3105, %v3484
  %v3778 = vadd.f32 %v3106, %v3489
  %v3779 = vadd.f32 %v3107, %v3494
  %v3780 = vadd.f32 %v3108, %v3499
  %v3781 = vadd.f32 %v3109, %v3504
  %v3782 = vadd.f32 %v3110, %v3509
  %v3783 = vadd.f32 %v3111, %v3514
  %v3784 = vadd.f32 %v3112, %v3519
  %v3785 = vadd.f32 %v3113, %v3524
  %v3786 = vadd.f32 %v3114, %v3529
  %v3787 = vadd.f32 %v3115, %v3534
  %v3788 = vadd.f32 %v3116, %v3539
  %v3789 = vadd.f32 %v3117, %v3544
  %v3790 = vadd.f32 %v3118, %v3549
  %v3791 = vadd.f32 %v3119, %v3554
  %v3792 = vadd.f32 %v3120, %v3559
  %v3793 = vadd.f32 %v3121, %v3564
  %v3794 = vadd.f32 %v3122, %v3569
  %v3795 = vadd.f32 %v3123, %v3574
  %v3796 = vadd.f32 %v3124, %v3579
  %v3797 = vadd.f32 %v3125, %v3584
  %v3798 = vadd.f32 %v3126, %v3589
  %v3799 = vadd.f32 %v3127, %v3594
  %v3800 = vadd.f32 %v3128, %v3599
  %v3801 = vadd.f32 %v3129, %v3604
  %v3802 = vadd.f32 %v3130, %v3609
  %v3803 = vadd.f32 %v3131, %v3614
  %v3804 = vadd.f32 %v3132, %v3619
  %v3805 = vadd.f32 %v3133, %v3624
  %v3806 = vadd.f32 %v3134, %v3629
  %v3807 = vadd.f32 %v3135, %v3634
  %v3808 = vadd.f32 %v3136, %v3639
  %v3809 = vadd.f32 %v3137, %v3644
  %v3810 = vadd.f32 %v3138, %v3649
  %v3811 = vadd.f32 %v3139, %v3654
  %v3812 = vadd.f32 %v3140, %v3659
  %v3813 = vadd.f32 %v3141, %v3664
  %v3814 = vadd.f32 %v3142, %v3669
  %v3815 = vadd.f32 %v3143, %v3674
  %v3816 = vadd.f32 %v3144, %v3679
  %v3817 = vadd.f32 %v3145, %v3684
  %v3818 = vadd.f32 %v3146, %v3689
  %v3819 = vadd.f32 %v3147, %v3694
  %v3820 = vadd.f32 %v3148, %v3699
  %v3821 = vadd.f32 %v3149, %v3704
  %v3822 = vadd.f32 %v3150, %v3709
  %3823 = vst.msk [vmem:[%s3] sm:$0xff] %vm126, %v3711
  %3824 = vst.msk [vmem:[%s3 + $0x8] sm:$0xff] %vm126, %v3712
  %3825 = vst.msk [vmem:[%s3 + $0x10] sm:$0xff] %vm126, %v3713
  %3826 = vst.msk [vmem:[%s3 + $0x18] sm:$0xff] %vm126, %v3714
  %3827 = vst.msk [vmem:[%s3 + $0x20] sm:$0xff] %vm126, %v3715
  %3828 = vst.msk [vmem:[%s3 + $0x28] sm:$0xff] %vm126, %v3716
  %3829 = vst.msk [vmem:[%s3 + $0x30] sm:$0xff] %vm126, %v3717
  %3830 = vst.msk [vmem:[%s3 + $0x38] sm:$0xff] %vm126, %v3718
  %3831 = vst.msk [vmem:[%s3 + $0x40] sm:$0xff] %vm126, %v3719
  %3832 = vst.msk [vmem:[%s3 + $0x48] sm:$0xff] %vm126, %v3720
  %3833 = vst.msk [vmem:[%s3 + $0x50] sm:$0xff] %vm126, %v3721
  %3834 = vst.msk [vmem:[%s3 + $0x58] sm:$0xff] %vm126, %v3722
  %3835 = vst.msk [vmem:[%s3 + $0x60] sm:$0xff] %vm126, %v3723
  %3836 = vst.msk [vmem:[%s3 + $0x68] sm:$0xff] %vm126, %v3724
  %3837 = vst.msk [vmem:[%s3 + $0x70] sm:$0xff] %vm126, %v3725
  %3838 = vst.msk [vmem:[%s3 + $0x78] sm:$0xff] %vm126, %v3726
  %3839 = vst.msk [vmem:[%s3 + $0x80] sm:$0xff] %vm126, %v3727
  %3840 = vst.msk [vmem:[%s3 + $0x88] sm:$0xff] %vm126, %v3728
  %3841 = vst.msk [vmem:[%s3 + $0x90] sm:$0xff] %vm126, %v3729
  %3842 = vst.msk [vmem:[%s3 + $0x98] sm:$0xff] %vm126, %v3730
  %3843 = vst.msk [vmem:[%s3 + $0xa0] sm:$0xff] %vm126, %v3731
  %3844 = vst.msk [vmem:[%s3 + $0xa8] sm:$0xff] %vm126, %v3732
  %3845 = vst.msk [vmem:[%s3 + $0xb0] sm:$0xff] %vm126, %v3733
  %3846 = vst.msk [vmem:[%s3 + $0xb8] sm:$0xff] %vm126, %v3734
  %3847 = vst.msk [vmem:[%s3 + $0xc0] sm:$0xff] %vm126, %v3735
  %3848 = vst.msk [vmem:[%s3 + $0xc8] sm:$0xff] %vm126, %v3736
  %3849 = vst.msk [vmem:[%s3 + $0xd0] sm:$0xff] %vm126, %v3737
  %3850 = vst.msk [vmem:[%s3 + $0xd8] sm:$0xff] %vm126, %v3738
  %3851 = vst.msk [vmem:[%s3 + $0xe0] sm:$0xff] %vm126, %v3739
  %3852 = vst.msk [vmem:[%s3 + $0xe8] sm:$0xff] %vm126, %v3740
  %3853 = vst.msk [vmem:[%s3 + $0xf0] sm:$0xff] %vm126, %v3741
  %3854 = vst.msk [vmem:[%s3 + $0xf8] sm:$0xff] %vm126, %v3742
  %3855 = vst.msk [vmem:[%s3 + $0x100] sm:$0xff] %vm126, %v3743
  %3856 = vst.msk [vmem:[%s3 + $0x108] sm:$0xff] %vm126, %v3744
  %3857 = vst.msk [vmem:[%s3 + $0x110] sm:$0xff] %vm126, %v3745
  %3858 = vst.msk [vmem:[%s3 + $0x118] sm:$0xff] %vm126, %v3746
  %3859 = vst.msk [vmem:[%s3 + $0x120] sm:$0xff] %vm126, %v3747
  %3860 = vst.msk [vmem:[%s3 + $0x128] sm:$0xff] %vm126, %v3748
  %3861 = vst.msk [vmem:[%s3 + $0x130] sm:$0xff] %vm126, %v3749
  %3862 = vst.msk [vmem:[%s3 + $0x138] sm:$0xff] %vm126, %v3750
  %3863 = vst.msk [vmem:[%s3 + $0x140] sm:$0xff] %vm126, %v3751
  %3864 = vst.msk [vmem:[%s3 + $0x148] sm:$0xff] %vm126, %v3752
  %3865 = vst.msk [vmem:[%s3 + $0x150] sm:$0xff] %vm126, %v3753
  %3866 = vst.msk [vmem:[%s3 + $0x158] sm:$0xff] %vm126, %v3754
  %3867 = vst.msk [vmem:[%s3 + $0x160] sm:$0xff] %vm126, %v3755
  %3868 = vst.msk [vmem:[%s3 + $0x168] sm:$0xff] %vm126, %v3756
  %3869 = vst.msk [vmem:[%s3 + $0x170] sm:$0xff] %vm126, %v3757
  %3870 = vst.msk [vmem:[%s3 + $0x178] sm:$0xff] %vm126, %v3758
  %3871 = vst.msk [vmem:[%s3 + $0x180] sm:$0xff] %vm126, %v3759
  %3872 = vst.msk [vmem:[%s3 + $0x188] sm:$0xff] %vm126, %v3760
  %3873 = vst.msk [vmem:[%s3 + $0x190] sm:$0xff] %vm126, %v3761
  %3874 = vst.msk [vmem:[%s3 + $0x198] sm:$0xff] %vm126, %v3762
  %3875 = vst.msk [vmem:[%s3 + $0x1a0] sm:$0xff] %vm126, %v3763
  %3876 = vst.msk [vmem:[%s3 + $0x1a8] sm:$0xff] %vm126, %v3764
  %3877 = vst.msk [vmem:[%s3 + $0x1b0] sm:$0xff] %vm126, %v3765
  %3878 = vst.msk [vmem:[%s3 + $0x1b8] sm:$0xff] %vm126, %v3766
  %3879 = vst.msk [vmem:[%s3 + $0x1c0] sm:$0xff] %vm126, %v3767
  %3880 = vst.msk [vmem:[%s3 + $0x1c8] sm:$0xff] %vm126, %v3768
  %3881 = vst.msk [vmem:[%s3 + $0x1d0] sm:$0xff] %vm126, %v3769
  %3882 = vst.msk [vmem:[%s3 + $0x1d8] sm:$0xff] %vm126, %v3770
  %3883 = vst.msk [vmem:[%s3 + $0x1e0] sm:$0xff] %vm126, %v3771
  %3884 = vst.msk [vmem:[%s3 + $0x1e8] sm:$0xff] %vm126, %v3772
  %3885 = vst.msk [vmem:[%s3 + $0x1f0] sm:$0xff] %vm126, %v3773
  %3886 = vst.msk [vmem:[%s3 + $0x1f8] sm:$0xff] %vm126, %v3774
  %3887 = vst.msk [vmem:[%s3 + $0x200] sm:$0xff] %vm126, %v3775
  %3888 = vst.msk [vmem:[%s3 + $0x208] sm:$0xff] %vm126, %v3776
  %3889 = vst.msk [vmem:[%s3 + $0x210] sm:$0xff] %vm126, %v3777
  %3890 = vst.msk [vmem:[%s3 + $0x218] sm:$0xff] %vm126, %v3778
  %3891 = vst.msk [vmem:[%s3 + $0x220] sm:$0xff] %vm126, %v3779
  %3892 = vst.msk [vmem:[%s3 + $0x228] sm:$0xff] %vm126, %v3780
  %3893 = vst.msk [vmem:[%s3 + $0x230] sm:$0xff] %vm126, %v3781
  %3894 = vst.msk [vmem:[%s3 + $0x238] sm:$0xff] %vm126, %v3782
  %3895 = vst.msk [vmem:[%s3 + $0x240] sm:$0xff] %vm126, %v3783
  %3896 = vst.msk [vmem:[%s3 + $0x248] sm:$0xff] %vm126, %v3784
  %3897 = vst.msk [vmem:[%s3 + $0x250] sm:$0xff] %vm126, %v3785
  %3898 = vst.msk [vmem:[%s3 + $0x258] sm:$0xff] %vm126, %v3786
  %3899 = vst.msk [vmem:[%s3 + $0x260] sm:$0xff] %vm126, %v3787
  %3900 = vst.msk [vmem:[%s3 + $0x268] sm:$0xff] %vm126, %v3788
  %3901 = vst.msk [vmem:[%s3 + $0x270] sm:$0xff] %vm126, %v3789
  %3902 = vst.msk [vmem:[%s3 + $0x278] sm:$0xff] %vm126, %v3790
  %3903 = vst.msk [vmem:[%s3 + $0x280] sm:$0xff] %vm126, %v3791
  %3904 = vst.msk [vmem:[%s3 + $0x288] sm:$0xff] %vm126, %v3792
  %3905 = vst.msk [vmem:[%s3 + $0x290] sm:$0xff] %vm126, %v3793
  %3906 = vst.msk [vmem:[%s3 + $0x298] sm:$0xff] %vm126, %v3794
  %3907 = vst.msk [vmem:[%s3 + $0x2a0] sm:$0xff] %vm126, %v3795
  %3908 = vst.msk [vmem:[%s3 + $0x2a8] sm:$0xff] %vm126, %v3796
  %3909 = vst.msk [vmem:[%s3 + $0x2b0] sm:$0xff] %vm126, %v3797
  %3910 = vst.msk [vmem:[%s3 + $0x2b8] sm:$0xff] %vm126, %v3798
  %3911 = vst.msk [vmem:[%s3 + $0x2c0] sm:$0xff] %vm126, %v3799
  %3912 = vst.msk [vmem:[%s3 + $0x2c8] sm:$0xff] %vm126, %v3800
  %3913 = vst.msk [vmem:[%s3 + $0x2d0] sm:$0xff] %vm126, %v3801
  %3914 = vst.msk [vmem:[%s3 + $0x2d8] sm:$0xff] %vm126, %v3802
  %3915 = vst.msk [vmem:[%s3 + $0x2e0] sm:$0xff] %vm126, %v3803
  %3916 = vst.msk [vmem:[%s3 + $0x2e8] sm:$0xff] %vm126, %v3804
  %3917 = vst.msk [vmem:[%s3 + $0x2f0] sm:$0xff] %vm126, %v3805
  %3918 = vst.msk [vmem:[%s3 + $0x2f8] sm:$0xff] %vm126, %v3806
  %3919 = vst.msk [vmem:[%s3 + $0x300] sm:$0xff] %vm126, %v3807
  %3920 = vst.msk [vmem:[%s3 + $0x308] sm:$0xff] %vm126, %v3808
  %3921 = vst.msk [vmem:[%s3 + $0x310] sm:$0xff] %vm126, %v3809
  %3922 = vst.msk [vmem:[%s3 + $0x318] sm:$0xff] %vm126, %v3810
  %3923 = vst.msk [vmem:[%s3 + $0x320] sm:$0xff] %vm126, %v3811
  %3924 = vst.msk [vmem:[%s3 + $0x328] sm:$0xff] %vm126, %v3812
  %3925 = vst.msk [vmem:[%s3 + $0x330] sm:$0xff] %vm126, %v3813
  %3926 = vst.msk [vmem:[%s3 + $0x338] sm:$0xff] %vm126, %v3814
  %3927 = vst.msk [vmem:[%s3 + $0x340] sm:$0xff] %vm126, %v3815
  %3928 = vst.msk [vmem:[%s3 + $0x348] sm:$0xff] %vm126, %v3816
  %3929 = vst.msk [vmem:[%s3 + $0x350] sm:$0xff] %vm126, %v3817
  %3930 = vst.msk [vmem:[%s3 + $0x358] sm:$0xff] %vm126, %v3818
  %3931 = vst.msk [vmem:[%s3 + $0x360] sm:$0xff] %vm126, %v3819
  %3932 = vst.msk [vmem:[%s3 + $0x368] sm:$0xff] %vm126, %v3820
  %3933 = vst.msk [vmem:[%s3 + $0x370] sm:$0xff] %vm126, %v3821
  %3934 = vst.msk [vmem:[%s3 + $0x378] sm:$0xff] %vm126, %v3822
  // Predicated region
  $region14: #{tpu_custom_call.1} parent=0 // pred_check
    _
  $region15: #{tpu_custom_call.1} parent=0 // pred_check_branch
    %3936 = sbr.rel (0) target = $region17
  $region16: #{tpu_custom_call.1} parent=0 // pred_region
    _
  $region17: #{tpu_custom_call.1} parent=0 // pred_fallthru
    _
  // Predicated region
  $region18: #{tpu_custom_call.1} parent=0 // pred_check
    _
  $region19: #{tpu_custom_call.1} parent=0 // pred_check_branch
    %3938 = sbr.rel (0) target = $region21
  $region20: #{tpu_custom_call.1} parent=0 // pred_region
    _
  $region21: #{tpu_custom_call.1} parent=0 // pred_fallthru
    _

</llo_original>
